<compile_context>
chip_gen: v7x
topology: tpu7x:2x2x1
jax: 0.10.0
libtpu: 0.0.40
codegen_flags: <defaults>
</compile_context>

<pallas_src>
import functools
import math

import jax
import jax.numpy as jnp
import numpy as np
from jax import lax
from jax.experimental import pallas as pl
from jax.experimental.pallas import tpu as pltpu

LANE = 128   # TPU vreg lane width
GATE = 32    # per-gate lane slot; 4 gates * 32 = 128 lanes (one vreg wide)


# ----------------------------------------------------------------------------
# Fused forward kernel (one batch block of B rows per time step)
# ----------------------------------------------------------------------------
def _fused_kernel(x_ref,
                  w1e_ref, b1e_ref, w2e_ref, b2e_ref, w3e_ref, b3e_ref,
                  wxe_ref, whe_ref, bge_ref,
                  wxd_ref, whd_ref, bgd_ref,
                  w1d_ref, b1d_ref, w2d_ref, b2d_ref, w3d_ref, b3d_ref,
                  o_ref,
                  e_scr, d_scr, *, T, B):
    P = 4 * GATE  # 128 lanes: the whole gate pre-activation of one step is one vreg row

    def mm(a, b):
        return jnp.dot(a, b, preferred_element_type=jnp.float32)

    # ---------------- encoder MLP: (Linear -> ReLU) x3, all timesteps at once ----------------
    h = jnp.maximum(mm(x_ref[...], w1e_ref[...]) + b1e_ref[...], 0.0)
    h = jnp.maximum(mm(h, w2e_ref[...]) + b2e_ref[...], 0.0)
    h = jnp.maximum(mm(h, w3e_ref[...]) + b3e_ref[...], 0.0)            # (T*B, 32)

    # ---------------- LSTM stage (PyTorch cell, h0 = c0 = 0) ----------------
    # Gate slots (i, f, o, g), each 32 lanes wide.  W_hh rows are zero-padded to 128 so
    # the full 128-lane h_t feeds straight back into the recurrent matmul (no sub-vreg
    # slice on the serial dependency chain).  Lanes >= hidden inside the real slot stay
    # exactly 0 (zero weight cols + zero bias => g=0, c=0, h=0); lanes [GATE, 128) hold
    # bounded garbage from the rolled gates, which every consumer kills with zero-padded
    # weight rows.
    def lstm_stage(gx, wh, seq_scr):
        h_t = jnp.zeros((B, P), jnp.float32)
        c_t = jnp.zeros((B, P), jnp.float32)
        for t in range(T):                        # T static & small -> fully unrolled
            s = gx[t * B:(t + 1) * B, :] + mm(h_t, wh)                   # (B, 128)
            sig = jax.nn.sigmoid(s)               # valid on i/f/o slots
            tnh = jnp.tanh(s)                     # valid on g slot
            f_g = pltpu.roll(sig, 3 * GATE, axis=1)   # f slot -> lanes [0, GATE)
            o_g = pltpu.roll(sig, 2 * GATE, axis=1)   # o slot -> lanes [0, GATE)
            g_g = pltpu.roll(tnh, 1 * GATE, axis=1)   # g slot -> lanes [0, GATE)
            c_t = f_g * c_t + sig * g_g           # i gate is sig's own lanes [0, GATE)
            h_t = o_g * jnp.tanh(c_t)
            seq_scr[t * B:(t + 1) * B, :] = h_t   # 8-row aligned store; bounds live ranges

    # Input-to-hidden contribution of ALL timesteps hoisted into one matmul per stage.
    gx_e = mm(h, wxe_ref[...]) + bge_ref[...]                            # (T*B, 128)
    lstm_stage(gx_e, whe_ref[...], e_scr)

    gx_d = mm(e_scr[...], wxd_ref[...]) + bgd_ref[...]                   # wxd rows >= H_enc are 0
    lstm_stage(gx_d, whd_ref[...], d_scr)

    # -------- decoder MLP: ReLU -> (Linear -> ReLU) x2 -> Linear --------
    y = jnp.maximum(d_scr[...], 0.0)              # ReLU on the full slab; pad lanes killed by w1d
    y = jnp.maximum(mm(y, w1d_ref[...]) + b1d_ref[...], 0.0)             # w1d rows >= H_dec are 0
    y = jnp.maximum(mm(y, w2d_ref[...]) + b2d_ref[...], 0.0)
    o_ref[...] = mm(y, w3d_ref[...]) + b3d_ref[...]                      # (T*B, F), unpadded


def lstm_autoencoder_forward(x, params):
    """== LSTMAutoEncoder.forward on (T, B, F) input."""
    T, B, F = x.shape
    B_BLK = 8 if B % 8 == 0 else B                # sublane-aligned batch blocks when possible
    nblk = B // B_BLK
    rows = T * B_BLK

    # Batch blocks outermost; time-major rows inside a block (matches kernel layout).
    x_blk = (x.reshape(T, nblk, B_BLK, F)
              .transpose(1, 0, 2, 3)
              .reshape(nblk, rows, F))

    args = (x_blk,
            *params["enc_mlp"], *params["enc_lstm"],
            *params["dec_lstm"], *params["dec_mlp"])

    def _full_spec(a):
        zeros = (0,) * a.ndim
        return pl.BlockSpec(a.shape, lambda j, _z=zeros: _z)

    in_specs = [pl.BlockSpec((None, rows, F), lambda j: (j, 0, 0))]
    in_specs += [_full_spec(a) for a in args[1:]]

    kernel = functools.partial(_fused_kernel, T=T, B=B_BLK)
    y = pl.pallas_call(
        kernel,
        grid=(nblk,),                             # batch-parallel -> both TCs on v7x
        out_shape=jax.ShapeDtypeStruct((nblk, rows, F), jnp.float32),
        in_specs=in_specs,
        out_specs=pl.BlockSpec((None, rows, F), lambda j: (j, 0, 0)),
        scratch_shapes=[pltpu.VMEM((rows, 4 * GATE), jnp.float32),
                        pltpu.VMEM((rows, 4 * GATE), jnp.float32)],
        compiler_params=pltpu.CompilerParams(dimension_semantics=("parallel",)),
    )(*args)

    return (y.reshape(nblk, T, B_BLK, F)
             .transpose(1, 0, 2, 3)
             .reshape(T, B, F))


# ----------------------------------------------------------------------------
# Deterministic parameter construction (PyTorch uniform fan-in init), pre-packed
# into the kernel's fused / zero-padded layout.
# ----------------------------------------------------------------------------
def _uniform(key, shape, fan_in):
    k = 1.0 / math.sqrt(fan_in)
    return jax.random.uniform(key, shape, jnp.float32, -k, k)


def _linear_params(key, in_f, out_f, in_pad=None):
    """nn.Linear init; stored transposed (in, out); optional zero-padded input rows."""
    kw, kb = jax.random.split(key)
    w = _uniform(kw, (in_f, out_f), in_f)
    b = _uniform(kb, (1, out_f), in_f)
    if in_pad is not None and in_pad > in_f:
        w = jnp.zeros((in_pad, out_f), jnp.float32).at[:in_f, :].set(w)
    return w, b


def _lstm_params(key, in_f, hidden, in_pad=None):
    """nn.LSTM init (U(-1/sqrt(H), 1/sqrt(H)), b = b_ih + b_hh) packed as 4 gate slots of
    GATE lanes in order (i, f, o, g); slot cols >= hidden are zero; W_hh rows zero-padded
    to 128 (full h_t slab); W_ih rows optionally zero-padded to `in_pad`.
    NOTE: PyTorch packs gates as (i, f, g, o) -- permute blocks if importing real weights."""
    assert hidden <= GATE, "TODO(synk): widen GATE slots for inner_size > 32"
    in_pad = in_f if in_pad is None else in_pad
    kx, kh, kbi, kbh = jax.random.split(key, 4)
    wx_t = _uniform(kx, (4, in_f, hidden), hidden)
    wh_t = _uniform(kh, (4, hidden, hidden), hidden)
    b_t = (_uniform(kbi, (4, 1, hidden), hidden)
           + _uniform(kbh, (4, 1, hidden), hidden))
    wx = jnp.zeros((in_pad, 4 * GATE), jnp.float32)
    wh = jnp.zeros((LANE, 4 * GATE), jnp.float32)
    b = jnp.zeros((1, 4 * GATE), jnp.float32)
    for slot in range(4):
        lo = slot * GATE
        wx = wx.at[:in_f, lo:lo + hidden].set(wx_t[slot])
        wh = wh.at[:hidden, lo:lo + hidden].set(wh_t[slot])
        b = b.at[:, lo:lo + hidden].set(b_t[slot])
    return wx, wh, b


def make_params(key, input_size, inner_size=20):
    keys = jax.random.split(key, 8)
    enc_w1, enc_b1 = _linear_params(keys[0], input_size, 128)
    enc_w2, enc_b2 = _linear_params(keys[1], 128, 64)
    enc_w3, enc_b3 = _linear_params(keys[2], 64, 32)
    enc_lstm = _lstm_params(keys[3], 32, inner_size)                # W_ih: (32, 128)
    dec_lstm = _lstm_params(keys[4], inner_size, 32, in_pad=LANE)   # consumes padded e-slab
    dec_w1, dec_b1 = _linear_params(keys[5], 32, 64, in_pad=LANE)   # consumes padded d-slab
    dec_w2, dec_b2 = _linear_params(keys[6], 64, 128)
    dec_w3, dec_b3 = _linear_params(keys[7], 128, input_size)       # unpadded output columns
    return {
        "enc_mlp": (enc_w1, enc_b1, enc_w2, enc_b2, enc_w3, enc_b3),
        "enc_lstm": enc_lstm,
        "dec_lstm": dec_lstm,
        "dec_mlp": (dec_w1, dec_b1, dec_w2, dec_b2, dec_w3, dec_b3),
    }


# ----------------------------------------------------------------------------
# Pure-JAX reference (true / unpadded math) for validation
# ----------------------------------------------------------------------------
def _ref_lstm(x3, wx, wh, b, H):
    in_t = x3.shape[-1]
    wxi, wxf, wxo, wxg = [wx[:in_t, s * GATE:s * GATE + H] for s in range(4)]
    whi, whf, who, whg = [wh[:H, s * GATE:s * GATE + H] for s in range(4)]
    bi, bf, bo, bg = [b[:, s * GATE:s * GATE + H] for s in range(4)]

    def step(carry, x_t):
        h, c = carry
        i = jax.nn.sigmoid(x_t @ wxi + h @ whi + bi)
        f = jax.nn.sigmoid(x_t @ wxf + h @ whf + bf)
        o = jax.nn.sigmoid(x_t @ wxo + h @ who + bo)
        g = jnp.tanh(x_t @ wxg + h @ whg + bg)
        c = f * c + i * g
        h = o * jnp.tanh(c)
        return (h, c), h

    Bsz = x3.shape[1]
    init = (jnp.zeros((Bsz, H), jnp.float32), jnp.zeros((Bsz, H), jnp.float32))
    _, hs = lax.scan(step, init, x3)
    return hs                                                        # (T, B, H)


def reference_forward(x, params, inner_size=20):
    T, B, F = x.shape
    H_enc, H_dec = inner_size, 32
    w1, b1, w2, b2, w3, b3 = params["enc_mlp"]
    h = x.reshape(T * B, F)
    h = jnp.maximum(h @ w1 + b1, 0.0)
    h = jnp.maximum(h @ w2 + b2, 0.0)
    h = jnp.maximum(h @ w3 + b3, 0.0)
    e = _ref_lstm(h.reshape(T, B, -1), *params["enc_lstm"], H=H_enc)
    d = _ref_lstm(e, *params["dec_lstm"], H=H_dec)
    w1d, b1d, w2d, b2d, w3d, b3d = params["dec_mlp"]
    y = jnp.maximum(d.reshape(T * B, H_dec), 0.0)
    y = jnp.maximum(y @ w1d[:H_dec] + b1d, 0.0)
    y = jnp.maximum(y @ w2d + b2d, 0.0)
    y = y @ w3d + b3d
    return y.reshape(T, B, F)


if __name__ == "__main__":
    SEQ, BATCH, INPUT_SIZE, INNER = 8, 8, 16, 20   # batch=8 fills the 8-sublane vreg

    key = jax.random.PRNGKey(0)
    kx, kp = jax.random.split(key)
    x = jax.random.normal(kx, (SEQ, BATCH, INPUT_SIZE), jnp.float32)
    params = make_params(kp, INPUT_SIZE, INNER)

    out = jax.jit(lstm_autoencoder_forward)(x, params)
    jax.block_until_ready(out)
    assert out.shape == (SEQ, BATCH, INPUT_SIZE)
    assert out.dtype == jnp.float32

    ref = jax.jit(functools.partial(reference_forward, inner_size=INNER))(x, params)
    jax.block_until_ready(ref)
    np.testing.assert_allclose(np.asarray(out), np.asarray(ref), rtol=1e-3, atol=1e-4)

    print("KERNEL_OK")
</pallas_src>

<mosaic_0001>
module attributes {stable_mosaic.version = 11 : i64} {
  func.func @_fused_kernel(%arg0: i32, %arg1: memref<1x64x16xf32, #tpu.memory_space<vmem>>, %arg2: memref<16x128xf32, #tpu.memory_space<vmem>>, %arg3: memref<1x128xf32, #tpu.memory_space<vmem>>, %arg4: memref<128x64xf32, #tpu.memory_space<vmem>>, %arg5: memref<1x64xf32, #tpu.memory_space<vmem>>, %arg6: memref<64x32xf32, #tpu.memory_space<vmem>>, %arg7: memref<1x32xf32, #tpu.memory_space<vmem>>, %arg8: memref<32x128xf32, #tpu.memory_space<vmem>>, %arg9: memref<128x128xf32, #tpu.memory_space<vmem>>, %arg10: memref<1x128xf32, #tpu.memory_space<vmem>>, %arg11: memref<128x128xf32, #tpu.memory_space<vmem>>, %arg12: memref<128x128xf32, #tpu.memory_space<vmem>>, %arg13: memref<1x128xf32, #tpu.memory_space<vmem>>, %arg14: memref<128x64xf32, #tpu.memory_space<vmem>>, %arg15: memref<1x64xf32, #tpu.memory_space<vmem>>, %arg16: memref<64x128xf32, #tpu.memory_space<vmem>>, %arg17: memref<1x128xf32, #tpu.memory_space<vmem>>, %arg18: memref<128x16xf32, #tpu.memory_space<vmem>>, %arg19: memref<1x16xf32, #tpu.memory_space<vmem>>, %arg20: memref<1x64x16xf32, #tpu.memory_space<vmem>>, %arg21: memref<64x128xf32, #tpu.memory_space<vmem>>, %arg22: memref<64x128xf32, #tpu.memory_space<vmem>>) attributes {dimension_semantics = [#tpu.dimension_semantics<parallel>], iteration_bounds = array<i64: 1>, scalar_prefetch = 0 : i64, scratch_operands = 2 : i64, tpu.core_type = #tpu.core_type<tc>, window_params = [{transform_indices = @transform_0, window_bounds = array<i64: 1, 64, 16>}, {pipeline_mode = #tpu.pipeline_mode<synchronous>, transform_indices = @transform_1, window_bounds = array<i64: 16, 128>}, {pipeline_mode = #tpu.pipeline_mode<synchronous>, transform_indices = @transform_2, window_bounds = array<i64: 1, 128>}, {pipeline_mode = #tpu.pipeline_mode<synchronous>, transform_indices = @transform_3, window_bounds = array<i64: 128, 64>}, {pipeline_mode = #tpu.pipeline_mode<synchronous>, transform_indices = @transform_4, window_bounds = array<i64: 1, 64>}, {pipeline_mode = #tpu.pipeline_mode<synchronous>, transform_indices = @transform_5, window_bounds = array<i64: 64, 32>}, {pipeline_mode = #tpu.pipeline_mode<synchronous>, transform_indices = @transform_6, window_bounds = array<i64: 1, 32>}, {pipeline_mode = #tpu.pipeline_mode<synchronous>, transform_indices = @transform_7, window_bounds = array<i64: 32, 128>}, {pipeline_mode = #tpu.pipeline_mode<synchronous>, transform_indices = @transform_8, window_bounds = array<i64: 128, 128>}, {pipeline_mode = #tpu.pipeline_mode<synchronous>, transform_indices = @transform_9, window_bounds = array<i64: 1, 128>}, {pipeline_mode = #tpu.pipeline_mode<synchronous>, transform_indices = @transform_10, window_bounds = array<i64: 128, 128>}, {pipeline_mode = #tpu.pipeline_mode<synchronous>, transform_indices = @transform_11, window_bounds = array<i64: 128, 128>}, {pipeline_mode = #tpu.pipeline_mode<synchronous>, transform_indices = @transform_12, window_bounds = array<i64: 1, 128>}, {pipeline_mode = #tpu.pipeline_mode<synchronous>, transform_indices = @transform_13, window_bounds = array<i64: 128, 64>}, {pipeline_mode = #tpu.pipeline_mode<synchronous>, transform_indices = @transform_14, window_bounds = array<i64: 1, 64>}, {pipeline_mode = #tpu.pipeline_mode<synchronous>, transform_indices = @transform_15, window_bounds = array<i64: 64, 128>}, {pipeline_mode = #tpu.pipeline_mode<synchronous>, transform_indices = @transform_16, window_bounds = array<i64: 1, 128>}, {pipeline_mode = #tpu.pipeline_mode<synchronous>, transform_indices = @transform_17, window_bounds = array<i64: 128, 16>}, {pipeline_mode = #tpu.pipeline_mode<synchronous>, transform_indices = @transform_18, window_bounds = array<i64: 1, 16>}, {transform_indices = @transform_19, window_bounds = array<i64: 1, 64, 16>}]} {
    %c0 = arith.constant 0 : index
    %c0_0 = arith.constant 0 : index
    %c0_1 = arith.constant 0 : index
    %0 = vector.load %arg1[%c0, %c0_0, %c0_1] : memref<1x64x16xf32, #tpu.memory_space<vmem>>, vector<1x64x16xf32>
    %1 = vector.shape_cast %0 : vector<1x64x16xf32> to vector<64x16xf32>
    %c0_2 = arith.constant 0 : index
    %c0_3 = arith.constant 0 : index
    %2 = vector.load %arg2[%c0_2, %c0_3] : memref<16x128xf32, #tpu.memory_space<vmem>>, vector<16x128xf32>
    %cst = arith.constant dense<0.000000e+00> : vector<64x128xf32>
    %3 = tpu.matmul %1, %2, %cst {dimension_numbers = #tpu.dot_dimension_numbers<[1], [0], [0], [1], [0, 0, 1, 1], [], []>} : vector<64x16xf32>, vector<16x128xf32>, vector<64x128xf32> -> vector<64x128xf32>
    %c0_4 = arith.constant 0 : index
    %c0_5 = arith.constant 0 : index
    %4 = vector.load %arg3[%c0_4, %c0_5] : memref<1x128xf32, #tpu.memory_space<vmem>>, vector<1x128xf32>
    %5 = vector.broadcast %4 : vector<1x128xf32> to vector<64x128xf32>
    %6 = arith.addf %3, %5 : vector<64x128xf32>
    %cst_6 = arith.constant 0.000000e+00 : f32
    %7 = vector.broadcast %cst_6 : f32 to vector<64x128xf32>
    %8 = arith.maximumf %6, %7 : vector<64x128xf32>
    %c0_7 = arith.constant 0 : index
    %c0_8 = arith.constant 0 : index
    %9 = vector.load %arg4[%c0_7, %c0_8] : memref<128x64xf32, #tpu.memory_space<vmem>>, vector<128x64xf32>
    %cst_9 = arith.constant dense<0.000000e+00> : vector<64x64xf32>
    %10 = tpu.matmul %8, %9, %cst_9 {dimension_numbers = #tpu.dot_dimension_numbers<[1], [0], [0], [1], [0, 0, 1, 1], [], []>} : vector<64x128xf32>, vector<128x64xf32>, vector<64x64xf32> -> vector<64x64xf32>
    %c0_10 = arith.constant 0 : index
    %c0_11 = arith.constant 0 : index
    %11 = vector.load %arg5[%c0_10, %c0_11] : memref<1x64xf32, #tpu.memory_space<vmem>>, vector<1x64xf32>
    %12 = vector.broadcast %11 : vector<1x64xf32> to vector<64x64xf32>
    %13 = arith.addf %10, %12 : vector<64x64xf32>
    %cst_12 = arith.constant 0.000000e+00 : f32
    %14 = vector.broadcast %cst_12 : f32 to vector<64x64xf32>
    %15 = arith.maximumf %13, %14 : vector<64x64xf32>
    %c0_13 = arith.constant 0 : index
    %c0_14 = arith.constant 0 : index
    %16 = vector.load %arg6[%c0_13, %c0_14] : memref<64x32xf32, #tpu.memory_space<vmem>>, vector<64x32xf32>
    %cst_15 = arith.constant dense<0.000000e+00> : vector<64x32xf32>
    %17 = tpu.matmul %15, %16, %cst_15 {dimension_numbers = #tpu.dot_dimension_numbers<[1], [0], [0], [1], [0, 0, 1, 1], [], []>} : vector<64x64xf32>, vector<64x32xf32>, vector<64x32xf32> -> vector<64x32xf32>
    %c0_16 = arith.constant 0 : index
    %c0_17 = arith.constant 0 : index
    %18 = vector.load %arg7[%c0_16, %c0_17] : memref<1x32xf32, #tpu.memory_space<vmem>>, vector<1x32xf32>
    %19 = vector.broadcast %18 : vector<1x32xf32> to vector<64x32xf32>
    %20 = arith.addf %17, %19 : vector<64x32xf32>
    %cst_18 = arith.constant 0.000000e+00 : f32
    %21 = vector.broadcast %cst_18 : f32 to vector<64x32xf32>
    %22 = arith.maximumf %20, %21 : vector<64x32xf32>
    %c0_19 = arith.constant 0 : index
    %c0_20 = arith.constant 0 : index
    %23 = vector.load %arg8[%c0_19, %c0_20] : memref<32x128xf32, #tpu.memory_space<vmem>>, vector<32x128xf32>
    %cst_21 = arith.constant dense<0.000000e+00> : vector<64x128xf32>
    %24 = tpu.matmul %22, %23, %cst_21 {dimension_numbers = #tpu.dot_dimension_numbers<[1], [0], [0], [1], [0, 0, 1, 1], [], []>} : vector<64x32xf32>, vector<32x128xf32>, vector<64x128xf32> -> vector<64x128xf32>
    %c0_22 = arith.constant 0 : index
    %c0_23 = arith.constant 0 : index
    %25 = vector.load %arg10[%c0_22, %c0_23] : memref<1x128xf32, #tpu.memory_space<vmem>>, vector<1x128xf32>
    %26 = vector.broadcast %25 : vector<1x128xf32> to vector<64x128xf32>
    %27 = arith.addf %24, %26 : vector<64x128xf32>
    %c0_24 = arith.constant 0 : index
    %c0_25 = arith.constant 0 : index
    %28 = vector.load %arg9[%c0_24, %c0_25] : memref<128x128xf32, #tpu.memory_space<vmem>>, vector<128x128xf32>
    %cst_26 = arith.constant 0.000000e+00 : f32
    %29 = vector.broadcast %cst_26 : f32 to vector<8x128xf32>
    %cst_27 = arith.constant 0.000000e+00 : f32
    %30 = vector.broadcast %cst_27 : f32 to vector<8x128xf32>
    %31 = vector.extract_strided_slice %27 {offsets = [0, 0], sizes = [8, 128], strides = [1, 1]} : vector<64x128xf32> to vector<8x128xf32>
    %cst_28 = arith.constant dense<0.000000e+00> : vector<8x128xf32>
    %32 = tpu.matmul %29, %28, %cst_28 {dimension_numbers = #tpu.dot_dimension_numbers<[1], [0], [0], [1], [0, 0, 1, 1], [], []>} : vector<8x128xf32>, vector<128x128xf32>, vector<8x128xf32> -> vector<8x128xf32>
    %33 = arith.addf %31, %32 : vector<8x128xf32>
    %34 = arith.negf %33 : vector<8x128xf32>
    %35 = math.exp %34 : vector<8x128xf32>
    %cst_29 = arith.constant 1.000000e+00 : f32
    %36 = vector.broadcast %cst_29 : f32 to vector<8x128xf32>
    %37 = arith.addf %36, %35 : vector<8x128xf32>
    %38 = arith.divf %36, %37 : vector<8x128xf32>
    %39 = math.tanh %33 : vector<8x128xf32>
    %c96_i32 = arith.constant 96 : i32
    %40 = tpu.dynamic_rotate %38 by %c96_i32 dim 1 : vector<8x128xf32>, i32 -> vector<8x128xf32>
    %c64_i32 = arith.constant 64 : i32
    %41 = tpu.dynamic_rotate %38 by %c64_i32 dim 1 : vector<8x128xf32>, i32 -> vector<8x128xf32>
    %c32_i32 = arith.constant 32 : i32
    %42 = tpu.dynamic_rotate %39 by %c32_i32 dim 1 : vector<8x128xf32>, i32 -> vector<8x128xf32>
    %43 = arith.mulf %40, %30 : vector<8x128xf32>
    %44 = arith.mulf %38, %42 : vector<8x128xf32>
    %45 = arith.addf %43, %44 : vector<8x128xf32>
    %46 = math.tanh %45 : vector<8x128xf32>
    %47 = arith.mulf %41, %46 : vector<8x128xf32>
    %c0_30 = arith.constant 0 : index
    %c0_31 = arith.constant 0 : index
    %48 = vector.load %arg21[%c0_30, %c0_31] : memref<64x128xf32, #tpu.memory_space<vmem>>, vector<8x128xf32>
    tpu.vector_store %arg21[%c0_30, %c0_31], %47 {strides = array<i32>} : memref<64x128xf32, #tpu.memory_space<vmem>>, vector<8x128xf32>,
    %49 = vector.extract_strided_slice %27 {offsets = [8, 0], sizes = [8, 128], strides = [1, 1]} : vector<64x128xf32> to vector<8x128xf32>
    %cst_32 = arith.constant dense<0.000000e+00> : vector<8x128xf32>
    %50 = tpu.matmul %47, %28, %cst_32 {dimension_numbers = #tpu.dot_dimension_numbers<[1], [0], [0], [1], [0, 0, 1, 1], [], []>} : vector<8x128xf32>, vector<128x128xf32>, vector<8x128xf32> -> vector<8x128xf32>
    %51 = arith.addf %49, %50 : vector<8x128xf32>
    %52 = arith.negf %51 : vector<8x128xf32>
    %53 = math.exp %52 : vector<8x128xf32>
    %cst_33 = arith.constant 1.000000e+00 : f32
    %54 = vector.broadcast %cst_33 : f32 to vector<8x128xf32>
    %55 = arith.addf %54, %53 : vector<8x128xf32>
    %56 = arith.divf %54, %55 : vector<8x128xf32>
    %57 = math.tanh %51 : vector<8x128xf32>
    %c96_i32_34 = arith.constant 96 : i32
    %58 = tpu.dynamic_rotate %56 by %c96_i32_34 dim 1 : vector<8x128xf32>, i32 -> vector<8x128xf32>
    %c64_i32_35 = arith.constant 64 : i32
    %59 = tpu.dynamic_rotate %56 by %c64_i32_35 dim 1 : vector<8x128xf32>, i32 -> vector<8x128xf32>
    %c32_i32_36 = arith.constant 32 : i32
    %60 = tpu.dynamic_rotate %57 by %c32_i32_36 dim 1 : vector<8x128xf32>, i32 -> vector<8x128xf32>
    %61 = arith.mulf %58, %45 : vector<8x128xf32>
    %62 = arith.mulf %56, %60 : vector<8x128xf32>
    %63 = arith.addf %61, %62 : vector<8x128xf32>
    %64 = math.tanh %63 : vector<8x128xf32>
    %65 = arith.mulf %59, %64 : vector<8x128xf32>
    %c8 = arith.constant 8 : index
    %c0_37 = arith.constant 0 : index
    %66 = vector.load %arg21[%c8, %c0_37] : memref<64x128xf32, #tpu.memory_space<vmem>>, vector<8x128xf32>
    tpu.vector_store %arg21[%c8, %c0_37], %65 {strides = array<i32>} : memref<64x128xf32, #tpu.memory_space<vmem>>, vector<8x128xf32>,
    %67 = vector.extract_strided_slice %27 {offsets = [16, 0], sizes = [8, 128], strides = [1, 1]} : vector<64x128xf32> to vector<8x128xf32>
    %cst_38 = arith.constant dense<0.000000e+00> : vector<8x128xf32>
    %68 = tpu.matmul %65, %28, %cst_38 {dimension_numbers = #tpu.dot_dimension_numbers<[1], [0], [0], [1], [0, 0, 1, 1], [], []>} : vector<8x128xf32>, vector<128x128xf32>, vector<8x128xf32> -> vector<8x128xf32>
    %69 = arith.addf %67, %68 : vector<8x128xf32>
    %70 = arith.negf %69 : vector<8x128xf32>
    %71 = math.exp %70 : vector<8x128xf32>
    %cst_39 = arith.constant 1.000000e+00 : f32
    %72 = vector.broadcast %cst_39 : f32 to vector<8x128xf32>
    %73 = arith.addf %72, %71 : vector<8x128xf32>
    %74 = arith.divf %72, %73 : vector<8x128xf32>
    %75 = math.tanh %69 : vector<8x128xf32>
    %c96_i32_40 = arith.constant 96 : i32
    %76 = tpu.dynamic_rotate %74 by %c96_i32_40 dim 1 : vector<8x128xf32>, i32 -> vector<8x128xf32>
    %c64_i32_41 = arith.constant 64 : i32
    %77 = tpu.dynamic_rotate %74 by %c64_i32_41 dim 1 : vector<8x128xf32>, i32 -> vector<8x128xf32>
    %c32_i32_42 = arith.constant 32 : i32
    %78 = tpu.dynamic_rotate %75 by %c32_i32_42 dim 1 : vector<8x128xf32>, i32 -> vector<8x128xf32>
    %79 = arith.mulf %76, %63 : vector<8x128xf32>
    %80 = arith.mulf %74, %78 : vector<8x128xf32>
    %81 = arith.addf %79, %80 : vector<8x128xf32>
    %82 = math.tanh %81 : vector<8x128xf32>
    %83 = arith.mulf %77, %82 : vector<8x128xf32>
    %c16 = arith.constant 16 : index
    %c0_43 = arith.constant 0 : index
    %84 = vector.load %arg21[%c16, %c0_43] : memref<64x128xf32, #tpu.memory_space<vmem>>, vector<8x128xf32>
    tpu.vector_store %arg21[%c16, %c0_43], %83 {strides = array<i32>} : memref<64x128xf32, #tpu.memory_space<vmem>>, vector<8x128xf32>,
    %85 = vector.extract_strided_slice %27 {offsets = [24, 0], sizes = [8, 128], strides = [1, 1]} : vector<64x128xf32> to vector<8x128xf32>
    %cst_44 = arith.constant dense<0.000000e+00> : vector<8x128xf32>
    %86 = tpu.matmul %83, %28, %cst_44 {dimension_numbers = #tpu.dot_dimension_numbers<[1], [0], [0], [1], [0, 0, 1, 1], [], []>} : vector<8x128xf32>, vector<128x128xf32>, vector<8x128xf32> -> vector<8x128xf32>
    %87 = arith.addf %85, %86 : vector<8x128xf32>
    %88 = arith.negf %87 : vector<8x128xf32>
    %89 = math.exp %88 : vector<8x128xf32>
    %cst_45 = arith.constant 1.000000e+00 : f32
    %90 = vector.broadcast %cst_45 : f32 to vector<8x128xf32>
    %91 = arith.addf %90, %89 : vector<8x128xf32>
    %92 = arith.divf %90, %91 : vector<8x128xf32>
    %93 = math.tanh %87 : vector<8x128xf32>
    %c96_i32_46 = arith.constant 96 : i32
    %94 = tpu.dynamic_rotate %92 by %c96_i32_46 dim 1 : vector<8x128xf32>, i32 -> vector<8x128xf32>
    %c64_i32_47 = arith.constant 64 : i32
    %95 = tpu.dynamic_rotate %92 by %c64_i32_47 dim 1 : vector<8x128xf32>, i32 -> vector<8x128xf32>
    %c32_i32_48 = arith.constant 32 : i32
    %96 = tpu.dynamic_rotate %93 by %c32_i32_48 dim 1 : vector<8x128xf32>, i32 -> vector<8x128xf32>
    %97 = arith.mulf %94, %81 : vector<8x128xf32>
    %98 = arith.mulf %92, %96 : vector<8x128xf32>
    %99 = arith.addf %97, %98 : vector<8x128xf32>
    %100 = math.tanh %99 : vector<8x128xf32>
    %101 = arith.mulf %95, %100 : vector<8x128xf32>
    %c24 = arith.constant 24 : index
    %c0_49 = arith.constant 0 : index
    %102 = vector.load %arg21[%c24, %c0_49] : memref<64x128xf32, #tpu.memory_space<vmem>>, vector<8x128xf32>
    tpu.vector_store %arg21[%c24, %c0_49], %101 {strides = array<i32>} : memref<64x128xf32, #tpu.memory_space<vmem>>, vector<8x128xf32>,
    %103 = vector.extract_strided_slice %27 {offsets = [32, 0], sizes = [8, 128], strides = [1, 1]} : vector<64x128xf32> to vector<8x128xf32>
    %cst_50 = arith.constant dense<0.000000e+00> : vector<8x128xf32>
    %104 = tpu.matmul %101, %28, %cst_50 {dimension_numbers = #tpu.dot_dimension_numbers<[1], [0], [0], [1], [0, 0, 1, 1], [], []>} : vector<8x128xf32>, vector<128x128xf32>, vector<8x128xf32> -> vector<8x128xf32>
    %105 = arith.addf %103, %104 : vector<8x128xf32>
    %106 = arith.negf %105 : vector<8x128xf32>
    %107 = math.exp %106 : vector<8x128xf32>
    %cst_51 = arith.constant 1.000000e+00 : f32
    %108 = vector.broadcast %cst_51 : f32 to vector<8x128xf32>
    %109 = arith.addf %108, %107 : vector<8x128xf32>
    %110 = arith.divf %108, %109 : vector<8x128xf32>
    %111 = math.tanh %105 : vector<8x128xf32>
    %c96_i32_52 = arith.constant 96 : i32
    %112 = tpu.dynamic_rotate %110 by %c96_i32_52 dim 1 : vector<8x128xf32>, i32 -> vector<8x128xf32>
    %c64_i32_53 = arith.constant 64 : i32
    %113 = tpu.dynamic_rotate %110 by %c64_i32_53 dim 1 : vector<8x128xf32>, i32 -> vector<8x128xf32>
    %c32_i32_54 = arith.constant 32 : i32
    %114 = tpu.dynamic_rotate %111 by %c32_i32_54 dim 1 : vector<8x128xf32>, i32 -> vector<8x128xf32>
    %115 = arith.mulf %112, %99 : vector<8x128xf32>
    %116 = arith.mulf %110, %114 : vector<8x128xf32>
    %117 = arith.addf %115, %116 : vector<8x128xf32>
    %118 = math.tanh %117 : vector<8x128xf32>
    %119 = arith.mulf %113, %118 : vector<8x128xf32>
    %c32 = arith.constant 32 : index
    %c0_55 = arith.constant 0 : index
    %120 = vector.load %arg21[%c32, %c0_55] : memref<64x128xf32, #tpu.memory_space<vmem>>, vector<8x128xf32>
    tpu.vector_store %arg21[%c32, %c0_55], %119 {strides = array<i32>} : memref<64x128xf32, #tpu.memory_space<vmem>>, vector<8x128xf32>,
    %121 = vector.extract_strided_slice %27 {offsets = [40, 0], sizes = [8, 128], strides = [1, 1]} : vector<64x128xf32> to vector<8x128xf32>
    %cst_56 = arith.constant dense<0.000000e+00> : vector<8x128xf32>
    %122 = tpu.matmul %119, %28, %cst_56 {dimension_numbers = #tpu.dot_dimension_numbers<[1], [0], [0], [1], [0, 0, 1, 1], [], []>} : vector<8x128xf32>, vector<128x128xf32>, vector<8x128xf32> -> vector<8x128xf32>
    %123 = arith.addf %121, %122 : vector<8x128xf32>
    %124 = arith.negf %123 : vector<8x128xf32>
    %125 = math.exp %124 : vector<8x128xf32>
    %cst_57 = arith.constant 1.000000e+00 : f32
    %126 = vector.broadcast %cst_57 : f32 to vector<8x128xf32>
    %127 = arith.addf %126, %125 : vector<8x128xf32>
    %128 = arith.divf %126, %127 : vector<8x128xf32>
    %129 = math.tanh %123 : vector<8x128xf32>
    %c96_i32_58 = arith.constant 96 : i32
    %130 = tpu.dynamic_rotate %128 by %c96_i32_58 dim 1 : vector<8x128xf32>, i32 -> vector<8x128xf32>
    %c64_i32_59 = arith.constant 64 : i32
    %131 = tpu.dynamic_rotate %128 by %c64_i32_59 dim 1 : vector<8x128xf32>, i32 -> vector<8x128xf32>
    %c32_i32_60 = arith.constant 32 : i32
    %132 = tpu.dynamic_rotate %129 by %c32_i32_60 dim 1 : vector<8x128xf32>, i32 -> vector<8x128xf32>
    %133 = arith.mulf %130, %117 : vector<8x128xf32>
    %134 = arith.mulf %128, %132 : vector<8x128xf32>
    %135 = arith.addf %133, %134 : vector<8x128xf32>
    %136 = math.tanh %135 : vector<8x128xf32>
    %137 = arith.mulf %131, %136 : vector<8x128xf32>
    %c40 = arith.constant 40 : index
    %c0_61 = arith.constant 0 : index
    %138 = vector.load %arg21[%c40, %c0_61] : memref<64x128xf32, #tpu.memory_space<vmem>>, vector<8x128xf32>
    tpu.vector_store %arg21[%c40, %c0_61], %137 {strides = array<i32>} : memref<64x128xf32, #tpu.memory_space<vmem>>, vector<8x128xf32>,
    %139 = vector.extract_strided_slice %27 {offsets = [48, 0], sizes = [8, 128], strides = [1, 1]} : vector<64x128xf32> to vector<8x128xf32>
    %cst_62 = arith.constant dense<0.000000e+00> : vector<8x128xf32>
    %140 = tpu.matmul %137, %28, %cst_62 {dimension_numbers = #tpu.dot_dimension_numbers<[1], [0], [0], [1], [0, 0, 1, 1], [], []>} : vector<8x128xf32>, vector<128x128xf32>, vector<8x128xf32> -> vector<8x128xf32>
    %141 = arith.addf %139, %140 : vector<8x128xf32>
    %142 = arith.negf %141 : vector<8x128xf32>
    %143 = math.exp %142 : vector<8x128xf32>
    %cst_63 = arith.constant 1.000000e+00 : f32
    %144 = vector.broadcast %cst_63 : f32 to vector<8x128xf32>
    %145 = arith.addf %144, %143 : vector<8x128xf32>
    %146 = arith.divf %144, %145 : vector<8x128xf32>
    %147 = math.tanh %141 : vector<8x128xf32>
    %c96_i32_64 = arith.constant 96 : i32
    %148 = tpu.dynamic_rotate %146 by %c96_i32_64 dim 1 : vector<8x128xf32>, i32 -> vector<8x128xf32>
    %c64_i32_65 = arith.constant 64 : i32
    %149 = tpu.dynamic_rotate %146 by %c64_i32_65 dim 1 : vector<8x128xf32>, i32 -> vector<8x128xf32>
    %c32_i32_66 = arith.constant 32 : i32
    %150 = tpu.dynamic_rotate %147 by %c32_i32_66 dim 1 : vector<8x128xf32>, i32 -> vector<8x128xf32>
    %151 = arith.mulf %148, %135 : vector<8x128xf32>
    %152 = arith.mulf %146, %150 : vector<8x128xf32>
    %153 = arith.addf %151, %152 : vector<8x128xf32>
    %154 = math.tanh %153 : vector<8x128xf32>
    %155 = arith.mulf %149, %154 : vector<8x128xf32>
    %c48 = arith.constant 48 : index
    %c0_67 = arith.constant 0 : index
    %156 = vector.load %arg21[%c48, %c0_67] : memref<64x128xf32, #tpu.memory_space<vmem>>, vector<8x128xf32>
    tpu.vector_store %arg21[%c48, %c0_67], %155 {strides = array<i32>} : memref<64x128xf32, #tpu.memory_space<vmem>>, vector<8x128xf32>,
    %157 = vector.extract_strided_slice %27 {offsets = [56, 0], sizes = [8, 128], strides = [1, 1]} : vector<64x128xf32> to vector<8x128xf32>
    %cst_68 = arith.constant dense<0.000000e+00> : vector<8x128xf32>
    %158 = tpu.matmul %155, %28, %cst_68 {dimension_numbers = #tpu.dot_dimension_numbers<[1], [0], [0], [1], [0, 0, 1, 1], [], []>} : vector<8x128xf32>, vector<128x128xf32>, vector<8x128xf32> -> vector<8x128xf32>
    %159 = arith.addf %157, %158 : vector<8x128xf32>
    %160 = arith.negf %159 : vector<8x128xf32>
    %161 = math.exp %160 : vector<8x128xf32>
    %cst_69 = arith.constant 1.000000e+00 : f32
    %162 = vector.broadcast %cst_69 : f32 to vector<8x128xf32>
    %163 = arith.addf %162, %161 : vector<8x128xf32>
    %164 = arith.divf %162, %163 : vector<8x128xf32>
    %165 = math.tanh %159 : vector<8x128xf32>
    %c96_i32_70 = arith.constant 96 : i32
    %166 = tpu.dynamic_rotate %164 by %c96_i32_70 dim 1 : vector<8x128xf32>, i32 -> vector<8x128xf32>
    %c64_i32_71 = arith.constant 64 : i32
    %167 = tpu.dynamic_rotate %164 by %c64_i32_71 dim 1 : vector<8x128xf32>, i32 -> vector<8x128xf32>
    %c32_i32_72 = arith.constant 32 : i32
    %168 = tpu.dynamic_rotate %165 by %c32_i32_72 dim 1 : vector<8x128xf32>, i32 -> vector<8x128xf32>
    %169 = arith.mulf %166, %153 : vector<8x128xf32>
    %170 = arith.mulf %164, %168 : vector<8x128xf32>
    %171 = arith.addf %169, %170 : vector<8x128xf32>
    %172 = math.tanh %171 : vector<8x128xf32>
    %173 = arith.mulf %167, %172 : vector<8x128xf32>
    %c56 = arith.constant 56 : index
    %c0_73 = arith.constant 0 : index
    %174 = vector.load %arg21[%c56, %c0_73] : memref<64x128xf32, #tpu.memory_space<vmem>>, vector<8x128xf32>
    tpu.vector_store %arg21[%c56, %c0_73], %173 {strides = array<i32>} : memref<64x128xf32, #tpu.memory_space<vmem>>, vector<8x128xf32>,
    %c0_74 = arith.constant 0 : index
    %c0_75 = arith.constant 0 : index
    %175 = vector.load %arg21[%c0_74, %c0_75] : memref<64x128xf32, #tpu.memory_space<vmem>>, vector<64x128xf32>
    %c0_76 = arith.constant 0 : index
    %c0_77 = arith.constant 0 : index
    %176 = vector.load %arg11[%c0_76, %c0_77] : memref<128x128xf32, #tpu.memory_space<vmem>>, vector<128x128xf32>
    %cst_78 = arith.constant dense<0.000000e+00> : vector<64x128xf32>
    %177 = tpu.matmul %175, %176, %cst_78 {dimension_numbers = #tpu.dot_dimension_numbers<[1], [0], [0], [1], [0, 0, 1, 1], [], []>} : vector<64x128xf32>, vector<128x128xf32>, vector<64x128xf32> -> vector<64x128xf32>
    %c0_79 = arith.constant 0 : index
    %c0_80 = arith.constant 0 : index
    %178 = vector.load %arg13[%c0_79, %c0_80] : memref<1x128xf32, #tpu.memory_space<vmem>>, vector<1x128xf32>
    %179 = vector.broadcast %178 : vector<1x128xf32> to vector<64x128xf32>
    %180 = arith.addf %177, %179 : vector<64x128xf32>
    %c0_81 = arith.constant 0 : index
    %c0_82 = arith.constant 0 : index
    %181 = vector.load %arg12[%c0_81, %c0_82] : memref<128x128xf32, #tpu.memory_space<vmem>>, vector<128x128xf32>
    %cst_83 = arith.constant 0.000000e+00 : f32
    %182 = vector.broadcast %cst_83 : f32 to vector<8x128xf32>
    %cst_84 = arith.constant 0.000000e+00 : f32
    %183 = vector.broadcast %cst_84 : f32 to vector<8x128xf32>
    %184 = vector.extract_strided_slice %180 {offsets = [0, 0], sizes = [8, 128], strides = [1, 1]} : vector<64x128xf32> to vector<8x128xf32>
    %cst_85 = arith.constant dense<0.000000e+00> : vector<8x128xf32>
    %185 = tpu.matmul %182, %181, %cst_85 {dimension_numbers = #tpu.dot_dimension_numbers<[1], [0], [0], [1], [0, 0, 1, 1], [], []>} : vector<8x128xf32>, vector<128x128xf32>, vector<8x128xf32> -> vector<8x128xf32>
    %186 = arith.addf %184, %185 : vector<8x128xf32>
    %187 = arith.negf %186 : vector<8x128xf32>
    %188 = math.exp %187 : vector<8x128xf32>
    %cst_86 = arith.constant 1.000000e+00 : f32
    %189 = vector.broadcast %cst_86 : f32 to vector<8x128xf32>
    %190 = arith.addf %189, %188 : vector<8x128xf32>
    %191 = arith.divf %189, %190 : vector<8x128xf32>
    %192 = math.tanh %186 : vector<8x128xf32>
    %c96_i32_87 = arith.constant 96 : i32
    %193 = tpu.dynamic_rotate %191 by %c96_i32_87 dim 1 : vector<8x128xf32>, i32 -> vector<8x128xf32>
    %c64_i32_88 = arith.constant 64 : i32
    %194 = tpu.dynamic_rotate %191 by %c64_i32_88 dim 1 : vector<8x128xf32>, i32 -> vector<8x128xf32>
    %c32_i32_89 = arith.constant 32 : i32
    %195 = tpu.dynamic_rotate %192 by %c32_i32_89 dim 1 : vector<8x128xf32>, i32 -> vector<8x128xf32>
    %196 = arith.mulf %193, %183 : vector<8x128xf32>
    %197 = arith.mulf %191, %195 : vector<8x128xf32>
    %198 = arith.addf %196, %197 : vector<8x128xf32>
    %199 = math.tanh %198 : vector<8x128xf32>
    %200 = arith.mulf %194, %199 : vector<8x128xf32>
    %c0_90 = arith.constant 0 : index
    %c0_91 = arith.constant 0 : index
    %201 = vector.load %arg22[%c0_90, %c0_91] : memref<64x128xf32, #tpu.memory_space<vmem>>, vector<8x128xf32>
    tpu.vector_store %arg22[%c0_90, %c0_91], %200 {strides = array<i32>} : memref<64x128xf32, #tpu.memory_space<vmem>>, vector<8x128xf32>,
    %202 = vector.extract_strided_slice %180 {offsets = [8, 0], sizes = [8, 128], strides = [1, 1]} : vector<64x128xf32> to vector<8x128xf32>
    %cst_92 = arith.constant dense<0.000000e+00> : vector<8x128xf32>
    %203 = tpu.matmul %200, %181, %cst_92 {dimension_numbers = #tpu.dot_dimension_numbers<[1], [0], [0], [1], [0, 0, 1, 1], [], []>} : vector<8x128xf32>, vector<128x128xf32>, vector<8x128xf32> -> vector<8x128xf32>
    %204 = arith.addf %202, %203 : vector<8x128xf32>
    %205 = arith.negf %204 : vector<8x128xf32>
    %206 = math.exp %205 : vector<8x128xf32>
    %cst_93 = arith.constant 1.000000e+00 : f32
    %207 = vector.broadcast %cst_93 : f32 to vector<8x128xf32>
    %208 = arith.addf %207, %206 : vector<8x128xf32>
    %209 = arith.divf %207, %208 : vector<8x128xf32>
    %210 = math.tanh %204 : vector<8x128xf32>
    %c96_i32_94 = arith.constant 96 : i32
    %211 = tpu.dynamic_rotate %209 by %c96_i32_94 dim 1 : vector<8x128xf32>, i32 -> vector<8x128xf32>
    %c64_i32_95 = arith.constant 64 : i32
    %212 = tpu.dynamic_rotate %209 by %c64_i32_95 dim 1 : vector<8x128xf32>, i32 -> vector<8x128xf32>
    %c32_i32_96 = arith.constant 32 : i32
    %213 = tpu.dynamic_rotate %210 by %c32_i32_96 dim 1 : vector<8x128xf32>, i32 -> vector<8x128xf32>
    %214 = arith.mulf %211, %198 : vector<8x128xf32>
    %215 = arith.mulf %209, %213 : vector<8x128xf32>
    %216 = arith.addf %214, %215 : vector<8x128xf32>
    %217 = math.tanh %216 : vector<8x128xf32>
    %218 = arith.mulf %212, %217 : vector<8x128xf32>
    %c8_97 = arith.constant 8 : index
    %c0_98 = arith.constant 0 : index
    %219 = vector.load %arg22[%c8_97, %c0_98] : memref<64x128xf32, #tpu.memory_space<vmem>>, vector<8x128xf32>
    tpu.vector_store %arg22[%c8_97, %c0_98], %218 {strides = array<i32>} : memref<64x128xf32, #tpu.memory_space<vmem>>, vector<8x128xf32>,
    %220 = vector.extract_strided_slice %180 {offsets = [16, 0], sizes = [8, 128], strides = [1, 1]} : vector<64x128xf32> to vector<8x128xf32>
    %cst_99 = arith.constant dense<0.000000e+00> : vector<8x128xf32>
    %221 = tpu.matmul %218, %181, %cst_99 {dimension_numbers = #tpu.dot_dimension_numbers<[1], [0], [0], [1], [0, 0, 1, 1], [], []>} : vector<8x128xf32>, vector<128x128xf32>, vector<8x128xf32> -> vector<8x128xf32>
    %222 = arith.addf %220, %221 : vector<8x128xf32>
    %223 = arith.negf %222 : vector<8x128xf32>
    %224 = math.exp %223 : vector<8x128xf32>
    %cst_100 = arith.constant 1.000000e+00 : f32
    %225 = vector.broadcast %cst_100 : f32 to vector<8x128xf32>
    %226 = arith.addf %225, %224 : vector<8x128xf32>
    %227 = arith.divf %225, %226 : vector<8x128xf32>
    %228 = math.tanh %222 : vector<8x128xf32>
    %c96_i32_101 = arith.constant 96 : i32
    %229 = tpu.dynamic_rotate %227 by %c96_i32_101 dim 1 : vector<8x128xf32>, i32 -> vector<8x128xf32>
    %c64_i32_102 = arith.constant 64 : i32
    %230 = tpu.dynamic_rotate %227 by %c64_i32_102 dim 1 : vector<8x128xf32>, i32 -> vector<8x128xf32>
    %c32_i32_103 = arith.constant 32 : i32
    %231 = tpu.dynamic_rotate %228 by %c32_i32_103 dim 1 : vector<8x128xf32>, i32 -> vector<8x128xf32>
    %232 = arith.mulf %229, %216 : vector<8x128xf32>
    %233 = arith.mulf %227, %231 : vector<8x128xf32>
    %234 = arith.addf %232, %233 : vector<8x128xf32>
    %235 = math.tanh %234 : vector<8x128xf32>
    %236 = arith.mulf %230, %235 : vector<8x128xf32>
    %c16_104 = arith.constant 16 : index
    %c0_105 = arith.constant 0 : index
    %237 = vector.load %arg22[%c16_104, %c0_105] : memref<64x128xf32, #tpu.memory_space<vmem>>, vector<8x128xf32>
    tpu.vector_store %arg22[%c16_104, %c0_105], %236 {strides = array<i32>} : memref<64x128xf32, #tpu.memory_space<vmem>>, vector<8x128xf32>,
    %238 = vector.extract_strided_slice %180 {offsets = [24, 0], sizes = [8, 128], strides = [1, 1]} : vector<64x128xf32> to vector<8x128xf32>
    %cst_106 = arith.constant dense<0.000000e+00> : vector<8x128xf32>
    %239 = tpu.matmul %236, %181, %cst_106 {dimension_numbers = #tpu.dot_dimension_numbers<[1], [0], [0], [1], [0, 0, 1, 1], [], []>} : vector<8x128xf32>, vector<128x128xf32>, vector<8x128xf32> -> vector<8x128xf32>
    %240 = arith.addf %238, %239 : vector<8x128xf32>
    %241 = arith.negf %240 : vector<8x128xf32>
    %242 = math.exp %241 : vector<8x128xf32>
    %cst_107 = arith.constant 1.000000e+00 : f32
    %243 = vector.broadcast %cst_107 : f32 to vector<8x128xf32>
    %244 = arith.addf %243, %242 : vector<8x128xf32>
    %245 = arith.divf %243, %244 : vector<8x128xf32>
    %246 = math.tanh %240 : vector<8x128xf32>
    %c96_i32_108 = arith.constant 96 : i32
    %247 = tpu.dynamic_rotate %245 by %c96_i32_108 dim 1 : vector<8x128xf32>, i32 -> vector<8x128xf32>
    %c64_i32_109 = arith.constant 64 : i32
    %248 = tpu.dynamic_rotate %245 by %c64_i32_109 dim 1 : vector<8x128xf32>, i32 -> vector<8x128xf32>
    %c32_i32_110 = arith.constant 32 : i32
    %249 = tpu.dynamic_rotate %246 by %c32_i32_110 dim 1 : vector<8x128xf32>, i32 -> vector<8x128xf32>
    %250 = arith.mulf %247, %234 : vector<8x128xf32>
    %251 = arith.mulf %245, %249 : vector<8x128xf32>
    %252 = arith.addf %250, %251 : vector<8x128xf32>
    %253 = math.tanh %252 : vector<8x128xf32>
    %254 = arith.mulf %248, %253 : vector<8x128xf32>
    %c24_111 = arith.constant 24 : index
    %c0_112 = arith.constant 0 : index
    %255 = vector.load %arg22[%c24_111, %c0_112] : memref<64x128xf32, #tpu.memory_space<vmem>>, vector<8x128xf32>
    tpu.vector_store %arg22[%c24_111, %c0_112], %254 {strides = array<i32>} : memref<64x128xf32, #tpu.memory_space<vmem>>, vector<8x128xf32>,
    %256 = vector.extract_strided_slice %180 {offsets = [32, 0], sizes = [8, 128], strides = [1, 1]} : vector<64x128xf32> to vector<8x128xf32>
    %cst_113 = arith.constant dense<0.000000e+00> : vector<8x128xf32>
    %257 = tpu.matmul %254, %181, %cst_113 {dimension_numbers = #tpu.dot_dimension_numbers<[1], [0], [0], [1], [0, 0, 1, 1], [], []>} : vector<8x128xf32>, vector<128x128xf32>, vector<8x128xf32> -> vector<8x128xf32>
    %258 = arith.addf %256, %257 : vector<8x128xf32>
    %259 = arith.negf %258 : vector<8x128xf32>
    %260 = math.exp %259 : vector<8x128xf32>
    %cst_114 = arith.constant 1.000000e+00 : f32
    %261 = vector.broadcast %cst_114 : f32 to vector<8x128xf32>
    %262 = arith.addf %261, %260 : vector<8x128xf32>
    %263 = arith.divf %261, %262 : vector<8x128xf32>
    %264 = math.tanh %258 : vector<8x128xf32>
    %c96_i32_115 = arith.constant 96 : i32
    %265 = tpu.dynamic_rotate %263 by %c96_i32_115 dim 1 : vector<8x128xf32>, i32 -> vector<8x128xf32>
    %c64_i32_116 = arith.constant 64 : i32
    %266 = tpu.dynamic_rotate %263 by %c64_i32_116 dim 1 : vector<8x128xf32>, i32 -> vector<8x128xf32>
    %c32_i32_117 = arith.constant 32 : i32
    %267 = tpu.dynamic_rotate %264 by %c32_i32_117 dim 1 : vector<8x128xf32>, i32 -> vector<8x128xf32>
    %268 = arith.mulf %265, %252 : vector<8x128xf32>
    %269 = arith.mulf %263, %267 : vector<8x128xf32>
    %270 = arith.addf %268, %269 : vector<8x128xf32>
    %271 = math.tanh %270 : vector<8x128xf32>
    %272 = arith.mulf %266, %271 : vector<8x128xf32>
    %c32_118 = arith.constant 32 : index
    %c0_119 = arith.constant 0 : index
    %273 = vector.load %arg22[%c32_118, %c0_119] : memref<64x128xf32, #tpu.memory_space<vmem>>, vector<8x128xf32>
    tpu.vector_store %arg22[%c32_118, %c0_119], %272 {strides = array<i32>} : memref<64x128xf32, #tpu.memory_space<vmem>>, vector<8x128xf32>,
    %274 = vector.extract_strided_slice %180 {offsets = [40, 0], sizes = [8, 128], strides = [1, 1]} : vector<64x128xf32> to vector<8x128xf32>
    %cst_120 = arith.constant dense<0.000000e+00> : vector<8x128xf32>
    %275 = tpu.matmul %272, %181, %cst_120 {dimension_numbers = #tpu.dot_dimension_numbers<[1], [0], [0], [1], [0, 0, 1, 1], [], []>} : vector<8x128xf32>, vector<128x128xf32>, vector<8x128xf32> -> vector<8x128xf32>
    %276 = arith.addf %274, %275 : vector<8x128xf32>
    %277 = arith.negf %276 : vector<8x128xf32>
    %278 = math.exp %277 : vector<8x128xf32>
    %cst_121 = arith.constant 1.000000e+00 : f32
    %279 = vector.broadcast %cst_121 : f32 to vector<8x128xf32>
    %280 = arith.addf %279, %278 : vector<8x128xf32>
    %281 = arith.divf %279, %280 : vector<8x128xf32>
    %282 = math.tanh %276 : vector<8x128xf32>
    %c96_i32_122 = arith.constant 96 : i32
    %283 = tpu.dynamic_rotate %281 by %c96_i32_122 dim 1 : vector<8x128xf32>, i32 -> vector<8x128xf32>
    %c64_i32_123 = arith.constant 64 : i32
    %284 = tpu.dynamic_rotate %281 by %c64_i32_123 dim 1 : vector<8x128xf32>, i32 -> vector<8x128xf32>
    %c32_i32_124 = arith.constant 32 : i32
    %285 = tpu.dynamic_rotate %282 by %c32_i32_124 dim 1 : vector<8x128xf32>, i32 -> vector<8x128xf32>
    %286 = arith.mulf %283, %270 : vector<8x128xf32>
    %287 = arith.mulf %281, %285 : vector<8x128xf32>
    %288 = arith.addf %286, %287 : vector<8x128xf32>
    %289 = math.tanh %288 : vector<8x128xf32>
    %290 = arith.mulf %284, %289 : vector<8x128xf32>
    %c40_125 = arith.constant 40 : index
    %c0_126 = arith.constant 0 : index
    %291 = vector.load %arg22[%c40_125, %c0_126] : memref<64x128xf32, #tpu.memory_space<vmem>>, vector<8x128xf32>
    tpu.vector_store %arg22[%c40_125, %c0_126], %290 {strides = array<i32>} : memref<64x128xf32, #tpu.memory_space<vmem>>, vector<8x128xf32>,
    %292 = vector.extract_strided_slice %180 {offsets = [48, 0], sizes = [8, 128], strides = [1, 1]} : vector<64x128xf32> to vector<8x128xf32>
    %cst_127 = arith.constant dense<0.000000e+00> : vector<8x128xf32>
    %293 = tpu.matmul %290, %181, %cst_127 {dimension_numbers = #tpu.dot_dimension_numbers<[1], [0], [0], [1], [0, 0, 1, 1], [], []>} : vector<8x128xf32>, vector<128x128xf32>, vector<8x128xf32> -> vector<8x128xf32>
    %294 = arith.addf %292, %293 : vector<8x128xf32>
    %295 = arith.negf %294 : vector<8x128xf32>
    %296 = math.exp %295 : vector<8x128xf32>
    %cst_128 = arith.constant 1.000000e+00 : f32
    %297 = vector.broadcast %cst_128 : f32 to vector<8x128xf32>
    %298 = arith.addf %297, %296 : vector<8x128xf32>
    %299 = arith.divf %297, %298 : vector<8x128xf32>
    %300 = math.tanh %294 : vector<8x128xf32>
    %c96_i32_129 = arith.constant 96 : i32
    %301 = tpu.dynamic_rotate %299 by %c96_i32_129 dim 1 : vector<8x128xf32>, i32 -> vector<8x128xf32>
    %c64_i32_130 = arith.constant 64 : i32
    %302 = tpu.dynamic_rotate %299 by %c64_i32_130 dim 1 : vector<8x128xf32>, i32 -> vector<8x128xf32>
    %c32_i32_131 = arith.constant 32 : i32
    %303 = tpu.dynamic_rotate %300 by %c32_i32_131 dim 1 : vector<8x128xf32>, i32 -> vector<8x128xf32>
    %304 = arith.mulf %301, %288 : vector<8x128xf32>
    %305 = arith.mulf %299, %303 : vector<8x128xf32>
    %306 = arith.addf %304, %305 : vector<8x128xf32>
    %307 = math.tanh %306 : vector<8x128xf32>
    %308 = arith.mulf %302, %307 : vector<8x128xf32>
    %c48_132 = arith.constant 48 : index
    %c0_133 = arith.constant 0 : index
    %309 = vector.load %arg22[%c48_132, %c0_133] : memref<64x128xf32, #tpu.memory_space<vmem>>, vector<8x128xf32>
    tpu.vector_store %arg22[%c48_132, %c0_133], %308 {strides = array<i32>} : memref<64x128xf32, #tpu.memory_space<vmem>>, vector<8x128xf32>,
    %310 = vector.extract_strided_slice %180 {offsets = [56, 0], sizes = [8, 128], strides = [1, 1]} : vector<64x128xf32> to vector<8x128xf32>
    %cst_134 = arith.constant dense<0.000000e+00> : vector<8x128xf32>
    %311 = tpu.matmul %308, %181, %cst_134 {dimension_numbers = #tpu.dot_dimension_numbers<[1], [0], [0], [1], [0, 0, 1, 1], [], []>} : vector<8x128xf32>, vector<128x128xf32>, vector<8x128xf32> -> vector<8x128xf32>
    %312 = arith.addf %310, %311 : vector<8x128xf32>
    %313 = arith.negf %312 : vector<8x128xf32>
    %314 = math.exp %313 : vector<8x128xf32>
    %cst_135 = arith.constant 1.000000e+00 : f32
    %315 = vector.broadcast %cst_135 : f32 to vector<8x128xf32>
    %316 = arith.addf %315, %314 : vector<8x128xf32>
    %317 = arith.divf %315, %316 : vector<8x128xf32>
    %318 = math.tanh %312 : vector<8x128xf32>
    %c96_i32_136 = arith.constant 96 : i32
    %319 = tpu.dynamic_rotate %317 by %c96_i32_136 dim 1 : vector<8x128xf32>, i32 -> vector<8x128xf32>
    %c64_i32_137 = arith.constant 64 : i32
    %320 = tpu.dynamic_rotate %317 by %c64_i32_137 dim 1 : vector<8x128xf32>, i32 -> vector<8x128xf32>
    %c32_i32_138 = arith.constant 32 : i32
    %321 = tpu.dynamic_rotate %318 by %c32_i32_138 dim 1 : vector<8x128xf32>, i32 -> vector<8x128xf32>
    %322 = arith.mulf %319, %306 : vector<8x128xf32>
    %323 = arith.mulf %317, %321 : vector<8x128xf32>
    %324 = arith.addf %322, %323 : vector<8x128xf32>
    %325 = math.tanh %324 : vector<8x128xf32>
    %326 = arith.mulf %320, %325 : vector<8x128xf32>
    %c56_139 = arith.constant 56 : index
    %c0_140 = arith.constant 0 : index
    %327 = vector.load %arg22[%c56_139, %c0_140] : memref<64x128xf32, #tpu.memory_space<vmem>>, vector<8x128xf32>
    tpu.vector_store %arg22[%c56_139, %c0_140], %326 {strides = array<i32>} : memref<64x128xf32, #tpu.memory_space<vmem>>, vector<8x128xf32>,
    %c0_141 = arith.constant 0 : index
    %c0_142 = arith.constant 0 : index
    %328 = vector.load %arg22[%c0_141, %c0_142] : memref<64x128xf32, #tpu.memory_space<vmem>>, vector<64x128xf32>
    %cst_143 = arith.constant 0.000000e+00 : f32
    %329 = vector.broadcast %cst_143 : f32 to vector<64x128xf32>
    %330 = arith.maximumf %328, %329 : vector<64x128xf32>
    %c0_144 = arith.constant 0 : index
    %c0_145 = arith.constant 0 : index
    %331 = vector.load %arg14[%c0_144, %c0_145] : memref<128x64xf32, #tpu.memory_space<vmem>>, vector<128x64xf32>
    %cst_146 = arith.constant dense<0.000000e+00> : vector<64x64xf32>
    %332 = tpu.matmul %330, %331, %cst_146 {dimension_numbers = #tpu.dot_dimension_numbers<[1], [0], [0], [1], [0, 0, 1, 1], [], []>} : vector<64x128xf32>, vector<128x64xf32>, vector<64x64xf32> -> vector<64x64xf32>
    %c0_147 = arith.constant 0 : index
    %c0_148 = arith.constant 0 : index
    %333 = vector.load %arg15[%c0_147, %c0_148] : memref<1x64xf32, #tpu.memory_space<vmem>>, vector<1x64xf32>
    %334 = vector.broadcast %333 : vector<1x64xf32> to vector<64x64xf32>
    %335 = arith.addf %332, %334 : vector<64x64xf32>
    %cst_149 = arith.constant 0.000000e+00 : f32
    %336 = vector.broadcast %cst_149 : f32 to vector<64x64xf32>
    %337 = arith.maximumf %335, %336 : vector<64x64xf32>
    %c0_150 = arith.constant 0 : index
    %c0_151 = arith.constant 0 : index
    %338 = vector.load %arg16[%c0_150, %c0_151] : memref<64x128xf32, #tpu.memory_space<vmem>>, vector<64x128xf32>
    %cst_152 = arith.constant dense<0.000000e+00> : vector<64x128xf32>
    %339 = tpu.matmul %337, %338, %cst_152 {dimension_numbers = #tpu.dot_dimension_numbers<[1], [0], [0], [1], [0, 0, 1, 1], [], []>} : vector<64x64xf32>, vector<64x128xf32>, vector<64x128xf32> -> vector<64x128xf32>
    %c0_153 = arith.constant 0 : index
    %c0_154 = arith.constant 0 : index
    %340 = vector.load %arg17[%c0_153, %c0_154] : memref<1x128xf32, #tpu.memory_space<vmem>>, vector<1x128xf32>
    %341 = vector.broadcast %340 : vector<1x128xf32> to vector<64x128xf32>
    %342 = arith.addf %339, %341 : vector<64x128xf32>
    %cst_155 = arith.constant 0.000000e+00 : f32
    %343 = vector.broadcast %cst_155 : f32 to vector<64x128xf32>
    %344 = arith.maximumf %342, %343 : vector<64x128xf32>
    %c0_156 = arith.constant 0 : index
    %c0_157 = arith.constant 0 : index
    %345 = vector.load %arg18[%c0_156, %c0_157] : memref<128x16xf32, #tpu.memory_space<vmem>>, vector<128x16xf32>
    %cst_158 = arith.constant dense<0.000000e+00> : vector<64x16xf32>
    %346 = tpu.matmul %344, %345, %cst_158 {dimension_numbers = #tpu.dot_dimension_numbers<[1], [0], [0], [1], [0, 0, 1, 1], [], []>} : vector<64x128xf32>, vector<128x16xf32>, vector<64x16xf32> -> vector<64x16xf32>
    %c0_159 = arith.constant 0 : index
    %c0_160 = arith.constant 0 : index
    %347 = vector.load %arg19[%c0_159, %c0_160] : memref<1x16xf32, #tpu.memory_space<vmem>>, vector<1x16xf32>
    %348 = vector.broadcast %347 : vector<1x16xf32> to vector<64x16xf32>
    %349 = arith.addf %346, %348 : vector<64x16xf32>
    %c0_161 = arith.constant 0 : index
    %c0_162 = arith.constant 0 : index
    %c0_163 = arith.constant 0 : index
    %350 = vector.load %arg20[%c0_161, %c0_162, %c0_163] : memref<1x64x16xf32, #tpu.memory_space<vmem>>, vector<1x64x16xf32>
    %351 = vector.shape_cast %350 : vector<1x64x16xf32> to vector<64x16xf32>
    %352 = vector.shape_cast %349 : vector<64x16xf32> to vector<1x64x16xf32>
    tpu.vector_store %arg20[%c0_161, %c0_162, %c0_163], %352 {strides = array<i32>} : memref<1x64x16xf32, #tpu.memory_space<vmem>>, vector<1x64x16xf32>,
    return
  }
  func.func @transform_0(%arg0: i32) -> (i32, i32, i32) {
    %c0_i32 = arith.constant 0 : i32
    %c0_i32_0 = arith.constant 0 : i32
    %c0_i32_1 = arith.constant 0 : i32
    return %arg0, %c0_i32, %c0_i32_0 : i32, i32, i32
  }
  func.func @transform_1(%arg0: i32) -> (i32, i32) {
    %c0_i32 = arith.constant 0 : i32
    %c0_i32_0 = arith.constant 0 : i32
    %c0_i32_1 = arith.constant 0 : i32
    return %c0_i32, %c0_i32_0 : i32, i32
  }
  func.func @transform_2(%arg0: i32) -> (i32, i32) {
    %c0_i32 = arith.constant 0 : i32
    %c0_i32_0 = arith.constant 0 : i32
    %c0_i32_1 = arith.constant 0 : i32
    return %c0_i32, %c0_i32_0 : i32, i32
  }
  func.func @transform_3(%arg0: i32) -> (i32, i32) {
    %c0_i32 = arith.constant 0 : i32
    %c0_i32_0 = arith.constant 0 : i32
    %c0_i32_1 = arith.constant 0 : i32
    return %c0_i32, %c0_i32_0 : i32, i32
  }
  func.func @transform_4(%arg0: i32) -> (i32, i32) {
    %c0_i32 = arith.constant 0 : i32
    %c0_i32_0 = arith.constant 0 : i32
    %c0_i32_1 = arith.constant 0 : i32
    return %c0_i32, %c0_i32_0 : i32, i32
  }
  func.func @transform_5(%arg0: i32) -> (i32, i32) {
    %c0_i32 = arith.constant 0 : i32
    %c0_i32_0 = arith.constant 0 : i32
    %c0_i32_1 = arith.constant 0 : i32
    return %c0_i32, %c0_i32_0 : i32, i32
  }
  func.func @transform_6(%arg0: i32) -> (i32, i32) {
    %c0_i32 = arith.constant 0 : i32
    %c0_i32_0 = arith.constant 0 : i32
    %c0_i32_1 = arith.constant 0 : i32
    return %c0_i32, %c0_i32_0 : i32, i32
  }
  func.func @transform_7(%arg0: i32) -> (i32, i32) {
    %c0_i32 = arith.constant 0 : i32
    %c0_i32_0 = arith.constant 0 : i32
    %c0_i32_1 = arith.constant 0 : i32
    return %c0_i32, %c0_i32_0 : i32, i32
  }
  func.func @transform_8(%arg0: i32) -> (i32, i32) {
    %c0_i32 = arith.constant 0 : i32
    %c0_i32_0 = arith.constant 0 : i32
    %c0_i32_1 = arith.constant 0 : i32
    return %c0_i32, %c0_i32_0 : i32, i32
  }
  func.func @transform_9(%arg0: i32) -> (i32, i32) {
    %c0_i32 = arith.constant 0 : i32
    %c0_i32_0 = arith.constant 0 : i32
    %c0_i32_1 = arith.constant 0 : i32
    return %c0_i32, %c0_i32_0 : i32, i32
  }
  func.func @transform_10(%arg0: i32) -> (i32, i32) {
    %c0_i32 = arith.constant 0 : i32
    %c0_i32_0 = arith.constant 0 : i32
    %c0_i32_1 = arith.constant 0 : i32
    return %c0_i32, %c0_i32_0 : i32, i32
  }
  func.func @transform_11(%arg0: i32) -> (i32, i32) {
    %c0_i32 = arith.constant 0 : i32
    %c0_i32_0 = arith.constant 0 : i32
    %c0_i32_1 = arith.constant 0 : i32
    return %c0_i32, %c0_i32_0 : i32, i32
  }
  func.func @transform_12(%arg0: i32) -> (i32, i32) {
    %c0_i32 = arith.constant 0 : i32
    %c0_i32_0 = arith.constant 0 : i32
    %c0_i32_1 = arith.constant 0 : i32
    return %c0_i32, %c0_i32_0 : i32, i32
  }
  func.func @transform_13(%arg0: i32) -> (i32, i32) {
    %c0_i32 = arith.constant 0 : i32
    %c0_i32_0 = arith.constant 0 : i32
    %c0_i32_1 = arith.constant 0 : i32
    return %c0_i32, %c0_i32_0 : i32, i32
  }
  func.func @transform_14(%arg0: i32) -> (i32, i32) {
    %c0_i32 = arith.constant 0 : i32
    %c0_i32_0 = arith.constant 0 : i32
    %c0_i32_1 = arith.constant 0 : i32
    return %c0_i32, %c0_i32_0 : i32, i32
  }
  func.func @transform_15(%arg0: i32) -> (i32, i32) {
    %c0_i32 = arith.constant 0 : i32
    %c0_i32_0 = arith.constant 0 : i32
    %c0_i32_1 = arith.constant 0 : i32
    return %c0_i32, %c0_i32_0 : i32, i32
  }
  func.func @transform_16(%arg0: i32) -> (i32, i32) {
    %c0_i32 = arith.constant 0 : i32
    %c0_i32_0 = arith.constant 0 : i32
    %c0_i32_1 = arith.constant 0 : i32
    return %c0_i32, %c0_i32_0 : i32, i32
  }
  func.func @transform_17(%arg0: i32) -> (i32, i32) {
    %c0_i32 = arith.constant 0 : i32
    %c0_i32_0 = arith.constant 0 : i32
    %c0_i32_1 = arith.constant 0 : i32
    return %c0_i32, %c0_i32_0 : i32, i32
  }
  func.func @transform_18(%arg0: i32) -> (i32, i32) {
    %c0_i32 = arith.constant 0 : i32
    %c0_i32_0 = arith.constant 0 : i32
    %c0_i32_1 = arith.constant 0 : i32
    return %c0_i32, %c0_i32_0 : i32, i32
  }
  func.func @transform_19(%arg0: i32) -> (i32, i32, i32) {
    %c0_i32 = arith.constant 0 : i32
    %c0_i32_0 = arith.constant 0 : i32
    %c0_i32_1 = arith.constant 0 : i32
    return %arg0, %c0_i32, %c0_i32_0 : i32, i32, i32
  }
}

</mosaic_0001>

<llo_original>
// kernel: lstm_autoencoder_forward.1
$region0: #{lstm_autoencoder_forward.1}
  #allocation0 [shape = 'u32[]', space=smem, size = 0x4, offset = 0x4, fixed_abs, tag = 'smem constant byte address 0x4 - core index']
  #allocation1 [shape = 'u32[144,128]{1,0:T(1,128)}', space=vmem, size = 0x12000, scoped, tag = 'internal scratch']
  #allocation2 [shape = 'f32[64,128]{1,0:T(8,128)}', space=vmem, size = 0x8000, scoped, tag = 'scratch operand']
  #allocation3 [shape = 'f32[64,128]{1,0:T(8,128)}', space=vmem, size = 0x8000, scoped, tag = 'scratch operand']
  %s0 = inlined_call_operand.vmem [shape: f32[1,64,16], index: 0, kind: input, shape index: {}]
  %s1 = inlined_call_operand.vmem [shape: f32[16,128], index: 1, kind: input, shape index: {}]
  %s2 = inlined_call_operand.hbm [shape: f32[1,128], index: 2, kind: input, shape index: {}]
  %s3 = inlined_call_operand.vmem [shape: f32[128,64], index: 3, kind: input, shape index: {}]
  %s4 = inlined_call_operand.hbm [shape: f32[1,64], index: 4, kind: input, shape index: {}]
  %s5 = inlined_call_operand.vmem [shape: f32[64,32], index: 5, kind: input, shape index: {}]
  %s6 = inlined_call_operand.vmem [shape: f32[1,32], index: 6, kind: input, shape index: {}]
  %s7 = inlined_call_operand.hbm [shape: f32[32,128], index: 7, kind: input, shape index: {}]
  %s8 = inlined_call_operand.vmem [shape: f32[128,128], index: 8, kind: input, shape index: {}]
  %s9 = inlined_call_operand.hbm [shape: f32[1,128], index: 9, kind: input, shape index: {}]
  %s10 = inlined_call_operand.vmem [shape: f32[128,128], index: 10, kind: input, shape index: {}]
  %s11 = inlined_call_operand.vmem [shape: f32[128,128], index: 11, kind: input, shape index: {}]
  %s12 = inlined_call_operand.hbm [shape: f32[1,128], index: 12, kind: input, shape index: {}]
  %s13 = inlined_call_operand.vmem [shape: f32[128,64], index: 13, kind: input, shape index: {}]
  %s14 = inlined_call_operand.hbm [shape: f32[1,64], index: 14, kind: input, shape index: {}]
  %s15 = inlined_call_operand.vmem [shape: f32[64,128], index: 15, kind: input, shape index: {}]
  %s16 = inlined_call_operand.hbm [shape: f32[1,128], index: 16, kind: input, shape index: {}]
  %s17 = inlined_call_operand.vmem [shape: f32[128,16], index: 17, kind: input, shape index: {}]
  %s18 = inlined_call_operand.hbm [shape: f32[1,16], index: 18, kind: input, shape index: {}]
  %s19 = inlined_call_operand.hbm [shape: f32[1,64,16], index: 19, kind: output, shape index: {}]
  %s20 = sld [smem:[#allocation0]]
  $region118: #{lstm_autoencoder_forward.1} parent=0
    _
  %s22 = ssub.s32 1, %s20
  %s23 = scalar_select 0, %s22, %s20
  $region1: #{lstm_autoencoder_forward.1} parent=0
    #allocation4 [shape = 'u8[512]{0}', space=vmem, size = 0x400, scoped, tag = 'input window, operand 2, single buffered']
    #allocation5 [shape = 's32[1]{0}', space=sflag, size = 0x4, scoped, tag = 'scoped memory for lstm_autoencoder_forward.1']
    #allocation6 [shape = 's32[1]{0}', space=sflag, size = 0x4, scoped, tag = 'scoped memory for lstm_autoencoder_forward.1']
    #allocation7 [shape = 'u8[512]{0}', space=vmem, size = 0x400, scoped, tag = 'input window, operand 4, single buffered']
    #allocation8 [shape = 's32[1]{0}', space=sflag, size = 0x4, scoped, tag = 'scoped memory for lstm_autoencoder_forward.1']
    #allocation9 [shape = 'u8[16384]{0}', space=vmem, size = 0x4000, scoped, tag = 'input window, operand 7, single buffered']
    #allocation10 [shape = 'u8[512]{0}', space=vmem, size = 0x400, scoped, tag = 'input window, operand 9, single buffered']
    #allocation11 [shape = 's32[1]{0}', space=sflag, size = 0x4, scoped, tag = 'scoped memory for lstm_autoencoder_forward.1']
    #allocation12 [shape = 'u8[512]{0}', space=vmem, size = 0x400, scoped, tag = 'input window, operand 12, single buffered']
    #allocation13 [shape = 'u8[512]{0}', space=vmem, size = 0x400, scoped, tag = 'input window, operand 14, single buffered']
    #allocation14 [shape = 's32[1]{0}', space=sflag, size = 0x4, scoped, tag = 'scoped memory for lstm_autoencoder_forward.1']
    #allocation15 [shape = 'u8[512]{0}', space=vmem, size = 0x400, scoped, tag = 'input window, operand 16, single buffered']
    #allocation16 [shape = 'u8[512]{0}', space=vmem, size = 0x400, scoped, tag = 'input window, operand 18, single buffered']
    #allocation17 [shape = 's32[1]{0}', space=sflag, size = 0x4, scoped, tag = 'scoped memory for lstm_autoencoder_forward.1']
    #allocation18 [shape = 'u8[32768]{0}', space=vmem, size = 0x8000, scoped, tag = 'output window, operand 0, single buffered']
    %24 = vsyncpa [#allocation5], 0
    %25 = vsyncpa [#allocation8], 0
    %26 = vsyncpa [#allocation11], 0
    %27 = vsyncpa [#allocation14], 0
    %28 = vsyncpa [#allocation17], 0
    %29 = vsyncpa [#allocation6], 0
    // Predicated region
    $region2: #{lstm_autoencoder_forward.1} parent=1 // pred_check
      _
    $region3: #{lstm_autoencoder_forward.1} parent=1 // pred_check_branch
      %31 = sbr.rel (0) target = $region5
    $region4: #{lstm_autoencoder_forward.1} parent=1 // pred_region
      _
    $region5: #{lstm_autoencoder_forward.1} parent=1 // pred_fallthru
      _
    // Predicated region
    $region6: #{lstm_autoencoder_forward.1} parent=1 // pred_check
      _
    $region7: #{lstm_autoencoder_forward.1} parent=1 // pred_check_branch
      %33 = sbr.rel (0) target = $region9
    $region8: #{lstm_autoencoder_forward.1} parent=1 // pred_region
      _
    $region9: #{lstm_autoencoder_forward.1} parent=1 // pred_fallthru
      _
    // Predicated region
    $region10: #{lstm_autoencoder_forward.1} parent=1 // pred_check
      _
    $region11: #{lstm_autoencoder_forward.1} parent=1 // pred_check_branch
      %35 = sbr.rel (0) target = $region13
    $region12: #{lstm_autoencoder_forward.1} parent=1 // pred_region
      %s37 = ssub.s32 16, 16
      %38 = vsyncadd [#allocation5], %s37
      %s40 = sshll.u32 [#allocation4], 4
      %s41 = int_to_ptr.vmem [resolvable:$true] %s40
      %43 = dma.hbm_to_vmem [thread:$0]  %s2, 16, %s41, [#allocation5]
    $region13: #{lstm_autoencoder_forward.1} parent=1 // pred_fallthru
      _
    // Predicated region
    $region14: #{lstm_autoencoder_forward.1} parent=1 // pred_check
      _
    $region15: #{lstm_autoencoder_forward.1} parent=1 // pred_check_branch
      %45 = sbr.rel (0) target = $region17
    $region16: #{lstm_autoencoder_forward.1} parent=1 // pred_region
      _
    $region17: #{lstm_autoencoder_forward.1} parent=1 // pred_fallthru
      _
    // Predicated region
    $region18: #{lstm_autoencoder_forward.1} parent=1 // pred_check
      _
    $region19: #{lstm_autoencoder_forward.1} parent=1 // pred_check_branch
      %47 = sbr.rel (0) target = $region21
    $region20: #{lstm_autoencoder_forward.1} parent=1 // pred_region
      %s49 = ssub.s32 16, 16
      %50 = vsyncadd [#allocation8], %s49
      %s52 = sshll.u32 [#allocation7], 4
      %s53 = int_to_ptr.vmem [resolvable:$true] %s52
      %55 = dma.hbm_to_vmem [thread:$0]  %s4, 16, %s53, [#allocation8]
    $region21: #{lstm_autoencoder_forward.1} parent=1 // pred_fallthru
      _
    // Predicated region
    $region22: #{lstm_autoencoder_forward.1} parent=1 // pred_check
      _
    $region23: #{lstm_autoencoder_forward.1} parent=1 // pred_check_branch
      %57 = sbr.rel (0) target = $region25
    $region24: #{lstm_autoencoder_forward.1} parent=1 // pred_region
      _
    $region25: #{lstm_autoencoder_forward.1} parent=1 // pred_fallthru
      _
    // Predicated region
    $region26: #{lstm_autoencoder_forward.1} parent=1 // pred_check
      _
    $region27: #{lstm_autoencoder_forward.1} parent=1 // pred_check_branch
      %59 = sbr.rel (0) target = $region29
    $region28: #{lstm_autoencoder_forward.1} parent=1 // pred_region
      _
    $region29: #{lstm_autoencoder_forward.1} parent=1 // pred_fallthru
      _
    // Predicated region
    $region30: #{lstm_autoencoder_forward.1} parent=1 // pred_check
      _
    $region31: #{lstm_autoencoder_forward.1} parent=1 // pred_check_branch
      %61 = sbr.rel (0) target = $region33
    $region32: #{lstm_autoencoder_forward.1} parent=1 // pred_region
      %s63 = ssub.s32 512, 512
      %64 = vsyncadd [#allocation8], %s63
      %s65 = sshll.u32 [#allocation9], 4
      %s66 = int_to_ptr.vmem [resolvable:$true] %s65
      %71 = dma.hbm_to_vmem [thread:$0]  %s7, 512, %s66, [#allocation8], 128, 128, 8
    $region33: #{lstm_autoencoder_forward.1} parent=1 // pred_fallthru
      _
    // Predicated region
    $region34: #{lstm_autoencoder_forward.1} parent=1 // pred_check
      _
    $region35: #{lstm_autoencoder_forward.1} parent=1 // pred_check_branch
      %73 = sbr.rel (0) target = $region37
    $region36: #{lstm_autoencoder_forward.1} parent=1 // pred_region
      _
    $region37: #{lstm_autoencoder_forward.1} parent=1 // pred_fallthru
      _
    // Predicated region
    $region38: #{lstm_autoencoder_forward.1} parent=1 // pred_check
      _
    $region39: #{lstm_autoencoder_forward.1} parent=1 // pred_check_branch
      %75 = sbr.rel (0) target = $region41
    $region40: #{lstm_autoencoder_forward.1} parent=1 // pred_region
      %s77 = ssub.s32 16, 16
      %78 = vsyncadd [#allocation11], %s77
      %s80 = sshll.u32 [#allocation10], 4
      %s81 = int_to_ptr.vmem [resolvable:$true] %s80
      %83 = dma.hbm_to_vmem [thread:$0]  %s9, 16, %s81, [#allocation11]
    $region41: #{lstm_autoencoder_forward.1} parent=1 // pred_fallthru
      _
    // Predicated region
    $region42: #{lstm_autoencoder_forward.1} parent=1 // pred_check
      _
    $region43: #{lstm_autoencoder_forward.1} parent=1 // pred_check_branch
      %85 = sbr.rel (0) target = $region45
    $region44: #{lstm_autoencoder_forward.1} parent=1 // pred_region
      _
    $region45: #{lstm_autoencoder_forward.1} parent=1 // pred_fallthru
      _
    // Predicated region
    $region46: #{lstm_autoencoder_forward.1} parent=1 // pred_check
      _
    $region47: #{lstm_autoencoder_forward.1} parent=1 // pred_check_branch
      %87 = sbr.rel (0) target = $region49
    $region48: #{lstm_autoencoder_forward.1} parent=1 // pred_region
      _
    $region49: #{lstm_autoencoder_forward.1} parent=1 // pred_fallthru
      _
    // Predicated region
    $region50: #{lstm_autoencoder_forward.1} parent=1 // pred_check
      _
    $region51: #{lstm_autoencoder_forward.1} parent=1 // pred_check_branch
      %89 = sbr.rel (0) target = $region53
    $region52: #{lstm_autoencoder_forward.1} parent=1 // pred_region
      %s91 = ssub.s32 16, 16
      %92 = vsyncadd [#allocation11], %s91
      %s94 = sshll.u32 [#allocation12], 4
      %s95 = int_to_ptr.vmem [resolvable:$true] %s94
      %97 = dma.hbm_to_vmem [thread:$0]  %s12, 16, %s95, [#allocation11]
    $region53: #{lstm_autoencoder_forward.1} parent=1 // pred_fallthru
      _
    // Predicated region
    $region54: #{lstm_autoencoder_forward.1} parent=1 // pred_check
      _
    $region55: #{lstm_autoencoder_forward.1} parent=1 // pred_check_branch
      %99 = sbr.rel (0) target = $region57
    $region56: #{lstm_autoencoder_forward.1} parent=1 // pred_region
      _
    $region57: #{lstm_autoencoder_forward.1} parent=1 // pred_fallthru
      _
    // Predicated region
    $region58: #{lstm_autoencoder_forward.1} parent=1 // pred_check
      _
    $region59: #{lstm_autoencoder_forward.1} parent=1 // pred_check_branch
      %101 = sbr.rel (0) target = $region61
    $region60: #{lstm_autoencoder_forward.1} parent=1 // pred_region
      %s103 = ssub.s32 16, 16
      %104 = vsyncadd [#allocation14], %s103
      %s106 = sshll.u32 [#allocation13], 4
      %s107 = int_to_ptr.vmem [resolvable:$true] %s106
      %109 = dma.hbm_to_vmem [thread:$0]  %s14, 16, %s107, [#allocation14]
    $region61: #{lstm_autoencoder_forward.1} parent=1 // pred_fallthru
      _
    // Predicated region
    $region62: #{lstm_autoencoder_forward.1} parent=1 // pred_check
      _
    $region63: #{lstm_autoencoder_forward.1} parent=1 // pred_check_branch
      %111 = sbr.rel (0) target = $region65
    $region64: #{lstm_autoencoder_forward.1} parent=1 // pred_region
      _
    $region65: #{lstm_autoencoder_forward.1} parent=1 // pred_fallthru
      _
    // Predicated region
    $region66: #{lstm_autoencoder_forward.1} parent=1 // pred_check
      _
    $region67: #{lstm_autoencoder_forward.1} parent=1 // pred_check_branch
      %113 = sbr.rel (0) target = $region69
    $region68: #{lstm_autoencoder_forward.1} parent=1 // pred_region
      %s115 = ssub.s32 16, 16
      %116 = vsyncadd [#allocation14], %s115
      %s118 = sshll.u32 [#allocation15], 4
      %s119 = int_to_ptr.vmem [resolvable:$true] %s118
      %121 = dma.hbm_to_vmem [thread:$0]  %s16, 16, %s119, [#allocation14]
    $region69: #{lstm_autoencoder_forward.1} parent=1 // pred_fallthru
      _
    // Predicated region
    $region70: #{lstm_autoencoder_forward.1} parent=1 // pred_check
      _
    $region71: #{lstm_autoencoder_forward.1} parent=1 // pred_check_branch
      %123 = sbr.rel (0) target = $region73
    $region72: #{lstm_autoencoder_forward.1} parent=1 // pred_region
      _
    $region73: #{lstm_autoencoder_forward.1} parent=1 // pred_fallthru
      _
    // Predicated region
    $region74: #{lstm_autoencoder_forward.1} parent=1 // pred_check
      _
    $region75: #{lstm_autoencoder_forward.1} parent=1 // pred_check_branch
      %125 = sbr.rel (0) target = $region77
    $region76: #{lstm_autoencoder_forward.1} parent=1 // pred_region
      %s127 = ssub.s32 16, 16
      %128 = vsyncadd [#allocation17], %s127
      %s130 = sshll.u32 [#allocation16], 4
      %s131 = int_to_ptr.vmem [resolvable:$true] %s130
      %133 = dma.hbm_to_vmem [thread:$0]  %s18, 16, %s131, [#allocation17]
    $region77: #{lstm_autoencoder_forward.1} parent=1 // pred_fallthru
      _
    // Predicated region
    $region78: #{lstm_autoencoder_forward.1} parent=1 // pred_check
      _
    $region79: #{lstm_autoencoder_forward.1} parent=1 // pred_check_branch
      %135 = sbr.rel (0) target = $region81
    $region80: #{lstm_autoencoder_forward.1} parent=1 // pred_region
      %136 = dma.done [#allocation5], 16
    $region81: #{lstm_autoencoder_forward.1} parent=1 // pred_fallthru
      _
    // Predicated region
    $region82: #{lstm_autoencoder_forward.1} parent=1 // pred_check
      _
    $region83: #{lstm_autoencoder_forward.1} parent=1 // pred_check_branch
      %138 = sbr.rel (0) target = $region85
    $region84: #{lstm_autoencoder_forward.1} parent=1 // pred_region
      %139 = dma.done [#allocation8], 16
    $region85: #{lstm_autoencoder_forward.1} parent=1 // pred_fallthru
      _
    // Predicated region
    $region86: #{lstm_autoencoder_forward.1} parent=1 // pred_check
      _
    $region87: #{lstm_autoencoder_forward.1} parent=1 // pred_check_branch
      %141 = sbr.rel (0) target = $region89
    $region88: #{lstm_autoencoder_forward.1} parent=1 // pred_region
      %142 = dma.done [#allocation8], 512
    $region89: #{lstm_autoencoder_forward.1} parent=1 // pred_fallthru
      _
    // Predicated region
    $region90: #{lstm_autoencoder_forward.1} parent=1 // pred_check
      _
    $region91: #{lstm_autoencoder_forward.1} parent=1 // pred_check_branch
      %144 = sbr.rel (0) target = $region93
    $region92: #{lstm_autoencoder_forward.1} parent=1 // pred_region
      %145 = dma.done [#allocation11], 16
    $region93: #{lstm_autoencoder_forward.1} parent=1 // pred_fallthru
      _
    // Predicated region
    $region94: #{lstm_autoencoder_forward.1} parent=1 // pred_check
      _
    $region95: #{lstm_autoencoder_forward.1} parent=1 // pred_check_branch
      %147 = sbr.rel (0) target = $region97
    $region96: #{lstm_autoencoder_forward.1} parent=1 // pred_region
      %148 = dma.done [#allocation11], 16
    $region97: #{lstm_autoencoder_forward.1} parent=1 // pred_fallthru
      _
    // Predicated region
    $region98: #{lstm_autoencoder_forward.1} parent=1 // pred_check
      _
    $region99: #{lstm_autoencoder_forward.1} parent=1 // pred_check_branch
      %150 = sbr.rel (0) target = $region101
    $region100: #{lstm_autoencoder_forward.1} parent=1 // pred_region
      %151 = dma.done [#allocation14], 16
    $region101: #{lstm_autoencoder_forward.1} parent=1 // pred_fallthru
      _
    // Predicated region
    $region102: #{lstm_autoencoder_forward.1} parent=1 // pred_check
      _
    $region103: #{lstm_autoencoder_forward.1} parent=1 // pred_check_branch
      %153 = sbr.rel (0) target = $region105
    $region104: #{lstm_autoencoder_forward.1} parent=1 // pred_region
      %154 = dma.done [#allocation14], 16
    $region105: #{lstm_autoencoder_forward.1} parent=1 // pred_fallthru
      _
    // Predicated region
    $region106: #{lstm_autoencoder_forward.1} parent=1 // pred_check
      _
    $region107: #{lstm_autoencoder_forward.1} parent=1 // pred_check_branch
      %156 = sbr.rel (0) target = $region109
    $region108: #{lstm_autoencoder_forward.1} parent=1 // pred_region
      %157 = dma.done [#allocation17], 16
    $region109: #{lstm_autoencoder_forward.1} parent=1 // pred_fallthru
      _
    %v158 = vld [vmem:[%s0] sm:$0xff]
    %v159 = vld [vmem:[%s0 + $0x8] sm:$0xff]
    %v160 = vld [vmem:[%s0 + $0x10] sm:$0xff]
    %v161 = vld [vmem:[%s0 + $0x18] sm:$0xff]
    %v162 = vld [vmem:[%s0 + $0x20] sm:$0xff]
    %v163 = vld [vmem:[%s0 + $0x28] sm:$0xff]
    %v164 = vld [vmem:[%s0 + $0x30] sm:$0xff]
    %v165 = vld [vmem:[%s0 + $0x38] sm:$0xff]
    %v166 = vld [vmem:[%s1] sm:$0xff]
    %v167 = vld [vmem:[%s1 + $0x8] sm:$0xff]
    %v168 = vld [vmem:[#allocation4] sm:$0x1]
    %v170 = vlaneseq
    %v171 = vshrl.u32 %v170, 7
    %v172 = vsub.s32 0, %v171
    %v173 = vrot.slane %v168, %v172
    %vm175 = vcmask 130048
    %v177 = vsel %vm175, %v158, 0
    %v180 = vsel %vm175, %v159, 0
    %v183 = vsel %vm175, %v160, 0
    %v186 = vsel %vm175, %v161, 0
    %v189 = vsel %vm175, %v162, 0
    %v192 = vsel %vm175, %v163, 0
    %v195 = vsel %vm175, %v164, 0
    %v198 = vsel %vm175, %v165, 0
    %200 = vmatprep.subr.mxu0 0.0
    %201 = vmatpush1.msra.mxu0 %v166
    %202 = vmatprep.subr.mxu0 0.0
    %203 = vmatpush1.msra.mxu0 %v167
    %204 = vmatprep.subr.mxu0 0.0
    %205 = vmatpush1.msra.mxu0 0.0
    %206 = vmatprep.subr.mxu0 0.0
    %207 = vmatpush1.msra.mxu0 0.0
    %208 = vmatprep.subr.mxu0 0.0
    %209 = vmatpush1.msra.mxu0 0.0
    %210 = vmatprep.subr.mxu0 0.0
    %211 = vmatpush1.msra.mxu0 0.0
    %212 = vmatprep.subr.mxu0 0.0
    %213 = vmatpush1.msra.mxu0 0.0
    %214 = vmatprep.subr.mxu0 0.0
    %215 = vmatpush1.msra.mxu0 0.0
    %216 = vmatprep.subr.mxu0 0.0
    %217 = vmatpush1.msra.mxu0 0.0
    %218 = vmatprep.subr.mxu0 0.0
    %219 = vmatpush1.msra.mxu0 0.0
    %220 = vmatprep.subr.mxu0 0.0
    %221 = vmatpush1.msra.mxu0 0.0
    %222 = vmatprep.subr.mxu0 0.0
    %223 = vmatpush1.msra.mxu0 0.0
    %224 = vmatprep.subr.mxu0 0.0
    %225 = vmatpush1.msra.mxu0 0.0
    %226 = vmatprep.subr.mxu0 0.0
    %227 = vmatpush1.msra.mxu0 0.0
    %228 = vmatprep.subr.mxu0 0.0
    %229 = vmatpush1.msra.mxu0 0.0
    %230 = vmatprep.subr.mxu0 0.0
    %231 = vmatpush1.msra.mxu0 0.0
    %232 = vmatprep.subr.mxu0 0.0
    %233 = vmatpush1.msra.mxu0 0.0
    %234 = vmatprep.subr.mxu0 0.0
    %235 = vmatpush1.msra.mxu0 0.0
    %236 = vmatprep.subr.mxu0 0.0
    %237 = vmatpush1.msra.mxu0 0.0
    %238 = vmatprep.subr.mxu0 0.0
    %239 = vmatpush1.msra.mxu0 0.0
    %240 = vmatprep.subr.mxu0 0.0
    %241 = vmatpush1.msra.mxu0 0.0
    %242 = vmatprep.subr.mxu0 0.0
    %243 = vmatpush1.msra.mxu0 0.0
    %244 = vmatprep.subr.mxu0 0.0
    %245 = vmatpush1.msra.mxu0 0.0
    %246 = vmatprep.subr.mxu0 0.0
    %247 = vmatpush1.msra.mxu0 0.0
    %248 = vmatprep.subr.mxu0 0.0
    %249 = vmatpush1.msra.mxu0 0.0
    %250 = vmatprep.subr.mxu0 0.0
    %251 = vmatpush1.msra.mxu0 0.0
    %252 = vmatprep.subr.mxu0 0.0
    %253 = vmatpush1.msra.mxu0 0.0
    %254 = vmatprep.subr.mxu0 0.0
    %255 = vmatpush1.msra.mxu0 0.0
    %256 = vmatprep.subr.mxu0 0.0
    %257 = vmatpush1.msra.mxu0 0.0
    %258 = vmatprep.subr.mxu0 0.0
    %259 = vmatpush1.msra.mxu0 0.0
    %260 = vmatprep.subr.mxu0 0.0
    %261 = vmatpush1.msra.mxu0 0.0
    %262 = vmatprep.subr.mxu0 0.0
    %263 = vmatpush1.msra.mxu0 0.0
    %264 = vmatprep.mubr.f32.mxu0 0.0
    %265 = vmatmul.mubr.f32.gmra.mrb[0].mxu0 %v177
    %v266 = vpop.f32.mrb[0].mxu0
    %v267 = vadd.f32 %v173, %v266
    %v268 = vpop.f32.mrb[0].mxu0
    %269 = vmatprep.mubr.f32.mxu0 0.0
    %270 = vmatmul.mubr.f32.gmra.mrb[0].mxu0 %v180
    %v271 = vpop.f32.mrb[0].mxu0
    %v272 = vadd.f32 %v173, %v271
    %v273 = vpop.f32.mrb[0].mxu0
    %274 = vmatprep.mubr.f32.mxu0 0.0
    %275 = vmatmul.mubr.f32.gmra.mrb[0].mxu0 %v183
    %v276 = vpop.f32.mrb[0].mxu0
    %v277 = vadd.f32 %v173, %v276
    %v278 = vpop.f32.mrb[0].mxu0
    %279 = vmatprep.mubr.f32.mxu0 0.0
    %280 = vmatmul.mubr.f32.gmra.mrb[0].mxu0 %v186
    %v281 = vpop.f32.mrb[0].mxu0
    %v282 = vadd.f32 %v173, %v281
    %v283 = vpop.f32.mrb[0].mxu0
    %284 = vmatprep.mubr.f32.mxu0 0.0
    %285 = vmatmul.mubr.f32.gmra.mrb[0].mxu0 %v189
    %v286 = vpop.f32.mrb[0].mxu0
    %v287 = vadd.f32 %v173, %v286
    %v288 = vpop.f32.mrb[0].mxu0
    %289 = vmatprep.mubr.f32.mxu0 0.0
    %290 = vmatmul.mubr.f32.gmra.mrb[0].mxu0 %v192
    %v291 = vpop.f32.mrb[0].mxu0
    %v292 = vadd.f32 %v173, %v291
    %v293 = vpop.f32.mrb[0].mxu0
    %294 = vmatprep.mubr.f32.mxu0 0.0
    %295 = vmatmul.mubr.f32.gmra.mrb[0].mxu0 %v195
    %v296 = vpop.f32.mrb[0].mxu0
    %v297 = vadd.f32 %v173, %v296
    %v298 = vpop.f32.mrb[0].mxu0
    %299 = vmatprep.mubr.f32.mxu0 0.0
    %300 = vmatmul.mubr.f32.gmra.mrb[0].mxu0 %v198
    %v301 = vpop.f32.mrb[0].mxu0
    %v302 = vadd.f32 %v173, %v301
    %v303 = vpop.f32.mrb[0].mxu0
    %304 = vdwg.mxu0
    %v305 = vmax.f32 %v267, 0.0
    %v306 = vmax.f32 %v272, 0.0
    %v307 = vmax.f32 %v277, 0.0
    %v308 = vmax.f32 %v282, 0.0
    %v309 = vmax.f32 %v287, 0.0
    %v310 = vmax.f32 %v292, 0.0
    %v311 = vmax.f32 %v297, 0.0
    %v312 = vmax.f32 %v302, 0.0
    %v313 = vld [vmem:[%s3] sm:$0xff]
    %v314 = vld [vmem:[%s3 + $0x8] sm:$0xff]
    %v315 = vld [vmem:[%s3 + $0x10] sm:$0xff]
    %v316 = vld [vmem:[%s3 + $0x18] sm:$0xff]
    %v317 = vld [vmem:[%s3 + $0x20] sm:$0xff]
    %v318 = vld [vmem:[%s3 + $0x28] sm:$0xff]
    %v319 = vld [vmem:[%s3 + $0x30] sm:$0xff]
    %v320 = vld [vmem:[%s3 + $0x38] sm:$0xff]
    %v321 = vld [vmem:[%s3 + $0x40] sm:$0xff]
    %v322 = vld [vmem:[%s3 + $0x48] sm:$0xff]
    %v323 = vld [vmem:[%s3 + $0x50] sm:$0xff]
    %v324 = vld [vmem:[%s3 + $0x58] sm:$0xff]
    %v325 = vld [vmem:[%s3 + $0x60] sm:$0xff]
    %v326 = vld [vmem:[%s3 + $0x68] sm:$0xff]
    %v327 = vld [vmem:[%s3 + $0x70] sm:$0xff]
    %v328 = vld [vmem:[%s3 + $0x78] sm:$0xff]
    %v329 = vld [vmem:[#allocation7] sm:$0x1]
    %v331 = vlaneseq
    %v332 = vshrl.u32 %v331, 7
    %v333 = vsub.s32 0, %v332
    %v334 = vrot.slane %v329, %v333
    %336 = vmatprep.subr.mxu0 0.0
    %337 = vmatpush1.msra.mxu0 %v313
    %338 = vmatprep.subr.mxu0 0.0
    %339 = vmatpush1.msra.mxu0 %v314
    %340 = vmatprep.subr.mxu0 0.0
    %341 = vmatpush1.msra.mxu0 %v315
    %342 = vmatprep.subr.mxu0 0.0
    %343 = vmatpush1.msra.mxu0 %v316
    %344 = vmatprep.subr.mxu0 0.0
    %345 = vmatpush1.msra.mxu0 %v317
    %346 = vmatprep.subr.mxu0 0.0
    %347 = vmatpush1.msra.mxu0 %v318
    %348 = vmatprep.subr.mxu0 0.0
    %349 = vmatpush1.msra.mxu0 %v319
    %350 = vmatprep.subr.mxu0 0.0
    %351 = vmatpush1.msra.mxu0 %v320
    %352 = vmatprep.subr.mxu0 0.0
    %353 = vmatpush1.msra.mxu0 %v321
    %354 = vmatprep.subr.mxu0 0.0
    %355 = vmatpush1.msra.mxu0 %v322
    %356 = vmatprep.subr.mxu0 0.0
    %357 = vmatpush1.msra.mxu0 %v323
    %358 = vmatprep.subr.mxu0 0.0
    %359 = vmatpush1.msra.mxu0 %v324
    %360 = vmatprep.subr.mxu0 0.0
    %361 = vmatpush1.msra.mxu0 %v325
    %362 = vmatprep.subr.mxu0 0.0
    %363 = vmatpush1.msra.mxu0 %v326
    %364 = vmatprep.subr.mxu0 0.0
    %365 = vmatpush1.msra.mxu0 %v327
    %366 = vmatprep.subr.mxu0 0.0
    %367 = vmatpush1.msra.mxu0 %v328
    %368 = vmatprep.subr.mxu0 0.0
    %369 = vmatpush1.msra.mxu0 0.0
    %370 = vmatprep.subr.mxu0 0.0
    %371 = vmatpush1.msra.mxu0 0.0
    %372 = vmatprep.subr.mxu0 0.0
    %373 = vmatpush1.msra.mxu0 0.0
    %374 = vmatprep.subr.mxu0 0.0
    %375 = vmatpush1.msra.mxu0 0.0
    %376 = vmatprep.subr.mxu0 0.0
    %377 = vmatpush1.msra.mxu0 0.0
    %378 = vmatprep.subr.mxu0 0.0
    %379 = vmatpush1.msra.mxu0 0.0
    %380 = vmatprep.subr.mxu0 0.0
    %381 = vmatpush1.msra.mxu0 0.0
    %382 = vmatprep.subr.mxu0 0.0
    %383 = vmatpush1.msra.mxu0 0.0
    %384 = vmatprep.subr.mxu0 0.0
    %385 = vmatpush1.msra.mxu0 0.0
    %386 = vmatprep.subr.mxu0 0.0
    %387 = vmatpush1.msra.mxu0 0.0
    %388 = vmatprep.subr.mxu0 0.0
    %389 = vmatpush1.msra.mxu0 0.0
    %390 = vmatprep.subr.mxu0 0.0
    %391 = vmatpush1.msra.mxu0 0.0
    %392 = vmatprep.subr.mxu0 0.0
    %393 = vmatpush1.msra.mxu0 0.0
    %394 = vmatprep.subr.mxu0 0.0
    %395 = vmatpush1.msra.mxu0 0.0
    %396 = vmatprep.subr.mxu0 0.0
    %397 = vmatpush1.msra.mxu0 0.0
    %398 = vmatprep.subr.mxu0 0.0
    %399 = vmatpush1.msra.mxu0 0.0
    %400 = vmatprep.mubr.f32.mxu0 0.0
    %401 = vmatmul.mubr.f32.gmra.mrb[0].mxu0 %v305
    %v402 = vpop.f32.mrb[0].mxu0
    %v403 = vadd.f32 %v334, %v402
    %v404 = vpop.f32.mrb[0].mxu0
    %405 = vmatprep.mubr.f32.mxu0 0.0
    %406 = vmatmul.mubr.f32.gmra.mrb[0].mxu0 %v306
    %v407 = vpop.f32.mrb[0].mxu0
    %v408 = vadd.f32 %v334, %v407
    %v409 = vpop.f32.mrb[0].mxu0
    %410 = vmatprep.mubr.f32.mxu0 0.0
    %411 = vmatmul.mubr.f32.gmra.mrb[0].mxu0 %v307
    %v412 = vpop.f32.mrb[0].mxu0
    %v413 = vadd.f32 %v334, %v412
    %v414 = vpop.f32.mrb[0].mxu0
    %415 = vmatprep.mubr.f32.mxu0 0.0
    %416 = vmatmul.mubr.f32.gmra.mrb[0].mxu0 %v308
    %v417 = vpop.f32.mrb[0].mxu0
    %v418 = vadd.f32 %v334, %v417
    %v419 = vpop.f32.mrb[0].mxu0
    %420 = vmatprep.mubr.f32.mxu0 0.0
    %421 = vmatmul.mubr.f32.gmra.mrb[0].mxu0 %v309
    %v422 = vpop.f32.mrb[0].mxu0
    %v423 = vadd.f32 %v334, %v422
    %v424 = vpop.f32.mrb[0].mxu0
    %425 = vmatprep.mubr.f32.mxu0 0.0
    %426 = vmatmul.mubr.f32.gmra.mrb[0].mxu0 %v310
    %v427 = vpop.f32.mrb[0].mxu0
    %v428 = vadd.f32 %v334, %v427
    %v429 = vpop.f32.mrb[0].mxu0
    %430 = vmatprep.mubr.f32.mxu0 0.0
    %431 = vmatmul.mubr.f32.gmra.mrb[0].mxu0 %v311
    %v432 = vpop.f32.mrb[0].mxu0
    %v433 = vadd.f32 %v334, %v432
    %v434 = vpop.f32.mrb[0].mxu0
    %435 = vmatprep.mubr.f32.mxu0 0.0
    %436 = vmatmul.mubr.f32.gmra.mrb[0].mxu0 %v312
    %v437 = vpop.f32.mrb[0].mxu0
    %v438 = vadd.f32 %v334, %v437
    %v439 = vpop.f32.mrb[0].mxu0
    %440 = vdwg.mxu0
    %v441 = vmax.f32 %v403, 0.0
    %v442 = vmax.f32 %v408, 0.0
    %v443 = vmax.f32 %v413, 0.0
    %v444 = vmax.f32 %v418, 0.0
    %v445 = vmax.f32 %v423, 0.0
    %v446 = vmax.f32 %v428, 0.0
    %v447 = vmax.f32 %v433, 0.0
    %v448 = vmax.f32 %v438, 0.0
    %v449 = vld [vmem:[%s5] sm:$0xff]
    %v450 = vld [vmem:[%s5 + $0x8] sm:$0xff]
    %v451 = vld [vmem:[%s5 + $0x10] sm:$0xff]
    %v452 = vld [vmem:[%s5 + $0x18] sm:$0xff]
    %v453 = vld [vmem:[%s5 + $0x20] sm:$0xff]
    %v454 = vld [vmem:[%s5 + $0x28] sm:$0xff]
    %v455 = vld [vmem:[%s5 + $0x30] sm:$0xff]
    %v456 = vld [vmem:[%s5 + $0x38] sm:$0xff]
    %v457 = vld [vmem:[%s6] sm:$0x1]
    %v459 = vlaneseq
    %v460 = vshrl.u32 %v459, 7
    %v461 = vsub.s32 0, %v460
    %v462 = vrot.slane %v457, %v461
    %vm464 = vcmask 523264
    %v466 = vsel %vm464, %v441, 0
    %v469 = vsel %vm464, %v442, 0
    %v472 = vsel %vm464, %v443, 0
    %v475 = vsel %vm464, %v444, 0
    %v478 = vsel %vm464, %v445, 0
    %v481 = vsel %vm464, %v446, 0
    %v484 = vsel %vm464, %v447, 0
    %v487 = vsel %vm464, %v448, 0
    %489 = vmatprep.subr.mxu0 0.0
    %490 = vmatpush1.msra.mxu0 %v449
    %491 = vmatprep.subr.mxu0 0.0
    %492 = vmatpush1.msra.mxu0 %v450
    %493 = vmatprep.subr.mxu0 0.0
    %494 = vmatpush1.msra.mxu0 %v451
    %495 = vmatprep.subr.mxu0 0.0
    %496 = vmatpush1.msra.mxu0 %v452
    %497 = vmatprep.subr.mxu0 0.0
    %498 = vmatpush1.msra.mxu0 %v453
    %499 = vmatprep.subr.mxu0 0.0
    %500 = vmatpush1.msra.mxu0 %v454
    %501 = vmatprep.subr.mxu0 0.0
    %502 = vmatpush1.msra.mxu0 %v455
    %503 = vmatprep.subr.mxu0 0.0
    %504 = vmatpush1.msra.mxu0 %v456
    %505 = vmatprep.subr.mxu0 0.0
    %506 = vmatpush1.msra.mxu0 0.0
    %507 = vmatprep.subr.mxu0 0.0
    %508 = vmatpush1.msra.mxu0 0.0
    %509 = vmatprep.subr.mxu0 0.0
    %510 = vmatpush1.msra.mxu0 0.0
    %511 = vmatprep.subr.mxu0 0.0
    %512 = vmatpush1.msra.mxu0 0.0
    %513 = vmatprep.subr.mxu0 0.0
    %514 = vmatpush1.msra.mxu0 0.0
    %515 = vmatprep.subr.mxu0 0.0
    %516 = vmatpush1.msra.mxu0 0.0
    %517 = vmatprep.subr.mxu0 0.0
    %518 = vmatpush1.msra.mxu0 0.0
    %519 = vmatprep.subr.mxu0 0.0
    %520 = vmatpush1.msra.mxu0 0.0
    %521 = vmatprep.subr.mxu0 0.0
    %522 = vmatpush1.msra.mxu0 0.0
    %523 = vmatprep.subr.mxu0 0.0
    %524 = vmatpush1.msra.mxu0 0.0
    %525 = vmatprep.subr.mxu0 0.0
    %526 = vmatpush1.msra.mxu0 0.0
    %527 = vmatprep.subr.mxu0 0.0
    %528 = vmatpush1.msra.mxu0 0.0
    %529 = vmatprep.subr.mxu0 0.0
    %530 = vmatpush1.msra.mxu0 0.0
    %531 = vmatprep.subr.mxu0 0.0
    %532 = vmatpush1.msra.mxu0 0.0
    %533 = vmatprep.subr.mxu0 0.0
    %534 = vmatpush1.msra.mxu0 0.0
    %535 = vmatprep.subr.mxu0 0.0
    %536 = vmatpush1.msra.mxu0 0.0
    %537 = vmatprep.subr.mxu0 0.0
    %538 = vmatpush1.msra.mxu0 0.0
    %539 = vmatprep.subr.mxu0 0.0
    %540 = vmatpush1.msra.mxu0 0.0
    %541 = vmatprep.subr.mxu0 0.0
    %542 = vmatpush1.msra.mxu0 0.0
    %543 = vmatprep.subr.mxu0 0.0
    %544 = vmatpush1.msra.mxu0 0.0
    %545 = vmatprep.subr.mxu0 0.0
    %546 = vmatpush1.msra.mxu0 0.0
    %547 = vmatprep.subr.mxu0 0.0
    %548 = vmatpush1.msra.mxu0 0.0
    %549 = vmatprep.subr.mxu0 0.0
    %550 = vmatpush1.msra.mxu0 0.0
    %551 = vmatprep.subr.mxu0 0.0
    %552 = vmatpush1.msra.mxu0 0.0
    %553 = vmatprep.mubr.f32.mxu0 0.0
    %554 = vmatmul.mubr.f32.gmra.mrb[0].mxu0 %v466
    %v555 = vpop.f32.mrb[0].mxu0
    %v556 = vadd.f32 %v462, %v555
    %v557 = vpop.f32.mrb[0].mxu0
    %558 = vmatprep.mubr.f32.mxu0 0.0
    %559 = vmatmul.mubr.f32.gmra.mrb[0].mxu0 %v469
    %v560 = vpop.f32.mrb[0].mxu0
    %v561 = vadd.f32 %v462, %v560
    %v562 = vpop.f32.mrb[0].mxu0
    %563 = vmatprep.mubr.f32.mxu0 0.0
    %564 = vmatmul.mubr.f32.gmra.mrb[0].mxu0 %v472
    %v565 = vpop.f32.mrb[0].mxu0
    %v566 = vadd.f32 %v462, %v565
    %v567 = vpop.f32.mrb[0].mxu0
    %568 = vmatprep.mubr.f32.mxu0 0.0
    %569 = vmatmul.mubr.f32.gmra.mrb[0].mxu0 %v475
    %v570 = vpop.f32.mrb[0].mxu0
    %v571 = vadd.f32 %v462, %v570
    %v572 = vpop.f32.mrb[0].mxu0
    %573 = vmatprep.mubr.f32.mxu0 0.0
    %574 = vmatmul.mubr.f32.gmra.mrb[0].mxu0 %v478
    %v575 = vpop.f32.mrb[0].mxu0
    %v576 = vadd.f32 %v462, %v575
    %v577 = vpop.f32.mrb[0].mxu0
    %578 = vmatprep.mubr.f32.mxu0 0.0
    %579 = vmatmul.mubr.f32.gmra.mrb[0].mxu0 %v481
    %v580 = vpop.f32.mrb[0].mxu0
    %v581 = vadd.f32 %v462, %v580
    %v582 = vpop.f32.mrb[0].mxu0
    %583 = vmatprep.mubr.f32.mxu0 0.0
    %584 = vmatmul.mubr.f32.gmra.mrb[0].mxu0 %v484
    %v585 = vpop.f32.mrb[0].mxu0
    %v586 = vadd.f32 %v462, %v585
    %v587 = vpop.f32.mrb[0].mxu0
    %588 = vmatprep.mubr.f32.mxu0 0.0
    %589 = vmatmul.mubr.f32.gmra.mrb[0].mxu0 %v487
    %v590 = vpop.f32.mrb[0].mxu0
    %v591 = vadd.f32 %v462, %v590
    %v592 = vpop.f32.mrb[0].mxu0
    %593 = vdwg.mxu0
    %v594 = vmax.f32 %v556, 0.0
    %v595 = vmax.f32 %v561, 0.0
    %v596 = vmax.f32 %v566, 0.0
    %v597 = vmax.f32 %v571, 0.0
    %v598 = vmax.f32 %v576, 0.0
    %v599 = vmax.f32 %v581, 0.0
    %v600 = vmax.f32 %v586, 0.0
    %v601 = vmax.f32 %v591, 0.0
    %v602 = vld [vmem:[#allocation9] sm:$0xff]
    %v603 = vld [vmem:[#allocation9 + $0x8] sm:$0xff]
    %v604 = vld [vmem:[#allocation9 + $0x10] sm:$0xff]
    %v605 = vld [vmem:[#allocation9 + $0x18] sm:$0xff]
    %v606 = vld [vmem:[#allocation10] sm:$0x1]
    %v608 = vlaneseq
    %v609 = vshrl.u32 %v608, 7
    %v610 = vsub.s32 0, %v609
    %v611 = vrot.slane %v606, %v610
    %vm613 = vcmask 261120
    %v615 = vsel %vm613, %v594, 0
    %v618 = vsel %vm613, %v595, 0
    %v621 = vsel %vm613, %v596, 0
    %v624 = vsel %vm613, %v597, 0
    %v627 = vsel %vm613, %v598, 0
    %v630 = vsel %vm613, %v599, 0
    %v633 = vsel %vm613, %v600, 0
    %v636 = vsel %vm613, %v601, 0
    %638 = vmatprep.subr.mxu0 0.0
    %639 = vmatpush1.msra.mxu0 %v602
    %640 = vmatprep.subr.mxu0 0.0
    %641 = vmatpush1.msra.mxu0 %v603
    %642 = vmatprep.subr.mxu0 0.0
    %643 = vmatpush1.msra.mxu0 %v604
    %644 = vmatprep.subr.mxu0 0.0
    %645 = vmatpush1.msra.mxu0 %v605
    %646 = vmatprep.subr.mxu0 0.0
    %647 = vmatpush1.msra.mxu0 0.0
    %648 = vmatprep.subr.mxu0 0.0
    %649 = vmatpush1.msra.mxu0 0.0
    %650 = vmatprep.subr.mxu0 0.0
    %651 = vmatpush1.msra.mxu0 0.0
    %652 = vmatprep.subr.mxu0 0.0
    %653 = vmatpush1.msra.mxu0 0.0
    %654 = vmatprep.subr.mxu0 0.0
    %655 = vmatpush1.msra.mxu0 0.0
    %656 = vmatprep.subr.mxu0 0.0
    %657 = vmatpush1.msra.mxu0 0.0
    %658 = vmatprep.subr.mxu0 0.0
    %659 = vmatpush1.msra.mxu0 0.0
    %660 = vmatprep.subr.mxu0 0.0
    %661 = vmatpush1.msra.mxu0 0.0
    %662 = vmatprep.subr.mxu0 0.0
    %663 = vmatpush1.msra.mxu0 0.0
    %664 = vmatprep.subr.mxu0 0.0
    %665 = vmatpush1.msra.mxu0 0.0
    %666 = vmatprep.subr.mxu0 0.0
    %667 = vmatpush1.msra.mxu0 0.0
    %668 = vmatprep.subr.mxu0 0.0
    %669 = vmatpush1.msra.mxu0 0.0
    %670 = vmatprep.subr.mxu0 0.0
    %671 = vmatpush1.msra.mxu0 0.0
    %672 = vmatprep.subr.mxu0 0.0
    %673 = vmatpush1.msra.mxu0 0.0
    %674 = vmatprep.subr.mxu0 0.0
    %675 = vmatpush1.msra.mxu0 0.0
    %676 = vmatprep.subr.mxu0 0.0
    %677 = vmatpush1.msra.mxu0 0.0
    %678 = vmatprep.subr.mxu0 0.0
    %679 = vmatpush1.msra.mxu0 0.0
    %680 = vmatprep.subr.mxu0 0.0
    %681 = vmatpush1.msra.mxu0 0.0
    %682 = vmatprep.subr.mxu0 0.0
    %683 = vmatpush1.msra.mxu0 0.0
    %684 = vmatprep.subr.mxu0 0.0
    %685 = vmatpush1.msra.mxu0 0.0
    %686 = vmatprep.subr.mxu0 0.0
    %687 = vmatpush1.msra.mxu0 0.0
    %688 = vmatprep.subr.mxu0 0.0
    %689 = vmatpush1.msra.mxu0 0.0
    %690 = vmatprep.subr.mxu0 0.0
    %691 = vmatpush1.msra.mxu0 0.0
    %692 = vmatprep.subr.mxu0 0.0
    %693 = vmatpush1.msra.mxu0 0.0
    %694 = vmatprep.subr.mxu0 0.0
    %695 = vmatpush1.msra.mxu0 0.0
    %696 = vmatprep.subr.mxu0 0.0
    %697 = vmatpush1.msra.mxu0 0.0
    %698 = vmatprep.subr.mxu0 0.0
    %699 = vmatpush1.msra.mxu0 0.0
    %700 = vmatprep.subr.mxu0 0.0
    %701 = vmatpush1.msra.mxu0 0.0
    %702 = vmatprep.mubr.f32.mxu0 0.0
    %703 = vmatmul.mubr.f32.gmra.mrb[0].mxu0 %v615
    %v704 = vpop.f32.mrb[0].mxu0
    %v705 = vadd.f32 %v611, %v704
    %v706 = vpop.f32.mrb[0].mxu0
    %707 = vmatprep.mubr.f32.mxu0 0.0
    %708 = vmatmul.mubr.f32.gmra.mrb[0].mxu0 %v618
    %v709 = vpop.f32.mrb[0].mxu0
    %v710 = vadd.f32 %v611, %v709
    %v711 = vpop.f32.mrb[0].mxu0
    %712 = vmatprep.mubr.f32.mxu0 0.0
    %713 = vmatmul.mubr.f32.gmra.mrb[0].mxu0 %v621
    %v714 = vpop.f32.mrb[0].mxu0
    %v715 = vadd.f32 %v611, %v714
    %v716 = vpop.f32.mrb[0].mxu0
    %717 = vmatprep.mubr.f32.mxu0 0.0
    %718 = vmatmul.mubr.f32.gmra.mrb[0].mxu0 %v624
    %v719 = vpop.f32.mrb[0].mxu0
    %v720 = vadd.f32 %v611, %v719
    %v721 = vpop.f32.mrb[0].mxu0
    %722 = vmatprep.mubr.f32.mxu0 0.0
    %723 = vmatmul.mubr.f32.gmra.mrb[0].mxu0 %v627
    %v724 = vpop.f32.mrb[0].mxu0
    %v725 = vadd.f32 %v611, %v724
    %v726 = vpop.f32.mrb[0].mxu0
    %727 = vmatprep.mubr.f32.mxu0 0.0
    %728 = vmatmul.mubr.f32.gmra.mrb[0].mxu0 %v630
    %v729 = vpop.f32.mrb[0].mxu0
    %v730 = vadd.f32 %v611, %v729
    %v731 = vpop.f32.mrb[0].mxu0
    %732 = vmatprep.mubr.f32.mxu0 0.0
    %733 = vmatmul.mubr.f32.gmra.mrb[0].mxu0 %v633
    %v734 = vpop.f32.mrb[0].mxu0
    %v735 = vadd.f32 %v611, %v734
    %v736 = vpop.f32.mrb[0].mxu0
    %737 = vmatprep.mubr.f32.mxu0 0.0
    %738 = vmatmul.mubr.f32.gmra.mrb[0].mxu0 %v636
    %v739 = vpop.f32.mrb[0].mxu0
    %v740 = vadd.f32 %v611, %v739
    %v741 = vpop.f32.mrb[0].mxu0
    %742 = vdwg.mxu0
    %v743 = vld [vmem:[%s8] sm:$0xff]
    %v744 = vld [vmem:[%s8 + $0x8] sm:$0xff]
    %v745 = vld [vmem:[%s8 + $0x10] sm:$0xff]
    %v746 = vld [vmem:[%s8 + $0x18] sm:$0xff]
    %v747 = vld [vmem:[%s8 + $0x20] sm:$0xff]
    %v748 = vld [vmem:[%s8 + $0x28] sm:$0xff]
    %v749 = vld [vmem:[%s8 + $0x30] sm:$0xff]
    %v750 = vld [vmem:[%s8 + $0x38] sm:$0xff]
    %v751 = vld [vmem:[%s8 + $0x40] sm:$0xff]
    %v752 = vld [vmem:[%s8 + $0x48] sm:$0xff]
    %v753 = vld [vmem:[%s8 + $0x50] sm:$0xff]
    %v754 = vld [vmem:[%s8 + $0x58] sm:$0xff]
    %v755 = vld [vmem:[%s8 + $0x60] sm:$0xff]
    %v756 = vld [vmem:[%s8 + $0x68] sm:$0xff]
    %v757 = vld [vmem:[%s8 + $0x70] sm:$0xff]
    %v758 = vld [vmem:[%s8 + $0x78] sm:$0xff]
    %759 = vmatprep.subr.mxu0 0.0
    %760 = vmatpush1.msra.mxu0 %v743
    %761 = vmatprep.subr.mxu0 0.0
    %762 = vmatpush1.msra.mxu0 %v744
    %763 = vmatprep.subr.mxu0 0.0
    %764 = vmatpush1.msra.mxu0 %v745
    %765 = vmatprep.subr.mxu0 0.0
    %766 = vmatpush1.msra.mxu0 %v746
    %767 = vmatprep.subr.mxu0 0.0
    %768 = vmatpush1.msra.mxu0 %v747
    %769 = vmatprep.subr.mxu0 0.0
    %770 = vmatpush1.msra.mxu0 %v748
    %771 = vmatprep.subr.mxu0 0.0
    %772 = vmatpush1.msra.mxu0 %v749
    %773 = vmatprep.subr.mxu0 0.0
    %774 = vmatpush1.msra.mxu0 %v750
    %775 = vmatprep.subr.mxu0 0.0
    %776 = vmatpush1.msra.mxu0 %v751
    %777 = vmatprep.subr.mxu0 0.0
    %778 = vmatpush1.msra.mxu0 %v752
    %779 = vmatprep.subr.mxu0 0.0
    %780 = vmatpush1.msra.mxu0 %v753
    %781 = vmatprep.subr.mxu0 0.0
    %782 = vmatpush1.msra.mxu0 %v754
    %783 = vmatprep.subr.mxu0 0.0
    %784 = vmatpush1.msra.mxu0 %v755
    %785 = vmatprep.subr.mxu0 0.0
    %786 = vmatpush1.msra.mxu0 %v756
    %787 = vmatprep.subr.mxu0 0.0
    %788 = vmatpush1.msra.mxu0 %v757
    %789 = vmatprep.subr.mxu0 0.0
    %790 = vmatpush1.msra.mxu0 %v758
    %791 = vmatprep.subr.mxu0 0.0
    %792 = vmatpush1.msra.mxu0 0.0
    %793 = vmatprep.subr.mxu0 0.0
    %794 = vmatpush1.msra.mxu0 0.0
    %795 = vmatprep.subr.mxu0 0.0
    %796 = vmatpush1.msra.mxu0 0.0
    %797 = vmatprep.subr.mxu0 0.0
    %798 = vmatpush1.msra.mxu0 0.0
    %799 = vmatprep.subr.mxu0 0.0
    %800 = vmatpush1.msra.mxu0 0.0
    %801 = vmatprep.subr.mxu0 0.0
    %802 = vmatpush1.msra.mxu0 0.0
    %803 = vmatprep.subr.mxu0 0.0
    %804 = vmatpush1.msra.mxu0 0.0
    %805 = vmatprep.subr.mxu0 0.0
    %806 = vmatpush1.msra.mxu0 0.0
    %807 = vmatprep.subr.mxu0 0.0
    %808 = vmatpush1.msra.mxu0 0.0
    %809 = vmatprep.subr.mxu0 0.0
    %810 = vmatpush1.msra.mxu0 0.0
    %811 = vmatprep.subr.mxu0 0.0
    %812 = vmatpush1.msra.mxu0 0.0
    %813 = vmatprep.subr.mxu0 0.0
    %814 = vmatpush1.msra.mxu0 0.0
    %815 = vmatprep.subr.mxu0 0.0
    %816 = vmatpush1.msra.mxu0 0.0
    %817 = vmatprep.subr.mxu0 0.0
    %818 = vmatpush1.msra.mxu0 0.0
    %819 = vmatprep.subr.mxu0 0.0
    %820 = vmatpush1.msra.mxu0 0.0
    %821 = vmatprep.subr.mxu0 0.0
    %822 = vmatpush1.msra.mxu0 0.0
    %823 = vmatprep.mubr.f32.mxu0 0.0
    %824 = vmatmul.mubr.f32.gmra.mrb[0].mxu0 0.0
    %v825 = vpop.f32.mrb[0].mxu0
    %v826 = vadd.f32 0.0, %v825
    %v827 = vpop.f32.mrb[0].mxu0
    %828 = vdwg.mxu0
    %v829 = vadd.f32 %v705, %v826
    %v830 = vxor.u32 %v829, 2147483648
    %v831 = vmul.f32 %v830, 1.442695
    %v832 = vpow.pop %v831
    %v833 = vadd.f32 %v832, 1.0
    %v834 = vrcp.pop %v833
    %v835 = vmul.f32 1.0, %v834
    %v836 = vtanh.pop %v829
    %837 = vrot.lane.b32.xlu0 %v835, 96
    %v838 = vpop.permute.xlu0 %837
    %839 = vrot.lane.b32.xlu0 %v835, 64
    %v840 = vpop.permute.xlu0 %839
    %841 = vrot.lane.b32.xlu0 %v836, 32
    %v842 = vpop.permute.xlu0 %841
    %v843 = vmul.f32 %v838, 0.0
    %v844 = vmul.f32 %v835, %v842
    %v845 = vadd.f32 %v843, %v844
    %v846 = vtanh.pop %v845
    %v847 = vmul.f32 %v840, %v846
    %848 = vst [vmem:[#allocation2] sm:$0xff] %v847
    %849 = vmatprep.subr.mxu0 0.0
    %850 = vmatpush1.msra.mxu0 %v743
    %851 = vmatprep.subr.mxu0 0.0
    %852 = vmatpush1.msra.mxu0 %v744
    %853 = vmatprep.subr.mxu0 0.0
    %854 = vmatpush1.msra.mxu0 %v745
    %855 = vmatprep.subr.mxu0 0.0
    %856 = vmatpush1.msra.mxu0 %v746
    %857 = vmatprep.subr.mxu0 0.0
    %858 = vmatpush1.msra.mxu0 %v747
    %859 = vmatprep.subr.mxu0 0.0
    %860 = vmatpush1.msra.mxu0 %v748
    %861 = vmatprep.subr.mxu0 0.0
    %862 = vmatpush1.msra.mxu0 %v749
    %863 = vmatprep.subr.mxu0 0.0
    %864 = vmatpush1.msra.mxu0 %v750
    %865 = vmatprep.subr.mxu0 0.0
    %866 = vmatpush1.msra.mxu0 %v751
    %867 = vmatprep.subr.mxu0 0.0
    %868 = vmatpush1.msra.mxu0 %v752
    %869 = vmatprep.subr.mxu0 0.0
    %870 = vmatpush1.msra.mxu0 %v753
    %871 = vmatprep.subr.mxu0 0.0
    %872 = vmatpush1.msra.mxu0 %v754
    %873 = vmatprep.subr.mxu0 0.0
    %874 = vmatpush1.msra.mxu0 %v755
    %875 = vmatprep.subr.mxu0 0.0
    %876 = vmatpush1.msra.mxu0 %v756
    %877 = vmatprep.subr.mxu0 0.0
    %878 = vmatpush1.msra.mxu0 %v757
    %879 = vmatprep.subr.mxu0 0.0
    %880 = vmatpush1.msra.mxu0 %v758
    %881 = vmatprep.subr.mxu0 0.0
    %882 = vmatpush1.msra.mxu0 0.0
    %883 = vmatprep.subr.mxu0 0.0
    %884 = vmatpush1.msra.mxu0 0.0
    %885 = vmatprep.subr.mxu0 0.0
    %886 = vmatpush1.msra.mxu0 0.0
    %887 = vmatprep.subr.mxu0 0.0
    %888 = vmatpush1.msra.mxu0 0.0
    %889 = vmatprep.subr.mxu0 0.0
    %890 = vmatpush1.msra.mxu0 0.0
    %891 = vmatprep.subr.mxu0 0.0
    %892 = vmatpush1.msra.mxu0 0.0
    %893 = vmatprep.subr.mxu0 0.0
    %894 = vmatpush1.msra.mxu0 0.0
    %895 = vmatprep.subr.mxu0 0.0
    %896 = vmatpush1.msra.mxu0 0.0
    %897 = vmatprep.subr.mxu0 0.0
    %898 = vmatpush1.msra.mxu0 0.0
    %899 = vmatprep.subr.mxu0 0.0
    %900 = vmatpush1.msra.mxu0 0.0
    %901 = vmatprep.subr.mxu0 0.0
    %902 = vmatpush1.msra.mxu0 0.0
    %903 = vmatprep.subr.mxu0 0.0
    %904 = vmatpush1.msra.mxu0 0.0
    %905 = vmatprep.subr.mxu0 0.0
    %906 = vmatpush1.msra.mxu0 0.0
    %907 = vmatprep.subr.mxu0 0.0
    %908 = vmatpush1.msra.mxu0 0.0
    %909 = vmatprep.subr.mxu0 0.0
    %910 = vmatpush1.msra.mxu0 0.0
    %911 = vmatprep.subr.mxu0 0.0
    %912 = vmatpush1.msra.mxu0 0.0
    %913 = vmatprep.mubr.f32.mxu0 0.0
    %914 = vmatmul.mubr.f32.gmra.mrb[0].mxu0 %v847
    %v915 = vpop.f32.mrb[0].mxu0
    %v916 = vadd.f32 0.0, %v915
    %v917 = vpop.f32.mrb[0].mxu0
    %918 = vdwg.mxu0
    %v919 = vadd.f32 %v710, %v916
    %v920 = vxor.u32 %v919, 2147483648
    %v921 = vmul.f32 %v920, 1.442695
    %v922 = vpow.pop %v921
    %v923 = vadd.f32 %v922, 1.0
    %v924 = vrcp.pop %v923
    %v925 = vmul.f32 1.0, %v924
    %v926 = vtanh.pop %v919
    %927 = vrot.lane.b32.xlu0 %v925, 96
    %v928 = vpop.permute.xlu0 %927
    %929 = vrot.lane.b32.xlu0 %v925, 64
    %v930 = vpop.permute.xlu0 %929
    %931 = vrot.lane.b32.xlu0 %v926, 32
    %v932 = vpop.permute.xlu0 %931
    %v933 = vmul.f32 %v928, %v845
    %v934 = vmul.f32 %v925, %v932
    %v935 = vadd.f32 %v933, %v934
    %v936 = vtanh.pop %v935
    %v937 = vmul.f32 %v930, %v936
    %938 = vst [vmem:[#allocation2 + $0x8] sm:$0xff] %v937
    %939 = vmatprep.subr.mxu0 0.0
    %940 = vmatpush1.msra.mxu0 %v743
    %941 = vmatprep.subr.mxu0 0.0
    %942 = vmatpush1.msra.mxu0 %v744
    %943 = vmatprep.subr.mxu0 0.0
    %944 = vmatpush1.msra.mxu0 %v745
    %945 = vmatprep.subr.mxu0 0.0
    %946 = vmatpush1.msra.mxu0 %v746
    %947 = vmatprep.subr.mxu0 0.0
    %948 = vmatpush1.msra.mxu0 %v747
    %949 = vmatprep.subr.mxu0 0.0
    %950 = vmatpush1.msra.mxu0 %v748
    %951 = vmatprep.subr.mxu0 0.0
    %952 = vmatpush1.msra.mxu0 %v749
    %953 = vmatprep.subr.mxu0 0.0
    %954 = vmatpush1.msra.mxu0 %v750
    %955 = vmatprep.subr.mxu0 0.0
    %956 = vmatpush1.msra.mxu0 %v751
    %957 = vmatprep.subr.mxu0 0.0
    %958 = vmatpush1.msra.mxu0 %v752
    %959 = vmatprep.subr.mxu0 0.0
    %960 = vmatpush1.msra.mxu0 %v753
    %961 = vmatprep.subr.mxu0 0.0
    %962 = vmatpush1.msra.mxu0 %v754
    %963 = vmatprep.subr.mxu0 0.0
    %964 = vmatpush1.msra.mxu0 %v755
    %965 = vmatprep.subr.mxu0 0.0
    %966 = vmatpush1.msra.mxu0 %v756
    %967 = vmatprep.subr.mxu0 0.0
    %968 = vmatpush1.msra.mxu0 %v757
    %969 = vmatprep.subr.mxu0 0.0
    %970 = vmatpush1.msra.mxu0 %v758
    %971 = vmatprep.subr.mxu0 0.0
    %972 = vmatpush1.msra.mxu0 0.0
    %973 = vmatprep.subr.mxu0 0.0
    %974 = vmatpush1.msra.mxu0 0.0
    %975 = vmatprep.subr.mxu0 0.0
    %976 = vmatpush1.msra.mxu0 0.0
    %977 = vmatprep.subr.mxu0 0.0
    %978 = vmatpush1.msra.mxu0 0.0
    %979 = vmatprep.subr.mxu0 0.0
    %980 = vmatpush1.msra.mxu0 0.0
    %981 = vmatprep.subr.mxu0 0.0
    %982 = vmatpush1.msra.mxu0 0.0
    %983 = vmatprep.subr.mxu0 0.0
    %984 = vmatpush1.msra.mxu0 0.0
    %985 = vmatprep.subr.mxu0 0.0
    %986 = vmatpush1.msra.mxu0 0.0
    %987 = vmatprep.subr.mxu0 0.0
    %988 = vmatpush1.msra.mxu0 0.0
    %989 = vmatprep.subr.mxu0 0.0
    %990 = vmatpush1.msra.mxu0 0.0
    %991 = vmatprep.subr.mxu0 0.0
    %992 = vmatpush1.msra.mxu0 0.0
    %993 = vmatprep.subr.mxu0 0.0
    %994 = vmatpush1.msra.mxu0 0.0
    %995 = vmatprep.subr.mxu0 0.0
    %996 = vmatpush1.msra.mxu0 0.0
    %997 = vmatprep.subr.mxu0 0.0
    %998 = vmatpush1.msra.mxu0 0.0
    %999 = vmatprep.subr.mxu0 0.0
    %1000 = vmatpush1.msra.mxu0 0.0
    %1001 = vmatprep.subr.mxu0 0.0
    %1002 = vmatpush1.msra.mxu0 0.0
    %1003 = vmatprep.mubr.f32.mxu0 0.0
    %1004 = vmatmul.mubr.f32.gmra.mrb[0].mxu0 %v937
    %v1005 = vpop.f32.mrb[0].mxu0
    %v1006 = vadd.f32 0.0, %v1005
    %v1007 = vpop.f32.mrb[0].mxu0
    %1008 = vdwg.mxu0
    %v1009 = vadd.f32 %v715, %v1006
    %v1010 = vxor.u32 %v1009, 2147483648
    %v1011 = vmul.f32 %v1010, 1.442695
    %v1012 = vpow.pop %v1011
    %v1013 = vadd.f32 %v1012, 1.0
    %v1014 = vrcp.pop %v1013
    %v1015 = vmul.f32 1.0, %v1014
    %v1016 = vtanh.pop %v1009
    %1017 = vrot.lane.b32.xlu0 %v1015, 96
    %v1018 = vpop.permute.xlu0 %1017
    %1019 = vrot.lane.b32.xlu0 %v1015, 64
    %v1020 = vpop.permute.xlu0 %1019
    %1021 = vrot.lane.b32.xlu0 %v1016, 32
    %v1022 = vpop.permute.xlu0 %1021
    %v1023 = vmul.f32 %v1018, %v935
    %v1024 = vmul.f32 %v1015, %v1022
    %v1025 = vadd.f32 %v1023, %v1024
    %v1026 = vtanh.pop %v1025
    %v1027 = vmul.f32 %v1020, %v1026
    %1028 = vst [vmem:[#allocation2 + $0x10] sm:$0xff] %v1027
    %1029 = vmatprep.subr.mxu0 0.0
    %1030 = vmatpush1.msra.mxu0 %v743
    %1031 = vmatprep.subr.mxu0 0.0
    %1032 = vmatpush1.msra.mxu0 %v744
    %1033 = vmatprep.subr.mxu0 0.0
    %1034 = vmatpush1.msra.mxu0 %v745
    %1035 = vmatprep.subr.mxu0 0.0
    %1036 = vmatpush1.msra.mxu0 %v746
    %1037 = vmatprep.subr.mxu0 0.0
    %1038 = vmatpush1.msra.mxu0 %v747
    %1039 = vmatprep.subr.mxu0 0.0
    %1040 = vmatpush1.msra.mxu0 %v748
    %1041 = vmatprep.subr.mxu0 0.0
    %1042 = vmatpush1.msra.mxu0 %v749
    %1043 = vmatprep.subr.mxu0 0.0
    %1044 = vmatpush1.msra.mxu0 %v750
    %1045 = vmatprep.subr.mxu0 0.0
    %1046 = vmatpush1.msra.mxu0 %v751
    %1047 = vmatprep.subr.mxu0 0.0
    %1048 = vmatpush1.msra.mxu0 %v752
    %1049 = vmatprep.subr.mxu0 0.0
    %1050 = vmatpush1.msra.mxu0 %v753
    %1051 = vmatprep.subr.mxu0 0.0
    %1052 = vmatpush1.msra.mxu0 %v754
    %1053 = vmatprep.subr.mxu0 0.0
    %1054 = vmatpush1.msra.mxu0 %v755
    %1055 = vmatprep.subr.mxu0 0.0
    %1056 = vmatpush1.msra.mxu0 %v756
    %1057 = vmatprep.subr.mxu0 0.0
    %1058 = vmatpush1.msra.mxu0 %v757
    %1059 = vmatprep.subr.mxu0 0.0
    %1060 = vmatpush1.msra.mxu0 %v758
    %1061 = vmatprep.subr.mxu0 0.0
    %1062 = vmatpush1.msra.mxu0 0.0
    %1063 = vmatprep.subr.mxu0 0.0
    %1064 = vmatpush1.msra.mxu0 0.0
    %1065 = vmatprep.subr.mxu0 0.0
    %1066 = vmatpush1.msra.mxu0 0.0
    %1067 = vmatprep.subr.mxu0 0.0
    %1068 = vmatpush1.msra.mxu0 0.0
    %1069 = vmatprep.subr.mxu0 0.0
    %1070 = vmatpush1.msra.mxu0 0.0
    %1071 = vmatprep.subr.mxu0 0.0
    %1072 = vmatpush1.msra.mxu0 0.0
    %1073 = vmatprep.subr.mxu0 0.0
    %1074 = vmatpush1.msra.mxu0 0.0
    %1075 = vmatprep.subr.mxu0 0.0
    %1076 = vmatpush1.msra.mxu0 0.0
    %1077 = vmatprep.subr.mxu0 0.0
    %1078 = vmatpush1.msra.mxu0 0.0
    %1079 = vmatprep.subr.mxu0 0.0
    %1080 = vmatpush1.msra.mxu0 0.0
    %1081 = vmatprep.subr.mxu0 0.0
    %1082 = vmatpush1.msra.mxu0 0.0
    %1083 = vmatprep.subr.mxu0 0.0
    %1084 = vmatpush1.msra.mxu0 0.0
    %1085 = vmatprep.subr.mxu0 0.0
    %1086 = vmatpush1.msra.mxu0 0.0
    %1087 = vmatprep.subr.mxu0 0.0
    %1088 = vmatpush1.msra.mxu0 0.0
    %1089 = vmatprep.subr.mxu0 0.0
    %1090 = vmatpush1.msra.mxu0 0.0
    %1091 = vmatprep.subr.mxu0 0.0
    %1092 = vmatpush1.msra.mxu0 0.0
    %1093 = vmatprep.mubr.f32.mxu0 0.0
    %1094 = vmatmul.mubr.f32.gmra.mrb[0].mxu0 %v1027
    %v1095 = vpop.f32.mrb[0].mxu0
    %v1096 = vadd.f32 0.0, %v1095
    %v1097 = vpop.f32.mrb[0].mxu0
    %1098 = vdwg.mxu0
    %v1099 = vadd.f32 %v720, %v1096
    %v1100 = vxor.u32 %v1099, 2147483648
    %v1101 = vmul.f32 %v1100, 1.442695
    %v1102 = vpow.pop %v1101
    %v1103 = vadd.f32 %v1102, 1.0
    %v1104 = vrcp.pop %v1103
    %v1105 = vmul.f32 1.0, %v1104
    %v1106 = vtanh.pop %v1099
    %1107 = vrot.lane.b32.xlu0 %v1105, 96
    %v1108 = vpop.permute.xlu0 %1107
    %1109 = vrot.lane.b32.xlu0 %v1105, 64
    %v1110 = vpop.permute.xlu0 %1109
    %1111 = vrot.lane.b32.xlu0 %v1106, 32
    %v1112 = vpop.permute.xlu0 %1111
    %v1113 = vmul.f32 %v1108, %v1025
    %v1114 = vmul.f32 %v1105, %v1112
    %v1115 = vadd.f32 %v1113, %v1114
    %v1116 = vtanh.pop %v1115
    %v1117 = vmul.f32 %v1110, %v1116
    %1118 = vst [vmem:[#allocation2 + $0x18] sm:$0xff] %v1117
    %1119 = vmatprep.subr.mxu0 0.0
    %1120 = vmatpush1.msra.mxu0 %v743
    %1121 = vmatprep.subr.mxu0 0.0
    %1122 = vmatpush1.msra.mxu0 %v744
    %1123 = vmatprep.subr.mxu0 0.0
    %1124 = vmatpush1.msra.mxu0 %v745
    %1125 = vmatprep.subr.mxu0 0.0
    %1126 = vmatpush1.msra.mxu0 %v746
    %1127 = vmatprep.subr.mxu0 0.0
    %1128 = vmatpush1.msra.mxu0 %v747
    %1129 = vmatprep.subr.mxu0 0.0
    %1130 = vmatpush1.msra.mxu0 %v748
    %1131 = vmatprep.subr.mxu0 0.0
    %1132 = vmatpush1.msra.mxu0 %v749
    %1133 = vmatprep.subr.mxu0 0.0
    %1134 = vmatpush1.msra.mxu0 %v750
    %1135 = vmatprep.subr.mxu0 0.0
    %1136 = vmatpush1.msra.mxu0 %v751
    %1137 = vmatprep.subr.mxu0 0.0
    %1138 = vmatpush1.msra.mxu0 %v752
    %1139 = vmatprep.subr.mxu0 0.0
    %1140 = vmatpush1.msra.mxu0 %v753
    %1141 = vmatprep.subr.mxu0 0.0
    %1142 = vmatpush1.msra.mxu0 %v754
    %1143 = vmatprep.subr.mxu0 0.0
    %1144 = vmatpush1.msra.mxu0 %v755
    %1145 = vmatprep.subr.mxu0 0.0
    %1146 = vmatpush1.msra.mxu0 %v756
    %1147 = vmatprep.subr.mxu0 0.0
    %1148 = vmatpush1.msra.mxu0 %v757
    %1149 = vmatprep.subr.mxu0 0.0
    %1150 = vmatpush1.msra.mxu0 %v758
    %1151 = vmatprep.subr.mxu0 0.0
    %1152 = vmatpush1.msra.mxu0 0.0
    %1153 = vmatprep.subr.mxu0 0.0
    %1154 = vmatpush1.msra.mxu0 0.0
    %1155 = vmatprep.subr.mxu0 0.0
    %1156 = vmatpush1.msra.mxu0 0.0
    %1157 = vmatprep.subr.mxu0 0.0
    %1158 = vmatpush1.msra.mxu0 0.0
    %1159 = vmatprep.subr.mxu0 0.0
    %1160 = vmatpush1.msra.mxu0 0.0
    %1161 = vmatprep.subr.mxu0 0.0
    %1162 = vmatpush1.msra.mxu0 0.0
    %1163 = vmatprep.subr.mxu0 0.0
    %1164 = vmatpush1.msra.mxu0 0.0
    %1165 = vmatprep.subr.mxu0 0.0
    %1166 = vmatpush1.msra.mxu0 0.0
    %1167 = vmatprep.subr.mxu0 0.0
    %1168 = vmatpush1.msra.mxu0 0.0
    %1169 = vmatprep.subr.mxu0 0.0
    %1170 = vmatpush1.msra.mxu0 0.0
    %1171 = vmatprep.subr.mxu0 0.0
    %1172 = vmatpush1.msra.mxu0 0.0
    %1173 = vmatprep.subr.mxu0 0.0
    %1174 = vmatpush1.msra.mxu0 0.0
    %1175 = vmatprep.subr.mxu0 0.0
    %1176 = vmatpush1.msra.mxu0 0.0
    %1177 = vmatprep.subr.mxu0 0.0
    %1178 = vmatpush1.msra.mxu0 0.0
    %1179 = vmatprep.subr.mxu0 0.0
    %1180 = vmatpush1.msra.mxu0 0.0
    %1181 = vmatprep.subr.mxu0 0.0
    %1182 = vmatpush1.msra.mxu0 0.0
    %1183 = vmatprep.mubr.f32.mxu0 0.0
    %1184 = vmatmul.mubr.f32.gmra.mrb[0].mxu0 %v1117
    %v1185 = vpop.f32.mrb[0].mxu0
    %v1186 = vadd.f32 0.0, %v1185
    %v1187 = vpop.f32.mrb[0].mxu0
    %1188 = vdwg.mxu0
    %v1189 = vadd.f32 %v725, %v1186
    %v1190 = vxor.u32 %v1189, 2147483648
    %v1191 = vmul.f32 %v1190, 1.442695
    %v1192 = vpow.pop %v1191
    %v1193 = vadd.f32 %v1192, 1.0
    %v1194 = vrcp.pop %v1193
    %v1195 = vmul.f32 1.0, %v1194
    %v1196 = vtanh.pop %v1189
    %1197 = vrot.lane.b32.xlu0 %v1195, 96
    %v1198 = vpop.permute.xlu0 %1197
    %1199 = vrot.lane.b32.xlu0 %v1195, 64
    %v1200 = vpop.permute.xlu0 %1199
    %1201 = vrot.lane.b32.xlu0 %v1196, 32
    %v1202 = vpop.permute.xlu0 %1201
    %v1203 = vmul.f32 %v1198, %v1115
    %v1204 = vmul.f32 %v1195, %v1202
    %v1205 = vadd.f32 %v1203, %v1204
    %v1206 = vtanh.pop %v1205
    %v1207 = vmul.f32 %v1200, %v1206
    %1208 = vst [vmem:[#allocation2 + $0x20] sm:$0xff] %v1207
    %1209 = vmatprep.subr.mxu0 0.0
    %1210 = vmatpush1.msra.mxu0 %v743
    %1211 = vmatprep.subr.mxu0 0.0
    %1212 = vmatpush1.msra.mxu0 %v744
    %1213 = vmatprep.subr.mxu0 0.0
    %1214 = vmatpush1.msra.mxu0 %v745
    %1215 = vmatprep.subr.mxu0 0.0
    %1216 = vmatpush1.msra.mxu0 %v746
    %1217 = vmatprep.subr.mxu0 0.0
    %1218 = vmatpush1.msra.mxu0 %v747
    %1219 = vmatprep.subr.mxu0 0.0
    %1220 = vmatpush1.msra.mxu0 %v748
    %1221 = vmatprep.subr.mxu0 0.0
    %1222 = vmatpush1.msra.mxu0 %v749
    %1223 = vmatprep.subr.mxu0 0.0
    %1224 = vmatpush1.msra.mxu0 %v750
    %1225 = vmatprep.subr.mxu0 0.0
    %1226 = vmatpush1.msra.mxu0 %v751
    %1227 = vmatprep.subr.mxu0 0.0
    %1228 = vmatpush1.msra.mxu0 %v752
    %1229 = vmatprep.subr.mxu0 0.0
    %1230 = vmatpush1.msra.mxu0 %v753
    %1231 = vmatprep.subr.mxu0 0.0
    %1232 = vmatpush1.msra.mxu0 %v754
    %1233 = vmatprep.subr.mxu0 0.0
    %1234 = vmatpush1.msra.mxu0 %v755
    %1235 = vmatprep.subr.mxu0 0.0
    %1236 = vmatpush1.msra.mxu0 %v756
    %1237 = vmatprep.subr.mxu0 0.0
    %1238 = vmatpush1.msra.mxu0 %v757
    %1239 = vmatprep.subr.mxu0 0.0
    %1240 = vmatpush1.msra.mxu0 %v758
    %1241 = vmatprep.subr.mxu0 0.0
    %1242 = vmatpush1.msra.mxu0 0.0
    %1243 = vmatprep.subr.mxu0 0.0
    %1244 = vmatpush1.msra.mxu0 0.0
    %1245 = vmatprep.subr.mxu0 0.0
    %1246 = vmatpush1.msra.mxu0 0.0
    %1247 = vmatprep.subr.mxu0 0.0
    %1248 = vmatpush1.msra.mxu0 0.0
    %1249 = vmatprep.subr.mxu0 0.0
    %1250 = vmatpush1.msra.mxu0 0.0
    %1251 = vmatprep.subr.mxu0 0.0
    %1252 = vmatpush1.msra.mxu0 0.0
    %1253 = vmatprep.subr.mxu0 0.0
    %1254 = vmatpush1.msra.mxu0 0.0
    %1255 = vmatprep.subr.mxu0 0.0
    %1256 = vmatpush1.msra.mxu0 0.0
    %1257 = vmatprep.subr.mxu0 0.0
    %1258 = vmatpush1.msra.mxu0 0.0
    %1259 = vmatprep.subr.mxu0 0.0
    %1260 = vmatpush1.msra.mxu0 0.0
    %1261 = vmatprep.subr.mxu0 0.0
    %1262 = vmatpush1.msra.mxu0 0.0
    %1263 = vmatprep.subr.mxu0 0.0
    %1264 = vmatpush1.msra.mxu0 0.0
    %1265 = vmatprep.subr.mxu0 0.0
    %1266 = vmatpush1.msra.mxu0 0.0
    %1267 = vmatprep.subr.mxu0 0.0
    %1268 = vmatpush1.msra.mxu0 0.0
    %1269 = vmatprep.subr.mxu0 0.0
    %1270 = vmatpush1.msra.mxu0 0.0
    %1271 = vmatprep.subr.mxu0 0.0
    %1272 = vmatpush1.msra.mxu0 0.0
    %1273 = vmatprep.mubr.f32.mxu0 0.0
    %1274 = vmatmul.mubr.f32.gmra.mrb[0].mxu0 %v1207
    %v1275 = vpop.f32.mrb[0].mxu0
    %v1276 = vadd.f32 0.0, %v1275
    %v1277 = vpop.f32.mrb[0].mxu0
    %1278 = vdwg.mxu0
    %v1279 = vadd.f32 %v730, %v1276
    %v1280 = vxor.u32 %v1279, 2147483648
    %v1281 = vmul.f32 %v1280, 1.442695
    %v1282 = vpow.pop %v1281
    %v1283 = vadd.f32 %v1282, 1.0
    %v1284 = vrcp.pop %v1283
    %v1285 = vmul.f32 1.0, %v1284
    %v1286 = vtanh.pop %v1279
    %1287 = vrot.lane.b32.xlu0 %v1285, 96
    %v1288 = vpop.permute.xlu0 %1287
    %1289 = vrot.lane.b32.xlu0 %v1285, 64
    %v1290 = vpop.permute.xlu0 %1289
    %1291 = vrot.lane.b32.xlu0 %v1286, 32
    %v1292 = vpop.permute.xlu0 %1291
    %v1293 = vmul.f32 %v1288, %v1205
    %v1294 = vmul.f32 %v1285, %v1292
    %v1295 = vadd.f32 %v1293, %v1294
    %v1296 = vtanh.pop %v1295
    %v1297 = vmul.f32 %v1290, %v1296
    %1298 = vst [vmem:[#allocation2 + $0x28] sm:$0xff] %v1297
    %1299 = vmatprep.subr.mxu0 0.0
    %1300 = vmatpush1.msra.mxu0 %v743
    %1301 = vmatprep.subr.mxu0 0.0
    %1302 = vmatpush1.msra.mxu0 %v744
    %1303 = vmatprep.subr.mxu0 0.0
    %1304 = vmatpush1.msra.mxu0 %v745
    %1305 = vmatprep.subr.mxu0 0.0
    %1306 = vmatpush1.msra.mxu0 %v746
    %1307 = vmatprep.subr.mxu0 0.0
    %1308 = vmatpush1.msra.mxu0 %v747
    %1309 = vmatprep.subr.mxu0 0.0
    %1310 = vmatpush1.msra.mxu0 %v748
    %1311 = vmatprep.subr.mxu0 0.0
    %1312 = vmatpush1.msra.mxu0 %v749
    %1313 = vmatprep.subr.mxu0 0.0
    %1314 = vmatpush1.msra.mxu0 %v750
    %1315 = vmatprep.subr.mxu0 0.0
    %1316 = vmatpush1.msra.mxu0 %v751
    %1317 = vmatprep.subr.mxu0 0.0
    %1318 = vmatpush1.msra.mxu0 %v752
    %1319 = vmatprep.subr.mxu0 0.0
    %1320 = vmatpush1.msra.mxu0 %v753
    %1321 = vmatprep.subr.mxu0 0.0
    %1322 = vmatpush1.msra.mxu0 %v754
    %1323 = vmatprep.subr.mxu0 0.0
    %1324 = vmatpush1.msra.mxu0 %v755
    %1325 = vmatprep.subr.mxu0 0.0
    %1326 = vmatpush1.msra.mxu0 %v756
    %1327 = vmatprep.subr.mxu0 0.0
    %1328 = vmatpush1.msra.mxu0 %v757
    %1329 = vmatprep.subr.mxu0 0.0
    %1330 = vmatpush1.msra.mxu0 %v758
    %1331 = vmatprep.subr.mxu0 0.0
    %1332 = vmatpush1.msra.mxu0 0.0
    %1333 = vmatprep.subr.mxu0 0.0
    %1334 = vmatpush1.msra.mxu0 0.0
    %1335 = vmatprep.subr.mxu0 0.0
    %1336 = vmatpush1.msra.mxu0 0.0
    %1337 = vmatprep.subr.mxu0 0.0
    %1338 = vmatpush1.msra.mxu0 0.0
    %1339 = vmatprep.subr.mxu0 0.0
    %1340 = vmatpush1.msra.mxu0 0.0
    %1341 = vmatprep.subr.mxu0 0.0
    %1342 = vmatpush1.msra.mxu0 0.0
    %1343 = vmatprep.subr.mxu0 0.0
    %1344 = vmatpush1.msra.mxu0 0.0
    %1345 = vmatprep.subr.mxu0 0.0
    %1346 = vmatpush1.msra.mxu0 0.0
    %1347 = vmatprep.subr.mxu0 0.0
    %1348 = vmatpush1.msra.mxu0 0.0
    %1349 = vmatprep.subr.mxu0 0.0
    %1350 = vmatpush1.msra.mxu0 0.0
    %1351 = vmatprep.subr.mxu0 0.0
    %1352 = vmatpush1.msra.mxu0 0.0
    %1353 = vmatprep.subr.mxu0 0.0
    %1354 = vmatpush1.msra.mxu0 0.0
    %1355 = vmatprep.subr.mxu0 0.0
    %1356 = vmatpush1.msra.mxu0 0.0
    %1357 = vmatprep.subr.mxu0 0.0
    %1358 = vmatpush1.msra.mxu0 0.0
    %1359 = vmatprep.subr.mxu0 0.0
    %1360 = vmatpush1.msra.mxu0 0.0
    %1361 = vmatprep.subr.mxu0 0.0
    %1362 = vmatpush1.msra.mxu0 0.0
    %1363 = vmatprep.mubr.f32.mxu0 0.0
    %1364 = vmatmul.mubr.f32.gmra.mrb[0].mxu0 %v1297
    %v1365 = vpop.f32.mrb[0].mxu0
    %v1366 = vadd.f32 0.0, %v1365
    %v1367 = vpop.f32.mrb[0].mxu0
    %1368 = vdwg.mxu0
    %v1369 = vadd.f32 %v735, %v1366
    %v1370 = vxor.u32 %v1369, 2147483648
    %v1371 = vmul.f32 %v1370, 1.442695
    %v1372 = vpow.pop %v1371
    %v1373 = vadd.f32 %v1372, 1.0
    %v1374 = vrcp.pop %v1373
    %v1375 = vmul.f32 1.0, %v1374
    %v1376 = vtanh.pop %v1369
    %1377 = vrot.lane.b32.xlu0 %v1375, 96
    %v1378 = vpop.permute.xlu0 %1377
    %1379 = vrot.lane.b32.xlu0 %v1375, 64
    %v1380 = vpop.permute.xlu0 %1379
    %1381 = vrot.lane.b32.xlu0 %v1376, 32
    %v1382 = vpop.permute.xlu0 %1381
    %v1383 = vmul.f32 %v1378, %v1295
    %v1384 = vmul.f32 %v1375, %v1382
    %v1385 = vadd.f32 %v1383, %v1384
    %v1386 = vtanh.pop %v1385
    %v1387 = vmul.f32 %v1380, %v1386
    %1388 = vst [vmem:[#allocation2 + $0x30] sm:$0xff] %v1387
    %1389 = vmatprep.subr.mxu0 0.0
    %1390 = vmatpush1.msra.mxu0 %v743
    %1391 = vmatprep.subr.mxu0 0.0
    %1392 = vmatpush1.msra.mxu0 %v744
    %1393 = vmatprep.subr.mxu0 0.0
    %1394 = vmatpush1.msra.mxu0 %v745
    %1395 = vmatprep.subr.mxu0 0.0
    %1396 = vmatpush1.msra.mxu0 %v746
    %1397 = vmatprep.subr.mxu0 0.0
    %1398 = vmatpush1.msra.mxu0 %v747
    %1399 = vmatprep.subr.mxu0 0.0
    %1400 = vmatpush1.msra.mxu0 %v748
    %1401 = vmatprep.subr.mxu0 0.0
    %1402 = vmatpush1.msra.mxu0 %v749
    %1403 = vmatprep.subr.mxu0 0.0
    %1404 = vmatpush1.msra.mxu0 %v750
    %1405 = vmatprep.subr.mxu0 0.0
    %1406 = vmatpush1.msra.mxu0 %v751
    %1407 = vmatprep.subr.mxu0 0.0
    %1408 = vmatpush1.msra.mxu0 %v752
    %1409 = vmatprep.subr.mxu0 0.0
    %1410 = vmatpush1.msra.mxu0 %v753
    %1411 = vmatprep.subr.mxu0 0.0
    %1412 = vmatpush1.msra.mxu0 %v754
    %1413 = vmatprep.subr.mxu0 0.0
    %1414 = vmatpush1.msra.mxu0 %v755
    %1415 = vmatprep.subr.mxu0 0.0
    %1416 = vmatpush1.msra.mxu0 %v756
    %1417 = vmatprep.subr.mxu0 0.0
    %1418 = vmatpush1.msra.mxu0 %v757
    %1419 = vmatprep.subr.mxu0 0.0
    %1420 = vmatpush1.msra.mxu0 %v758
    %1421 = vmatprep.subr.mxu0 0.0
    %1422 = vmatpush1.msra.mxu0 0.0
    %1423 = vmatprep.subr.mxu0 0.0
    %1424 = vmatpush1.msra.mxu0 0.0
    %1425 = vmatprep.subr.mxu0 0.0
    %1426 = vmatpush1.msra.mxu0 0.0
    %1427 = vmatprep.subr.mxu0 0.0
    %1428 = vmatpush1.msra.mxu0 0.0
    %1429 = vmatprep.subr.mxu0 0.0
    %1430 = vmatpush1.msra.mxu0 0.0
    %1431 = vmatprep.subr.mxu0 0.0
    %1432 = vmatpush1.msra.mxu0 0.0
    %1433 = vmatprep.subr.mxu0 0.0
    %1434 = vmatpush1.msra.mxu0 0.0
    %1435 = vmatprep.subr.mxu0 0.0
    %1436 = vmatpush1.msra.mxu0 0.0
    %1437 = vmatprep.subr.mxu0 0.0
    %1438 = vmatpush1.msra.mxu0 0.0
    %1439 = vmatprep.subr.mxu0 0.0
    %1440 = vmatpush1.msra.mxu0 0.0
    %1441 = vmatprep.subr.mxu0 0.0
    %1442 = vmatpush1.msra.mxu0 0.0
    %1443 = vmatprep.subr.mxu0 0.0
    %1444 = vmatpush1.msra.mxu0 0.0
    %1445 = vmatprep.subr.mxu0 0.0
    %1446 = vmatpush1.msra.mxu0 0.0
    %1447 = vmatprep.subr.mxu0 0.0
    %1448 = vmatpush1.msra.mxu0 0.0
    %1449 = vmatprep.subr.mxu0 0.0
    %1450 = vmatpush1.msra.mxu0 0.0
    %1451 = vmatprep.subr.mxu0 0.0
    %1452 = vmatpush1.msra.mxu0 0.0
    %1453 = vmatprep.mubr.f32.mxu0 0.0
    %1454 = vmatmul.mubr.f32.gmra.mrb[0].mxu0 %v1387
    %v1455 = vpop.f32.mrb[0].mxu0
    %v1456 = vadd.f32 0.0, %v1455
    %v1457 = vpop.f32.mrb[0].mxu0
    %1458 = vdwg.mxu0
    %v1459 = vadd.f32 %v740, %v1456
    %v1460 = vxor.u32 %v1459, 2147483648
    %v1461 = vmul.f32 %v1460, 1.442695
    %v1462 = vpow.pop %v1461
    %v1463 = vadd.f32 %v1462, 1.0
    %v1464 = vrcp.pop %v1463
    %v1465 = vmul.f32 1.0, %v1464
    %v1466 = vtanh.pop %v1459
    %1467 = vrot.lane.b32.xlu0 %v1465, 96
    %v1468 = vpop.permute.xlu0 %1467
    %1469 = vrot.lane.b32.xlu0 %v1465, 64
    %v1470 = vpop.permute.xlu0 %1469
    %1471 = vrot.lane.b32.xlu0 %v1466, 32
    %v1472 = vpop.permute.xlu0 %1471
    %v1473 = vmul.f32 %v1468, %v1385
    %v1474 = vmul.f32 %v1465, %v1472
    %v1475 = vadd.f32 %v1473, %v1474
    %v1476 = vtanh.pop %v1475
    %v1477 = vmul.f32 %v1470, %v1476
    %1478 = vst [vmem:[#allocation2 + $0x38] sm:$0xff] %v1477
    %v1479 = vld [vmem:[#allocation2] sm:$0xff]
    %v1480 = vld [vmem:[#allocation2 + $0x8] sm:$0xff]
    %v1481 = vld [vmem:[#allocation2 + $0x10] sm:$0xff]
    %v1482 = vld [vmem:[#allocation2 + $0x18] sm:$0xff]
    %v1483 = vld [vmem:[#allocation2 + $0x20] sm:$0xff]
    %v1484 = vld [vmem:[#allocation2 + $0x28] sm:$0xff]
    %v1485 = vld [vmem:[#allocation2 + $0x30] sm:$0xff]
    %v1486 = vld [vmem:[#allocation2 + $0x38] sm:$0xff]
    %v1487 = vld [vmem:[%s10] sm:$0xff]
    %v1488 = vld [vmem:[%s10 + $0x8] sm:$0xff]
    %v1489 = vld [vmem:[%s10 + $0x10] sm:$0xff]
    %v1490 = vld [vmem:[%s10 + $0x18] sm:$0xff]
    %v1491 = vld [vmem:[%s10 + $0x20] sm:$0xff]
    %v1492 = vld [vmem:[%s10 + $0x28] sm:$0xff]
    %v1493 = vld [vmem:[%s10 + $0x30] sm:$0xff]
    %v1494 = vld [vmem:[%s10 + $0x38] sm:$0xff]
    %v1495 = vld [vmem:[%s10 + $0x40] sm:$0xff]
    %v1496 = vld [vmem:[%s10 + $0x48] sm:$0xff]
    %v1497 = vld [vmem:[%s10 + $0x50] sm:$0xff]
    %v1498 = vld [vmem:[%s10 + $0x58] sm:$0xff]
    %v1499 = vld [vmem:[%s10 + $0x60] sm:$0xff]
    %v1500 = vld [vmem:[%s10 + $0x68] sm:$0xff]
    %v1501 = vld [vmem:[%s10 + $0x70] sm:$0xff]
    %v1502 = vld [vmem:[%s10 + $0x78] sm:$0xff]
    %v1503 = vld [vmem:[#allocation12] sm:$0x1]
    %v1505 = vlaneseq
    %v1506 = vshrl.u32 %v1505, 7
    %v1507 = vsub.s32 0, %v1506
    %v1508 = vrot.slane %v1503, %v1507
    %1510 = vmatprep.subr.mxu0 0.0
    %1511 = vmatpush1.msra.mxu0 %v1487
    %1512 = vmatprep.subr.mxu0 0.0
    %1513 = vmatpush1.msra.mxu0 %v1488
    %1514 = vmatprep.subr.mxu0 0.0
    %1515 = vmatpush1.msra.mxu0 %v1489
    %1516 = vmatprep.subr.mxu0 0.0
    %1517 = vmatpush1.msra.mxu0 %v1490
    %1518 = vmatprep.subr.mxu0 0.0
    %1519 = vmatpush1.msra.mxu0 %v1491
    %1520 = vmatprep.subr.mxu0 0.0
    %1521 = vmatpush1.msra.mxu0 %v1492
    %1522 = vmatprep.subr.mxu0 0.0
    %1523 = vmatpush1.msra.mxu0 %v1493
    %1524 = vmatprep.subr.mxu0 0.0
    %1525 = vmatpush1.msra.mxu0 %v1494
    %1526 = vmatprep.subr.mxu0 0.0
    %1527 = vmatpush1.msra.mxu0 %v1495
    %1528 = vmatprep.subr.mxu0 0.0
    %1529 = vmatpush1.msra.mxu0 %v1496
    %1530 = vmatprep.subr.mxu0 0.0
    %1531 = vmatpush1.msra.mxu0 %v1497
    %1532 = vmatprep.subr.mxu0 0.0
    %1533 = vmatpush1.msra.mxu0 %v1498
    %1534 = vmatprep.subr.mxu0 0.0
    %1535 = vmatpush1.msra.mxu0 %v1499
    %1536 = vmatprep.subr.mxu0 0.0
    %1537 = vmatpush1.msra.mxu0 %v1500
    %1538 = vmatprep.subr.mxu0 0.0
    %1539 = vmatpush1.msra.mxu0 %v1501
    %1540 = vmatprep.subr.mxu0 0.0
    %1541 = vmatpush1.msra.mxu0 %v1502
    %1542 = vmatprep.subr.mxu0 0.0
    %1543 = vmatpush1.msra.mxu0 0.0
    %1544 = vmatprep.subr.mxu0 0.0
    %1545 = vmatpush1.msra.mxu0 0.0
    %1546 = vmatprep.subr.mxu0 0.0
    %1547 = vmatpush1.msra.mxu0 0.0
    %1548 = vmatprep.subr.mxu0 0.0
    %1549 = vmatpush1.msra.mxu0 0.0
    %1550 = vmatprep.subr.mxu0 0.0
    %1551 = vmatpush1.msra.mxu0 0.0
    %1552 = vmatprep.subr.mxu0 0.0
    %1553 = vmatpush1.msra.mxu0 0.0
    %1554 = vmatprep.subr.mxu0 0.0
    %1555 = vmatpush1.msra.mxu0 0.0
    %1556 = vmatprep.subr.mxu0 0.0
    %1557 = vmatpush1.msra.mxu0 0.0
    %1558 = vmatprep.subr.mxu0 0.0
    %1559 = vmatpush1.msra.mxu0 0.0
    %1560 = vmatprep.subr.mxu0 0.0
    %1561 = vmatpush1.msra.mxu0 0.0
    %1562 = vmatprep.subr.mxu0 0.0
    %1563 = vmatpush1.msra.mxu0 0.0
    %1564 = vmatprep.subr.mxu0 0.0
    %1565 = vmatpush1.msra.mxu0 0.0
    %1566 = vmatprep.subr.mxu0 0.0
    %1567 = vmatpush1.msra.mxu0 0.0
    %1568 = vmatprep.subr.mxu0 0.0
    %1569 = vmatpush1.msra.mxu0 0.0
    %1570 = vmatprep.subr.mxu0 0.0
    %1571 = vmatpush1.msra.mxu0 0.0
    %1572 = vmatprep.subr.mxu0 0.0
    %1573 = vmatpush1.msra.mxu0 0.0
    %1574 = vmatprep.mubr.f32.mxu0 0.0
    %1575 = vmatmul.mubr.f32.gmra.mrb[0].mxu0 %v1479
    %v1576 = vpop.f32.mrb[0].mxu0
    %v1577 = vadd.f32 %v1508, %v1576
    %v1578 = vpop.f32.mrb[0].mxu0
    %1579 = vmatprep.mubr.f32.mxu0 0.0
    %1580 = vmatmul.mubr.f32.gmra.mrb[0].mxu0 %v1480
    %v1581 = vpop.f32.mrb[0].mxu0
    %v1582 = vadd.f32 %v1508, %v1581
    %v1583 = vpop.f32.mrb[0].mxu0
    %1584 = vmatprep.mubr.f32.mxu0 0.0
    %1585 = vmatmul.mubr.f32.gmra.mrb[0].mxu0 %v1481
    %v1586 = vpop.f32.mrb[0].mxu0
    %v1587 = vadd.f32 %v1508, %v1586
    %v1588 = vpop.f32.mrb[0].mxu0
    %1589 = vmatprep.mubr.f32.mxu0 0.0
    %1590 = vmatmul.mubr.f32.gmra.mrb[0].mxu0 %v1482
    %v1591 = vpop.f32.mrb[0].mxu0
    %v1592 = vadd.f32 %v1508, %v1591
    %v1593 = vpop.f32.mrb[0].mxu0
    %1594 = vmatprep.mubr.f32.mxu0 0.0
    %1595 = vmatmul.mubr.f32.gmra.mrb[0].mxu0 %v1483
    %v1596 = vpop.f32.mrb[0].mxu0
    %v1597 = vadd.f32 %v1508, %v1596
    %v1598 = vpop.f32.mrb[0].mxu0
    %1599 = vmatprep.mubr.f32.mxu0 0.0
    %1600 = vmatmul.mubr.f32.gmra.mrb[0].mxu0 %v1484
    %v1601 = vpop.f32.mrb[0].mxu0
    %v1602 = vadd.f32 %v1508, %v1601
    %v1603 = vpop.f32.mrb[0].mxu0
    %1604 = vmatprep.mubr.f32.mxu0 0.0
    %1605 = vmatmul.mubr.f32.gmra.mrb[0].mxu0 %v1485
    %v1606 = vpop.f32.mrb[0].mxu0
    %v1607 = vadd.f32 %v1508, %v1606
    %v1608 = vpop.f32.mrb[0].mxu0
    %1609 = vmatprep.mubr.f32.mxu0 0.0
    %1610 = vmatmul.mubr.f32.gmra.mrb[0].mxu0 %v1486
    %v1611 = vpop.f32.mrb[0].mxu0
    %v1612 = vadd.f32 %v1508, %v1611
    %v1613 = vpop.f32.mrb[0].mxu0
    %1614 = vdwg.mxu0
    %v1615 = vld [vmem:[%s11] sm:$0xff]
    %v1616 = vld [vmem:[%s11 + $0x8] sm:$0xff]
    %v1617 = vld [vmem:[%s11 + $0x10] sm:$0xff]
    %v1618 = vld [vmem:[%s11 + $0x18] sm:$0xff]
    %v1619 = vld [vmem:[%s11 + $0x20] sm:$0xff]
    %v1620 = vld [vmem:[%s11 + $0x28] sm:$0xff]
    %v1621 = vld [vmem:[%s11 + $0x30] sm:$0xff]
    %v1622 = vld [vmem:[%s11 + $0x38] sm:$0xff]
    %v1623 = vld [vmem:[%s11 + $0x40] sm:$0xff]
    %v1624 = vld [vmem:[%s11 + $0x48] sm:$0xff]
    %v1625 = vld [vmem:[%s11 + $0x50] sm:$0xff]
    %v1626 = vld [vmem:[%s11 + $0x58] sm:$0xff]
    %v1627 = vld [vmem:[%s11 + $0x60] sm:$0xff]
    %v1628 = vld [vmem:[%s11 + $0x68] sm:$0xff]
    %v1629 = vld [vmem:[%s11 + $0x70] sm:$0xff]
    %v1630 = vld [vmem:[%s11 + $0x78] sm:$0xff]
    %1631 = vmatprep.subr.mxu0 0.0
    %1632 = vmatpush1.msra.mxu0 %v1615
    %1633 = vmatprep.subr.mxu0 0.0
    %1634 = vmatpush1.msra.mxu0 %v1616
    %1635 = vmatprep.subr.mxu0 0.0
    %1636 = vmatpush1.msra.mxu0 %v1617
    %1637 = vmatprep.subr.mxu0 0.0
    %1638 = vmatpush1.msra.mxu0 %v1618
    %1639 = vmatprep.subr.mxu0 0.0
    %1640 = vmatpush1.msra.mxu0 %v1619
    %1641 = vmatprep.subr.mxu0 0.0
    %1642 = vmatpush1.msra.mxu0 %v1620
    %1643 = vmatprep.subr.mxu0 0.0
    %1644 = vmatpush1.msra.mxu0 %v1621
    %1645 = vmatprep.subr.mxu0 0.0
    %1646 = vmatpush1.msra.mxu0 %v1622
    %1647 = vmatprep.subr.mxu0 0.0
    %1648 = vmatpush1.msra.mxu0 %v1623
    %1649 = vmatprep.subr.mxu0 0.0
    %1650 = vmatpush1.msra.mxu0 %v1624
    %1651 = vmatprep.subr.mxu0 0.0
    %1652 = vmatpush1.msra.mxu0 %v1625
    %1653 = vmatprep.subr.mxu0 0.0
    %1654 = vmatpush1.msra.mxu0 %v1626
    %1655 = vmatprep.subr.mxu0 0.0
    %1656 = vmatpush1.msra.mxu0 %v1627
    %1657 = vmatprep.subr.mxu0 0.0
    %1658 = vmatpush1.msra.mxu0 %v1628
    %1659 = vmatprep.subr.mxu0 0.0
    %1660 = vmatpush1.msra.mxu0 %v1629
    %1661 = vmatprep.subr.mxu0 0.0
    %1662 = vmatpush1.msra.mxu0 %v1630
    %1663 = vmatprep.subr.mxu0 0.0
    %1664 = vmatpush1.msra.mxu0 0.0
    %1665 = vmatprep.subr.mxu0 0.0
    %1666 = vmatpush1.msra.mxu0 0.0
    %1667 = vmatprep.subr.mxu0 0.0
    %1668 = vmatpush1.msra.mxu0 0.0
    %1669 = vmatprep.subr.mxu0 0.0
    %1670 = vmatpush1.msra.mxu0 0.0
    %1671 = vmatprep.subr.mxu0 0.0
    %1672 = vmatpush1.msra.mxu0 0.0
    %1673 = vmatprep.subr.mxu0 0.0
    %1674 = vmatpush1.msra.mxu0 0.0
    %1675 = vmatprep.subr.mxu0 0.0
    %1676 = vmatpush1.msra.mxu0 0.0
    %1677 = vmatprep.subr.mxu0 0.0
    %1678 = vmatpush1.msra.mxu0 0.0
    %1679 = vmatprep.subr.mxu0 0.0
    %1680 = vmatpush1.msra.mxu0 0.0
    %1681 = vmatprep.subr.mxu0 0.0
    %1682 = vmatpush1.msra.mxu0 0.0
    %1683 = vmatprep.subr.mxu0 0.0
    %1684 = vmatpush1.msra.mxu0 0.0
    %1685 = vmatprep.subr.mxu0 0.0
    %1686 = vmatpush1.msra.mxu0 0.0
    %1687 = vmatprep.subr.mxu0 0.0
    %1688 = vmatpush1.msra.mxu0 0.0
    %1689 = vmatprep.subr.mxu0 0.0
    %1690 = vmatpush1.msra.mxu0 0.0
    %1691 = vmatprep.subr.mxu0 0.0
    %1692 = vmatpush1.msra.mxu0 0.0
    %1693 = vmatprep.subr.mxu0 0.0
    %1694 = vmatpush1.msra.mxu0 0.0
    %1695 = vmatprep.mubr.f32.mxu0 0.0
    %1696 = vmatmul.mubr.f32.gmra.mrb[0].mxu0 0.0
    %v1697 = vpop.f32.mrb[0].mxu0
    %v1698 = vadd.f32 0.0, %v1697
    %v1699 = vpop.f32.mrb[0].mxu0
    %1700 = vdwg.mxu0
    %v1701 = vadd.f32 %v1577, %v1698
    %v1702 = vxor.u32 %v1701, 2147483648
    %v1703 = vmul.f32 %v1702, 1.442695
    %v1704 = vpow.pop %v1703
    %v1705 = vadd.f32 %v1704, 1.0
    %v1706 = vrcp.pop %v1705
    %v1707 = vmul.f32 1.0, %v1706
    %v1708 = vtanh.pop %v1701
    %1709 = vrot.lane.b32.xlu0 %v1707, 96
    %v1710 = vpop.permute.xlu0 %1709
    %1711 = vrot.lane.b32.xlu0 %v1707, 64
    %v1712 = vpop.permute.xlu0 %1711
    %1713 = vrot.lane.b32.xlu0 %v1708, 32
    %v1714 = vpop.permute.xlu0 %1713
    %v1715 = vmul.f32 %v1710, 0.0
    %v1716 = vmul.f32 %v1707, %v1714
    %v1717 = vadd.f32 %v1715, %v1716
    %v1718 = vtanh.pop %v1717
    %v1719 = vmul.f32 %v1712, %v1718
    %1720 = vst [vmem:[#allocation3] sm:$0xff] %v1719
    %1721 = vmatprep.subr.mxu0 0.0
    %1722 = vmatpush1.msra.mxu0 %v1615
    %1723 = vmatprep.subr.mxu0 0.0
    %1724 = vmatpush1.msra.mxu0 %v1616
    %1725 = vmatprep.subr.mxu0 0.0
    %1726 = vmatpush1.msra.mxu0 %v1617
    %1727 = vmatprep.subr.mxu0 0.0
    %1728 = vmatpush1.msra.mxu0 %v1618
    %1729 = vmatprep.subr.mxu0 0.0
    %1730 = vmatpush1.msra.mxu0 %v1619
    %1731 = vmatprep.subr.mxu0 0.0
    %1732 = vmatpush1.msra.mxu0 %v1620
    %1733 = vmatprep.subr.mxu0 0.0
    %1734 = vmatpush1.msra.mxu0 %v1621
    %1735 = vmatprep.subr.mxu0 0.0
    %1736 = vmatpush1.msra.mxu0 %v1622
    %1737 = vmatprep.subr.mxu0 0.0
    %1738 = vmatpush1.msra.mxu0 %v1623
    %1739 = vmatprep.subr.mxu0 0.0
    %1740 = vmatpush1.msra.mxu0 %v1624
    %1741 = vmatprep.subr.mxu0 0.0
    %1742 = vmatpush1.msra.mxu0 %v1625
    %1743 = vmatprep.subr.mxu0 0.0
    %1744 = vmatpush1.msra.mxu0 %v1626
    %1745 = vmatprep.subr.mxu0 0.0
    %1746 = vmatpush1.msra.mxu0 %v1627
    %1747 = vmatprep.subr.mxu0 0.0
    %1748 = vmatpush1.msra.mxu0 %v1628
    %1749 = vmatprep.subr.mxu0 0.0
    %1750 = vmatpush1.msra.mxu0 %v1629
    %1751 = vmatprep.subr.mxu0 0.0
    %1752 = vmatpush1.msra.mxu0 %v1630
    %1753 = vmatprep.subr.mxu0 0.0
    %1754 = vmatpush1.msra.mxu0 0.0
    %1755 = vmatprep.subr.mxu0 0.0
    %1756 = vmatpush1.msra.mxu0 0.0
    %1757 = vmatprep.subr.mxu0 0.0
    %1758 = vmatpush1.msra.mxu0 0.0
    %1759 = vmatprep.subr.mxu0 0.0
    %1760 = vmatpush1.msra.mxu0 0.0
    %1761 = vmatprep.subr.mxu0 0.0
    %1762 = vmatpush1.msra.mxu0 0.0
    %1763 = vmatprep.subr.mxu0 0.0
    %1764 = vmatpush1.msra.mxu0 0.0
    %1765 = vmatprep.subr.mxu0 0.0
    %1766 = vmatpush1.msra.mxu0 0.0
    %1767 = vmatprep.subr.mxu0 0.0
    %1768 = vmatpush1.msra.mxu0 0.0
    %1769 = vmatprep.subr.mxu0 0.0
    %1770 = vmatpush1.msra.mxu0 0.0
    %1771 = vmatprep.subr.mxu0 0.0
    %1772 = vmatpush1.msra.mxu0 0.0
    %1773 = vmatprep.subr.mxu0 0.0
    %1774 = vmatpush1.msra.mxu0 0.0
    %1775 = vmatprep.subr.mxu0 0.0
    %1776 = vmatpush1.msra.mxu0 0.0
    %1777 = vmatprep.subr.mxu0 0.0
    %1778 = vmatpush1.msra.mxu0 0.0
    %1779 = vmatprep.subr.mxu0 0.0
    %1780 = vmatpush1.msra.mxu0 0.0
    %1781 = vmatprep.subr.mxu0 0.0
    %1782 = vmatpush1.msra.mxu0 0.0
    %1783 = vmatprep.subr.mxu0 0.0
    %1784 = vmatpush1.msra.mxu0 0.0
    %1785 = vmatprep.mubr.f32.mxu0 0.0
    %1786 = vmatmul.mubr.f32.gmra.mrb[0].mxu0 %v1719
    %v1787 = vpop.f32.mrb[0].mxu0
    %v1788 = vadd.f32 0.0, %v1787
    %v1789 = vpop.f32.mrb[0].mxu0
    %1790 = vdwg.mxu0
    %v1791 = vadd.f32 %v1582, %v1788
    %v1792 = vxor.u32 %v1791, 2147483648
    %v1793 = vmul.f32 %v1792, 1.442695
    %v1794 = vpow.pop %v1793
    %v1795 = vadd.f32 %v1794, 1.0
    %v1796 = vrcp.pop %v1795
    %v1797 = vmul.f32 1.0, %v1796
    %v1798 = vtanh.pop %v1791
    %1799 = vrot.lane.b32.xlu0 %v1797, 96
    %v1800 = vpop.permute.xlu0 %1799
    %1801 = vrot.lane.b32.xlu0 %v1797, 64
    %v1802 = vpop.permute.xlu0 %1801
    %1803 = vrot.lane.b32.xlu0 %v1798, 32
    %v1804 = vpop.permute.xlu0 %1803
    %v1805 = vmul.f32 %v1800, %v1717
    %v1806 = vmul.f32 %v1797, %v1804
    %v1807 = vadd.f32 %v1805, %v1806
    %v1808 = vtanh.pop %v1807
    %v1809 = vmul.f32 %v1802, %v1808
    %1810 = vst [vmem:[#allocation3 + $0x8] sm:$0xff] %v1809
    %1811 = vmatprep.subr.mxu0 0.0
    %1812 = vmatpush1.msra.mxu0 %v1615
    %1813 = vmatprep.subr.mxu0 0.0
    %1814 = vmatpush1.msra.mxu0 %v1616
    %1815 = vmatprep.subr.mxu0 0.0
    %1816 = vmatpush1.msra.mxu0 %v1617
    %1817 = vmatprep.subr.mxu0 0.0
    %1818 = vmatpush1.msra.mxu0 %v1618
    %1819 = vmatprep.subr.mxu0 0.0
    %1820 = vmatpush1.msra.mxu0 %v1619
    %1821 = vmatprep.subr.mxu0 0.0
    %1822 = vmatpush1.msra.mxu0 %v1620
    %1823 = vmatprep.subr.mxu0 0.0
    %1824 = vmatpush1.msra.mxu0 %v1621
    %1825 = vmatprep.subr.mxu0 0.0
    %1826 = vmatpush1.msra.mxu0 %v1622
    %1827 = vmatprep.subr.mxu0 0.0
    %1828 = vmatpush1.msra.mxu0 %v1623
    %1829 = vmatprep.subr.mxu0 0.0
    %1830 = vmatpush1.msra.mxu0 %v1624
    %1831 = vmatprep.subr.mxu0 0.0
    %1832 = vmatpush1.msra.mxu0 %v1625
    %1833 = vmatprep.subr.mxu0 0.0
    %1834 = vmatpush1.msra.mxu0 %v1626
    %1835 = vmatprep.subr.mxu0 0.0
    %1836 = vmatpush1.msra.mxu0 %v1627
    %1837 = vmatprep.subr.mxu0 0.0
    %1838 = vmatpush1.msra.mxu0 %v1628
    %1839 = vmatprep.subr.mxu0 0.0
    %1840 = vmatpush1.msra.mxu0 %v1629
    %1841 = vmatprep.subr.mxu0 0.0
    %1842 = vmatpush1.msra.mxu0 %v1630
    %1843 = vmatprep.subr.mxu0 0.0
    %1844 = vmatpush1.msra.mxu0 0.0
    %1845 = vmatprep.subr.mxu0 0.0
    %1846 = vmatpush1.msra.mxu0 0.0
    %1847 = vmatprep.subr.mxu0 0.0
    %1848 = vmatpush1.msra.mxu0 0.0
    %1849 = vmatprep.subr.mxu0 0.0
    %1850 = vmatpush1.msra.mxu0 0.0
    %1851 = vmatprep.subr.mxu0 0.0
    %1852 = vmatpush1.msra.mxu0 0.0
    %1853 = vmatprep.subr.mxu0 0.0
    %1854 = vmatpush1.msra.mxu0 0.0
    %1855 = vmatprep.subr.mxu0 0.0
    %1856 = vmatpush1.msra.mxu0 0.0
    %1857 = vmatprep.subr.mxu0 0.0
    %1858 = vmatpush1.msra.mxu0 0.0
    %1859 = vmatprep.subr.mxu0 0.0
    %1860 = vmatpush1.msra.mxu0 0.0
    %1861 = vmatprep.subr.mxu0 0.0
    %1862 = vmatpush1.msra.mxu0 0.0
    %1863 = vmatprep.subr.mxu0 0.0
    %1864 = vmatpush1.msra.mxu0 0.0
    %1865 = vmatprep.subr.mxu0 0.0
    %1866 = vmatpush1.msra.mxu0 0.0
    %1867 = vmatprep.subr.mxu0 0.0
    %1868 = vmatpush1.msra.mxu0 0.0
    %1869 = vmatprep.subr.mxu0 0.0
    %1870 = vmatpush1.msra.mxu0 0.0
    %1871 = vmatprep.subr.mxu0 0.0
    %1872 = vmatpush1.msra.mxu0 0.0
    %1873 = vmatprep.subr.mxu0 0.0
    %1874 = vmatpush1.msra.mxu0 0.0
    %1875 = vmatprep.mubr.f32.mxu0 0.0
    %1876 = vmatmul.mubr.f32.gmra.mrb[0].mxu0 %v1809
    %v1877 = vpop.f32.mrb[0].mxu0
    %v1878 = vadd.f32 0.0, %v1877
    %v1879 = vpop.f32.mrb[0].mxu0
    %1880 = vdwg.mxu0
    %v1881 = vadd.f32 %v1587, %v1878
    %v1882 = vxor.u32 %v1881, 2147483648
    %v1883 = vmul.f32 %v1882, 1.442695
    %v1884 = vpow.pop %v1883
    %v1885 = vadd.f32 %v1884, 1.0
    %v1886 = vrcp.pop %v1885
    %v1887 = vmul.f32 1.0, %v1886
    %v1888 = vtanh.pop %v1881
    %1889 = vrot.lane.b32.xlu0 %v1887, 96
    %v1890 = vpop.permute.xlu0 %1889
    %1891 = vrot.lane.b32.xlu0 %v1887, 64
    %v1892 = vpop.permute.xlu0 %1891
    %1893 = vrot.lane.b32.xlu0 %v1888, 32
    %v1894 = vpop.permute.xlu0 %1893
    %v1895 = vmul.f32 %v1890, %v1807
    %v1896 = vmul.f32 %v1887, %v1894
    %v1897 = vadd.f32 %v1895, %v1896
    %v1898 = vtanh.pop %v1897
    %v1899 = vmul.f32 %v1892, %v1898
    %1900 = vst [vmem:[#allocation3 + $0x10] sm:$0xff] %v1899
    %1901 = vmatprep.subr.mxu0 0.0
    %1902 = vmatpush1.msra.mxu0 %v1615
    %1903 = vmatprep.subr.mxu0 0.0
    %1904 = vmatpush1.msra.mxu0 %v1616
    %1905 = vmatprep.subr.mxu0 0.0
    %1906 = vmatpush1.msra.mxu0 %v1617
    %1907 = vmatprep.subr.mxu0 0.0
    %1908 = vmatpush1.msra.mxu0 %v1618
    %1909 = vmatprep.subr.mxu0 0.0
    %1910 = vmatpush1.msra.mxu0 %v1619
    %1911 = vmatprep.subr.mxu0 0.0
    %1912 = vmatpush1.msra.mxu0 %v1620
    %1913 = vmatprep.subr.mxu0 0.0
    %1914 = vmatpush1.msra.mxu0 %v1621
    %1915 = vmatprep.subr.mxu0 0.0
    %1916 = vmatpush1.msra.mxu0 %v1622
    %1917 = vmatprep.subr.mxu0 0.0
    %1918 = vmatpush1.msra.mxu0 %v1623
    %1919 = vmatprep.subr.mxu0 0.0
    %1920 = vmatpush1.msra.mxu0 %v1624
    %1921 = vmatprep.subr.mxu0 0.0
    %1922 = vmatpush1.msra.mxu0 %v1625
    %1923 = vmatprep.subr.mxu0 0.0
    %1924 = vmatpush1.msra.mxu0 %v1626
    %1925 = vmatprep.subr.mxu0 0.0
    %1926 = vmatpush1.msra.mxu0 %v1627
    %1927 = vmatprep.subr.mxu0 0.0
    %1928 = vmatpush1.msra.mxu0 %v1628
    %1929 = vmatprep.subr.mxu0 0.0
    %1930 = vmatpush1.msra.mxu0 %v1629
    %1931 = vmatprep.subr.mxu0 0.0
    %1932 = vmatpush1.msra.mxu0 %v1630
    %1933 = vmatprep.subr.mxu0 0.0
    %1934 = vmatpush1.msra.mxu0 0.0
    %1935 = vmatprep.subr.mxu0 0.0
    %1936 = vmatpush1.msra.mxu0 0.0
    %1937 = vmatprep.subr.mxu0 0.0
    %1938 = vmatpush1.msra.mxu0 0.0
    %1939 = vmatprep.subr.mxu0 0.0
    %1940 = vmatpush1.msra.mxu0 0.0
    %1941 = vmatprep.subr.mxu0 0.0
    %1942 = vmatpush1.msra.mxu0 0.0
    %1943 = vmatprep.subr.mxu0 0.0
    %1944 = vmatpush1.msra.mxu0 0.0
    %1945 = vmatprep.subr.mxu0 0.0
    %1946 = vmatpush1.msra.mxu0 0.0
    %1947 = vmatprep.subr.mxu0 0.0
    %1948 = vmatpush1.msra.mxu0 0.0
    %1949 = vmatprep.subr.mxu0 0.0
    %1950 = vmatpush1.msra.mxu0 0.0
    %1951 = vmatprep.subr.mxu0 0.0
    %1952 = vmatpush1.msra.mxu0 0.0
    %1953 = vmatprep.subr.mxu0 0.0
    %1954 = vmatpush1.msra.mxu0 0.0
    %1955 = vmatprep.subr.mxu0 0.0
    %1956 = vmatpush1.msra.mxu0 0.0
    %1957 = vmatprep.subr.mxu0 0.0
    %1958 = vmatpush1.msra.mxu0 0.0
    %1959 = vmatprep.subr.mxu0 0.0
    %1960 = vmatpush1.msra.mxu0 0.0
    %1961 = vmatprep.subr.mxu0 0.0
    %1962 = vmatpush1.msra.mxu0 0.0
    %1963 = vmatprep.subr.mxu0 0.0
    %1964 = vmatpush1.msra.mxu0 0.0
    %1965 = vmatprep.mubr.f32.mxu0 0.0
    %1966 = vmatmul.mubr.f32.gmra.mrb[0].mxu0 %v1899
    %v1967 = vpop.f32.mrb[0].mxu0
    %v1968 = vadd.f32 0.0, %v1967
    %v1969 = vpop.f32.mrb[0].mxu0
    %1970 = vdwg.mxu0
    %v1971 = vadd.f32 %v1592, %v1968
    %v1972 = vxor.u32 %v1971, 2147483648
    %v1973 = vmul.f32 %v1972, 1.442695
    %v1974 = vpow.pop %v1973
    %v1975 = vadd.f32 %v1974, 1.0
    %v1976 = vrcp.pop %v1975
    %v1977 = vmul.f32 1.0, %v1976
    %v1978 = vtanh.pop %v1971
    %1979 = vrot.lane.b32.xlu0 %v1977, 96
    %v1980 = vpop.permute.xlu0 %1979
    %1981 = vrot.lane.b32.xlu0 %v1977, 64
    %v1982 = vpop.permute.xlu0 %1981
    %1983 = vrot.lane.b32.xlu0 %v1978, 32
    %v1984 = vpop.permute.xlu0 %1983
    %v1985 = vmul.f32 %v1980, %v1897
    %v1986 = vmul.f32 %v1977, %v1984
    %v1987 = vadd.f32 %v1985, %v1986
    %v1988 = vtanh.pop %v1987
    %v1989 = vmul.f32 %v1982, %v1988
    %1990 = vst [vmem:[#allocation3 + $0x18] sm:$0xff] %v1989
    %1991 = vmatprep.subr.mxu0 0.0
    %1992 = vmatpush1.msra.mxu0 %v1615
    %1993 = vmatprep.subr.mxu0 0.0
    %1994 = vmatpush1.msra.mxu0 %v1616
    %1995 = vmatprep.subr.mxu0 0.0
    %1996 = vmatpush1.msra.mxu0 %v1617
    %1997 = vmatprep.subr.mxu0 0.0
    %1998 = vmatpush1.msra.mxu0 %v1618
    %1999 = vmatprep.subr.mxu0 0.0
    %2000 = vmatpush1.msra.mxu0 %v1619
    %2001 = vmatprep.subr.mxu0 0.0
    %2002 = vmatpush1.msra.mxu0 %v1620
    %2003 = vmatprep.subr.mxu0 0.0
    %2004 = vmatpush1.msra.mxu0 %v1621
    %2005 = vmatprep.subr.mxu0 0.0
    %2006 = vmatpush1.msra.mxu0 %v1622
    %2007 = vmatprep.subr.mxu0 0.0
    %2008 = vmatpush1.msra.mxu0 %v1623
    %2009 = vmatprep.subr.mxu0 0.0
    %2010 = vmatpush1.msra.mxu0 %v1624
    %2011 = vmatprep.subr.mxu0 0.0
    %2012 = vmatpush1.msra.mxu0 %v1625
    %2013 = vmatprep.subr.mxu0 0.0
    %2014 = vmatpush1.msra.mxu0 %v1626
    %2015 = vmatprep.subr.mxu0 0.0
    %2016 = vmatpush1.msra.mxu0 %v1627
    %2017 = vmatprep.subr.mxu0 0.0
    %2018 = vmatpush1.msra.mxu0 %v1628
    %2019 = vmatprep.subr.mxu0 0.0
    %2020 = vmatpush1.msra.mxu0 %v1629
    %2021 = vmatprep.subr.mxu0 0.0
    %2022 = vmatpush1.msra.mxu0 %v1630
    %2023 = vmatprep.subr.mxu0 0.0
    %2024 = vmatpush1.msra.mxu0 0.0
    %2025 = vmatprep.subr.mxu0 0.0
    %2026 = vmatpush1.msra.mxu0 0.0
    %2027 = vmatprep.subr.mxu0 0.0
    %2028 = vmatpush1.msra.mxu0 0.0
    %2029 = vmatprep.subr.mxu0 0.0
    %2030 = vmatpush1.msra.mxu0 0.0
    %2031 = vmatprep.subr.mxu0 0.0
    %2032 = vmatpush1.msra.mxu0 0.0
    %2033 = vmatprep.subr.mxu0 0.0
    %2034 = vmatpush1.msra.mxu0 0.0
    %2035 = vmatprep.subr.mxu0 0.0
    %2036 = vmatpush1.msra.mxu0 0.0
    %2037 = vmatprep.subr.mxu0 0.0
    %2038 = vmatpush1.msra.mxu0 0.0
    %2039 = vmatprep.subr.mxu0 0.0
    %2040 = vmatpush1.msra.mxu0 0.0
    %2041 = vmatprep.subr.mxu0 0.0
    %2042 = vmatpush1.msra.mxu0 0.0
    %2043 = vmatprep.subr.mxu0 0.0
    %2044 = vmatpush1.msra.mxu0 0.0
    %2045 = vmatprep.subr.mxu0 0.0
    %2046 = vmatpush1.msra.mxu0 0.0
    %2047 = vmatprep.subr.mxu0 0.0
    %2048 = vmatpush1.msra.mxu0 0.0
    %2049 = vmatprep.subr.mxu0 0.0
    %2050 = vmatpush1.msra.mxu0 0.0
    %2051 = vmatprep.subr.mxu0 0.0
    %2052 = vmatpush1.msra.mxu0 0.0
    %2053 = vmatprep.subr.mxu0 0.0
    %2054 = vmatpush1.msra.mxu0 0.0
    %2055 = vmatprep.mubr.f32.mxu0 0.0
    %2056 = vmatmul.mubr.f32.gmra.mrb[0].mxu0 %v1989
    %v2057 = vpop.f32.mrb[0].mxu0
    %v2058 = vadd.f32 0.0, %v2057
    %v2059 = vpop.f32.mrb[0].mxu0
    %2060 = vdwg.mxu0
    %v2061 = vadd.f32 %v1597, %v2058
    %v2062 = vxor.u32 %v2061, 2147483648
    %v2063 = vmul.f32 %v2062, 1.442695
    %v2064 = vpow.pop %v2063
    %v2065 = vadd.f32 %v2064, 1.0
    %v2066 = vrcp.pop %v2065
    %v2067 = vmul.f32 1.0, %v2066
    %v2068 = vtanh.pop %v2061
    %2069 = vrot.lane.b32.xlu0 %v2067, 96
    %v2070 = vpop.permute.xlu0 %2069
    %2071 = vrot.lane.b32.xlu0 %v2067, 64
    %v2072 = vpop.permute.xlu0 %2071
    %2073 = vrot.lane.b32.xlu0 %v2068, 32
    %v2074 = vpop.permute.xlu0 %2073
    %v2075 = vmul.f32 %v2070, %v1987
    %v2076 = vmul.f32 %v2067, %v2074
    %v2077 = vadd.f32 %v2075, %v2076
    %v2078 = vtanh.pop %v2077
    %v2079 = vmul.f32 %v2072, %v2078
    %2080 = vst [vmem:[#allocation3 + $0x20] sm:$0xff] %v2079
    %2081 = vmatprep.subr.mxu0 0.0
    %2082 = vmatpush1.msra.mxu0 %v1615
    %2083 = vmatprep.subr.mxu0 0.0
    %2084 = vmatpush1.msra.mxu0 %v1616
    %2085 = vmatprep.subr.mxu0 0.0
    %2086 = vmatpush1.msra.mxu0 %v1617
    %2087 = vmatprep.subr.mxu0 0.0
    %2088 = vmatpush1.msra.mxu0 %v1618
    %2089 = vmatprep.subr.mxu0 0.0
    %2090 = vmatpush1.msra.mxu0 %v1619
    %2091 = vmatprep.subr.mxu0 0.0
    %2092 = vmatpush1.msra.mxu0 %v1620
    %2093 = vmatprep.subr.mxu0 0.0
    %2094 = vmatpush1.msra.mxu0 %v1621
    %2095 = vmatprep.subr.mxu0 0.0
    %2096 = vmatpush1.msra.mxu0 %v1622
    %2097 = vmatprep.subr.mxu0 0.0
    %2098 = vmatpush1.msra.mxu0 %v1623
    %2099 = vmatprep.subr.mxu0 0.0
    %2100 = vmatpush1.msra.mxu0 %v1624
    %2101 = vmatprep.subr.mxu0 0.0
    %2102 = vmatpush1.msra.mxu0 %v1625
    %2103 = vmatprep.subr.mxu0 0.0
    %2104 = vmatpush1.msra.mxu0 %v1626
    %2105 = vmatprep.subr.mxu0 0.0
    %2106 = vmatpush1.msra.mxu0 %v1627
    %2107 = vmatprep.subr.mxu0 0.0
    %2108 = vmatpush1.msra.mxu0 %v1628
    %2109 = vmatprep.subr.mxu0 0.0
    %2110 = vmatpush1.msra.mxu0 %v1629
    %2111 = vmatprep.subr.mxu0 0.0
    %2112 = vmatpush1.msra.mxu0 %v1630
    %2113 = vmatprep.subr.mxu0 0.0
    %2114 = vmatpush1.msra.mxu0 0.0
    %2115 = vmatprep.subr.mxu0 0.0
    %2116 = vmatpush1.msra.mxu0 0.0
    %2117 = vmatprep.subr.mxu0 0.0
    %2118 = vmatpush1.msra.mxu0 0.0
    %2119 = vmatprep.subr.mxu0 0.0
    %2120 = vmatpush1.msra.mxu0 0.0
    %2121 = vmatprep.subr.mxu0 0.0
    %2122 = vmatpush1.msra.mxu0 0.0
    %2123 = vmatprep.subr.mxu0 0.0
    %2124 = vmatpush1.msra.mxu0 0.0
    %2125 = vmatprep.subr.mxu0 0.0
    %2126 = vmatpush1.msra.mxu0 0.0
    %2127 = vmatprep.subr.mxu0 0.0
    %2128 = vmatpush1.msra.mxu0 0.0
    %2129 = vmatprep.subr.mxu0 0.0
    %2130 = vmatpush1.msra.mxu0 0.0
    %2131 = vmatprep.subr.mxu0 0.0
    %2132 = vmatpush1.msra.mxu0 0.0
    %2133 = vmatprep.subr.mxu0 0.0
    %2134 = vmatpush1.msra.mxu0 0.0
    %2135 = vmatprep.subr.mxu0 0.0
    %2136 = vmatpush1.msra.mxu0 0.0
    %2137 = vmatprep.subr.mxu0 0.0
    %2138 = vmatpush1.msra.mxu0 0.0
    %2139 = vmatprep.subr.mxu0 0.0
    %2140 = vmatpush1.msra.mxu0 0.0
    %2141 = vmatprep.subr.mxu0 0.0
    %2142 = vmatpush1.msra.mxu0 0.0
    %2143 = vmatprep.subr.mxu0 0.0
    %2144 = vmatpush1.msra.mxu0 0.0
    %2145 = vmatprep.mubr.f32.mxu0 0.0
    %2146 = vmatmul.mubr.f32.gmra.mrb[0].mxu0 %v2079
    %v2147 = vpop.f32.mrb[0].mxu0
    %v2148 = vadd.f32 0.0, %v2147
    %v2149 = vpop.f32.mrb[0].mxu0
    %2150 = vdwg.mxu0
    %v2151 = vadd.f32 %v1602, %v2148
    %v2152 = vxor.u32 %v2151, 2147483648
    %v2153 = vmul.f32 %v2152, 1.442695
    %v2154 = vpow.pop %v2153
    %v2155 = vadd.f32 %v2154, 1.0
    %v2156 = vrcp.pop %v2155
    %v2157 = vmul.f32 1.0, %v2156
    %v2158 = vtanh.pop %v2151
    %2159 = vrot.lane.b32.xlu0 %v2157, 96
    %v2160 = vpop.permute.xlu0 %2159
    %2161 = vrot.lane.b32.xlu0 %v2157, 64
    %v2162 = vpop.permute.xlu0 %2161
    %2163 = vrot.lane.b32.xlu0 %v2158, 32
    %v2164 = vpop.permute.xlu0 %2163
    %v2165 = vmul.f32 %v2160, %v2077
    %v2166 = vmul.f32 %v2157, %v2164
    %v2167 = vadd.f32 %v2165, %v2166
    %v2168 = vtanh.pop %v2167
    %v2169 = vmul.f32 %v2162, %v2168
    %2170 = vst [vmem:[#allocation3 + $0x28] sm:$0xff] %v2169
    %2171 = vmatprep.subr.mxu0 0.0
    %2172 = vmatpush1.msra.mxu0 %v1615
    %2173 = vmatprep.subr.mxu0 0.0
    %2174 = vmatpush1.msra.mxu0 %v1616
    %2175 = vmatprep.subr.mxu0 0.0
    %2176 = vmatpush1.msra.mxu0 %v1617
    %2177 = vmatprep.subr.mxu0 0.0
    %2178 = vmatpush1.msra.mxu0 %v1618
    %2179 = vmatprep.subr.mxu0 0.0
    %2180 = vmatpush1.msra.mxu0 %v1619
    %2181 = vmatprep.subr.mxu0 0.0
    %2182 = vmatpush1.msra.mxu0 %v1620
    %2183 = vmatprep.subr.mxu0 0.0
    %2184 = vmatpush1.msra.mxu0 %v1621
    %2185 = vmatprep.subr.mxu0 0.0
    %2186 = vmatpush1.msra.mxu0 %v1622
    %2187 = vmatprep.subr.mxu0 0.0
    %2188 = vmatpush1.msra.mxu0 %v1623
    %2189 = vmatprep.subr.mxu0 0.0
    %2190 = vmatpush1.msra.mxu0 %v1624
    %2191 = vmatprep.subr.mxu0 0.0
    %2192 = vmatpush1.msra.mxu0 %v1625
    %2193 = vmatprep.subr.mxu0 0.0
    %2194 = vmatpush1.msra.mxu0 %v1626
    %2195 = vmatprep.subr.mxu0 0.0
    %2196 = vmatpush1.msra.mxu0 %v1627
    %2197 = vmatprep.subr.mxu0 0.0
    %2198 = vmatpush1.msra.mxu0 %v1628
    %2199 = vmatprep.subr.mxu0 0.0
    %2200 = vmatpush1.msra.mxu0 %v1629
    %2201 = vmatprep.subr.mxu0 0.0
    %2202 = vmatpush1.msra.mxu0 %v1630
    %2203 = vmatprep.subr.mxu0 0.0
    %2204 = vmatpush1.msra.mxu0 0.0
    %2205 = vmatprep.subr.mxu0 0.0
    %2206 = vmatpush1.msra.mxu0 0.0
    %2207 = vmatprep.subr.mxu0 0.0
    %2208 = vmatpush1.msra.mxu0 0.0
    %2209 = vmatprep.subr.mxu0 0.0
    %2210 = vmatpush1.msra.mxu0 0.0
    %2211 = vmatprep.subr.mxu0 0.0
    %2212 = vmatpush1.msra.mxu0 0.0
    %2213 = vmatprep.subr.mxu0 0.0
    %2214 = vmatpush1.msra.mxu0 0.0
    %2215 = vmatprep.subr.mxu0 0.0
    %2216 = vmatpush1.msra.mxu0 0.0
    %2217 = vmatprep.subr.mxu0 0.0
    %2218 = vmatpush1.msra.mxu0 0.0
    %2219 = vmatprep.subr.mxu0 0.0
    %2220 = vmatpush1.msra.mxu0 0.0
    %2221 = vmatprep.subr.mxu0 0.0
    %2222 = vmatpush1.msra.mxu0 0.0
    %2223 = vmatprep.subr.mxu0 0.0
    %2224 = vmatpush1.msra.mxu0 0.0
    %2225 = vmatprep.subr.mxu0 0.0
    %2226 = vmatpush1.msra.mxu0 0.0
    %2227 = vmatprep.subr.mxu0 0.0
    %2228 = vmatpush1.msra.mxu0 0.0
    %2229 = vmatprep.subr.mxu0 0.0
    %2230 = vmatpush1.msra.mxu0 0.0
    %2231 = vmatprep.subr.mxu0 0.0
    %2232 = vmatpush1.msra.mxu0 0.0
    %2233 = vmatprep.subr.mxu0 0.0
    %2234 = vmatpush1.msra.mxu0 0.0
    %2235 = vmatprep.mubr.f32.mxu0 0.0
    %2236 = vmatmul.mubr.f32.gmra.mrb[0].mxu0 %v2169
    %v2237 = vpop.f32.mrb[0].mxu0
    %v2238 = vadd.f32 0.0, %v2237
    %v2239 = vpop.f32.mrb[0].mxu0
    %2240 = vdwg.mxu0
    %v2241 = vadd.f32 %v1607, %v2238
    %v2242 = vxor.u32 %v2241, 2147483648
    %v2243 = vmul.f32 %v2242, 1.442695
    %v2244 = vpow.pop %v2243
    %v2245 = vadd.f32 %v2244, 1.0
    %v2246 = vrcp.pop %v2245
    %v2247 = vmul.f32 1.0, %v2246
    %v2248 = vtanh.pop %v2241
    %2249 = vrot.lane.b32.xlu0 %v2247, 96
    %v2250 = vpop.permute.xlu0 %2249
    %2251 = vrot.lane.b32.xlu0 %v2247, 64
    %v2252 = vpop.permute.xlu0 %2251
    %2253 = vrot.lane.b32.xlu0 %v2248, 32
    %v2254 = vpop.permute.xlu0 %2253
    %v2255 = vmul.f32 %v2250, %v2167
    %v2256 = vmul.f32 %v2247, %v2254
    %v2257 = vadd.f32 %v2255, %v2256
    %v2258 = vtanh.pop %v2257
    %v2259 = vmul.f32 %v2252, %v2258
    %2260 = vst [vmem:[#allocation3 + $0x30] sm:$0xff] %v2259
    %2261 = vmatprep.subr.mxu0 0.0
    %2262 = vmatpush1.msra.mxu0 %v1615
    %2263 = vmatprep.subr.mxu0 0.0
    %2264 = vmatpush1.msra.mxu0 %v1616
    %2265 = vmatprep.subr.mxu0 0.0
    %2266 = vmatpush1.msra.mxu0 %v1617
    %2267 = vmatprep.subr.mxu0 0.0
    %2268 = vmatpush1.msra.mxu0 %v1618
    %2269 = vmatprep.subr.mxu0 0.0
    %2270 = vmatpush1.msra.mxu0 %v1619
    %2271 = vmatprep.subr.mxu0 0.0
    %2272 = vmatpush1.msra.mxu0 %v1620
    %2273 = vmatprep.subr.mxu0 0.0
    %2274 = vmatpush1.msra.mxu0 %v1621
    %2275 = vmatprep.subr.mxu0 0.0
    %2276 = vmatpush1.msra.mxu0 %v1622
    %2277 = vmatprep.subr.mxu0 0.0
    %2278 = vmatpush1.msra.mxu0 %v1623
    %2279 = vmatprep.subr.mxu0 0.0
    %2280 = vmatpush1.msra.mxu0 %v1624
    %2281 = vmatprep.subr.mxu0 0.0
    %2282 = vmatpush1.msra.mxu0 %v1625
    %2283 = vmatprep.subr.mxu0 0.0
    %2284 = vmatpush1.msra.mxu0 %v1626
    %2285 = vmatprep.subr.mxu0 0.0
    %2286 = vmatpush1.msra.mxu0 %v1627
    %2287 = vmatprep.subr.mxu0 0.0
    %2288 = vmatpush1.msra.mxu0 %v1628
    %2289 = vmatprep.subr.mxu0 0.0
    %2290 = vmatpush1.msra.mxu0 %v1629
    %2291 = vmatprep.subr.mxu0 0.0
    %2292 = vmatpush1.msra.mxu0 %v1630
    %2293 = vmatprep.subr.mxu0 0.0
    %2294 = vmatpush1.msra.mxu0 0.0
    %2295 = vmatprep.subr.mxu0 0.0
    %2296 = vmatpush1.msra.mxu0 0.0
    %2297 = vmatprep.subr.mxu0 0.0
    %2298 = vmatpush1.msra.mxu0 0.0
    %2299 = vmatprep.subr.mxu0 0.0
    %2300 = vmatpush1.msra.mxu0 0.0
    %2301 = vmatprep.subr.mxu0 0.0
    %2302 = vmatpush1.msra.mxu0 0.0
    %2303 = vmatprep.subr.mxu0 0.0
    %2304 = vmatpush1.msra.mxu0 0.0
    %2305 = vmatprep.subr.mxu0 0.0
    %2306 = vmatpush1.msra.mxu0 0.0
    %2307 = vmatprep.subr.mxu0 0.0
    %2308 = vmatpush1.msra.mxu0 0.0
    %2309 = vmatprep.subr.mxu0 0.0
    %2310 = vmatpush1.msra.mxu0 0.0
    %2311 = vmatprep.subr.mxu0 0.0
    %2312 = vmatpush1.msra.mxu0 0.0
    %2313 = vmatprep.subr.mxu0 0.0
    %2314 = vmatpush1.msra.mxu0 0.0
    %2315 = vmatprep.subr.mxu0 0.0
    %2316 = vmatpush1.msra.mxu0 0.0
    %2317 = vmatprep.subr.mxu0 0.0
    %2318 = vmatpush1.msra.mxu0 0.0
    %2319 = vmatprep.subr.mxu0 0.0
    %2320 = vmatpush1.msra.mxu0 0.0
    %2321 = vmatprep.subr.mxu0 0.0
    %2322 = vmatpush1.msra.mxu0 0.0
    %2323 = vmatprep.subr.mxu0 0.0
    %2324 = vmatpush1.msra.mxu0 0.0
    %2325 = vmatprep.mubr.f32.mxu0 0.0
    %2326 = vmatmul.mubr.f32.gmra.mrb[0].mxu0 %v2259
    %v2327 = vpop.f32.mrb[0].mxu0
    %v2328 = vadd.f32 0.0, %v2327
    %v2329 = vpop.f32.mrb[0].mxu0
    %2330 = vdwg.mxu0
    %v2331 = vadd.f32 %v1612, %v2328
    %v2332 = vxor.u32 %v2331, 2147483648
    %v2333 = vmul.f32 %v2332, 1.442695
    %v2334 = vpow.pop %v2333
    %v2335 = vadd.f32 %v2334, 1.0
    %v2336 = vrcp.pop %v2335
    %v2337 = vmul.f32 1.0, %v2336
    %v2338 = vtanh.pop %v2331
    %2339 = vrot.lane.b32.xlu0 %v2337, 96
    %v2340 = vpop.permute.xlu0 %2339
    %2341 = vrot.lane.b32.xlu0 %v2337, 64
    %v2342 = vpop.permute.xlu0 %2341
    %2343 = vrot.lane.b32.xlu0 %v2338, 32
    %v2344 = vpop.permute.xlu0 %2343
    %v2345 = vmul.f32 %v2340, %v2257
    %v2346 = vmul.f32 %v2337, %v2344
    %v2347 = vadd.f32 %v2345, %v2346
    %v2348 = vtanh.pop %v2347
    %v2349 = vmul.f32 %v2342, %v2348
    %2350 = vst [vmem:[#allocation3 + $0x38] sm:$0xff] %v2349
    %v2351 = vld [vmem:[#allocation3] sm:$0xff]
    %v2352 = vld [vmem:[#allocation3 + $0x8] sm:$0xff]
    %v2353 = vld [vmem:[#allocation3 + $0x10] sm:$0xff]
    %v2354 = vld [vmem:[#allocation3 + $0x18] sm:$0xff]
    %v2355 = vld [vmem:[#allocation3 + $0x20] sm:$0xff]
    %v2356 = vld [vmem:[#allocation3 + $0x28] sm:$0xff]
    %v2357 = vld [vmem:[#allocation3 + $0x30] sm:$0xff]
    %v2358 = vld [vmem:[#allocation3 + $0x38] sm:$0xff]
    %v2359 = vmax.f32 %v2351, 0.0
    %v2360 = vmax.f32 %v2352, 0.0
    %v2361 = vmax.f32 %v2353, 0.0
    %v2362 = vmax.f32 %v2354, 0.0
    %v2363 = vmax.f32 %v2355, 0.0
    %v2364 = vmax.f32 %v2356, 0.0
    %v2365 = vmax.f32 %v2357, 0.0
    %v2366 = vmax.f32 %v2358, 0.0
    %v2367 = vld [vmem:[%s13] sm:$0xff]
    %v2368 = vld [vmem:[%s13 + $0x8] sm:$0xff]
    %v2369 = vld [vmem:[%s13 + $0x10] sm:$0xff]
    %v2370 = vld [vmem:[%s13 + $0x18] sm:$0xff]
    %v2371 = vld [vmem:[%s13 + $0x20] sm:$0xff]
    %v2372 = vld [vmem:[%s13 + $0x28] sm:$0xff]
    %v2373 = vld [vmem:[%s13 + $0x30] sm:$0xff]
    %v2374 = vld [vmem:[%s13 + $0x38] sm:$0xff]
    %v2375 = vld [vmem:[%s13 + $0x40] sm:$0xff]
    %v2376 = vld [vmem:[%s13 + $0x48] sm:$0xff]
    %v2377 = vld [vmem:[%s13 + $0x50] sm:$0xff]
    %v2378 = vld [vmem:[%s13 + $0x58] sm:$0xff]
    %v2379 = vld [vmem:[%s13 + $0x60] sm:$0xff]
    %v2380 = vld [vmem:[%s13 + $0x68] sm:$0xff]
    %v2381 = vld [vmem:[%s13 + $0x70] sm:$0xff]
    %v2382 = vld [vmem:[%s13 + $0x78] sm:$0xff]
    %v2383 = vld [vmem:[#allocation13] sm:$0x1]
    %v2385 = vlaneseq
    %v2386 = vshrl.u32 %v2385, 7
    %v2387 = vsub.s32 0, %v2386
    %v2388 = vrot.slane %v2383, %v2387
    %2390 = vmatprep.subr.mxu0 0.0
    %2391 = vmatpush1.msra.mxu0 %v2367
    %2392 = vmatprep.subr.mxu0 0.0
    %2393 = vmatpush1.msra.mxu0 %v2368
    %2394 = vmatprep.subr.mxu0 0.0
    %2395 = vmatpush1.msra.mxu0 %v2369
    %2396 = vmatprep.subr.mxu0 0.0
    %2397 = vmatpush1.msra.mxu0 %v2370
    %2398 = vmatprep.subr.mxu0 0.0
    %2399 = vmatpush1.msra.mxu0 %v2371
    %2400 = vmatprep.subr.mxu0 0.0
    %2401 = vmatpush1.msra.mxu0 %v2372
    %2402 = vmatprep.subr.mxu0 0.0
    %2403 = vmatpush1.msra.mxu0 %v2373
    %2404 = vmatprep.subr.mxu0 0.0
    %2405 = vmatpush1.msra.mxu0 %v2374
    %2406 = vmatprep.subr.mxu0 0.0
    %2407 = vmatpush1.msra.mxu0 %v2375
    %2408 = vmatprep.subr.mxu0 0.0
    %2409 = vmatpush1.msra.mxu0 %v2376
    %2410 = vmatprep.subr.mxu0 0.0
    %2411 = vmatpush1.msra.mxu0 %v2377
    %2412 = vmatprep.subr.mxu0 0.0
    %2413 = vmatpush1.msra.mxu0 %v2378
    %2414 = vmatprep.subr.mxu0 0.0
    %2415 = vmatpush1.msra.mxu0 %v2379
    %2416 = vmatprep.subr.mxu0 0.0
    %2417 = vmatpush1.msra.mxu0 %v2380
    %2418 = vmatprep.subr.mxu0 0.0
    %2419 = vmatpush1.msra.mxu0 %v2381
    %2420 = vmatprep.subr.mxu0 0.0
    %2421 = vmatpush1.msra.mxu0 %v2382
    %2422 = vmatprep.subr.mxu0 0.0
    %2423 = vmatpush1.msra.mxu0 0.0
    %2424 = vmatprep.subr.mxu0 0.0
    %2425 = vmatpush1.msra.mxu0 0.0
    %2426 = vmatprep.subr.mxu0 0.0
    %2427 = vmatpush1.msra.mxu0 0.0
    %2428 = vmatprep.subr.mxu0 0.0
    %2429 = vmatpush1.msra.mxu0 0.0
    %2430 = vmatprep.subr.mxu0 0.0
    %2431 = vmatpush1.msra.mxu0 0.0
    %2432 = vmatprep.subr.mxu0 0.0
    %2433 = vmatpush1.msra.mxu0 0.0
    %2434 = vmatprep.subr.mxu0 0.0
    %2435 = vmatpush1.msra.mxu0 0.0
    %2436 = vmatprep.subr.mxu0 0.0
    %2437 = vmatpush1.msra.mxu0 0.0
    %2438 = vmatprep.subr.mxu0 0.0
    %2439 = vmatpush1.msra.mxu0 0.0
    %2440 = vmatprep.subr.mxu0 0.0
    %2441 = vmatpush1.msra.mxu0 0.0
    %2442 = vmatprep.subr.mxu0 0.0
    %2443 = vmatpush1.msra.mxu0 0.0
    %2444 = vmatprep.subr.mxu0 0.0
    %2445 = vmatpush1.msra.mxu0 0.0
    %2446 = vmatprep.subr.mxu0 0.0
    %2447 = vmatpush1.msra.mxu0 0.0
    %2448 = vmatprep.subr.mxu0 0.0
    %2449 = vmatpush1.msra.mxu0 0.0
    %2450 = vmatprep.subr.mxu0 0.0
    %2451 = vmatpush1.msra.mxu0 0.0
    %2452 = vmatprep.subr.mxu0 0.0
    %2453 = vmatpush1.msra.mxu0 0.0
    %2454 = vmatprep.mubr.f32.mxu0 0.0
    %2455 = vmatmul.mubr.f32.gmra.mrb[0].mxu0 %v2359
    %v2456 = vpop.f32.mrb[0].mxu0
    %v2457 = vadd.f32 %v2388, %v2456
    %v2458 = vpop.f32.mrb[0].mxu0
    %2459 = vmatprep.mubr.f32.mxu0 0.0
    %2460 = vmatmul.mubr.f32.gmra.mrb[0].mxu0 %v2360
    %v2461 = vpop.f32.mrb[0].mxu0
    %v2462 = vadd.f32 %v2388, %v2461
    %v2463 = vpop.f32.mrb[0].mxu0
    %2464 = vmatprep.mubr.f32.mxu0 0.0
    %2465 = vmatmul.mubr.f32.gmra.mrb[0].mxu0 %v2361
    %v2466 = vpop.f32.mrb[0].mxu0
    %v2467 = vadd.f32 %v2388, %v2466
    %v2468 = vpop.f32.mrb[0].mxu0
    %2469 = vmatprep.mubr.f32.mxu0 0.0
    %2470 = vmatmul.mubr.f32.gmra.mrb[0].mxu0 %v2362
    %v2471 = vpop.f32.mrb[0].mxu0
    %v2472 = vadd.f32 %v2388, %v2471
    %v2473 = vpop.f32.mrb[0].mxu0
    %2474 = vmatprep.mubr.f32.mxu0 0.0
    %2475 = vmatmul.mubr.f32.gmra.mrb[0].mxu0 %v2363
    %v2476 = vpop.f32.mrb[0].mxu0
    %v2477 = vadd.f32 %v2388, %v2476
    %v2478 = vpop.f32.mrb[0].mxu0
    %2479 = vmatprep.mubr.f32.mxu0 0.0
    %2480 = vmatmul.mubr.f32.gmra.mrb[0].mxu0 %v2364
    %v2481 = vpop.f32.mrb[0].mxu0
    %v2482 = vadd.f32 %v2388, %v2481
    %v2483 = vpop.f32.mrb[0].mxu0
    %2484 = vmatprep.mubr.f32.mxu0 0.0
    %2485 = vmatmul.mubr.f32.gmra.mrb[0].mxu0 %v2365
    %v2486 = vpop.f32.mrb[0].mxu0
    %v2487 = vadd.f32 %v2388, %v2486
    %v2488 = vpop.f32.mrb[0].mxu0
    %2489 = vmatprep.mubr.f32.mxu0 0.0
    %2490 = vmatmul.mubr.f32.gmra.mrb[0].mxu0 %v2366
    %v2491 = vpop.f32.mrb[0].mxu0
    %v2492 = vadd.f32 %v2388, %v2491
    %v2493 = vpop.f32.mrb[0].mxu0
    %2494 = vdwg.mxu0
    %v2495 = vmax.f32 %v2457, 0.0
    %v2496 = vmax.f32 %v2462, 0.0
    %v2497 = vmax.f32 %v2467, 0.0
    %v2498 = vmax.f32 %v2472, 0.0
    %v2499 = vmax.f32 %v2477, 0.0
    %v2500 = vmax.f32 %v2482, 0.0
    %v2501 = vmax.f32 %v2487, 0.0
    %v2502 = vmax.f32 %v2492, 0.0
    %v2503 = vld [vmem:[%s15] sm:$0xff]
    %v2504 = vld [vmem:[%s15 + $0x8] sm:$0xff]
    %v2505 = vld [vmem:[%s15 + $0x10] sm:$0xff]
    %v2506 = vld [vmem:[%s15 + $0x18] sm:$0xff]
    %v2507 = vld [vmem:[%s15 + $0x20] sm:$0xff]
    %v2508 = vld [vmem:[%s15 + $0x28] sm:$0xff]
    %v2509 = vld [vmem:[%s15 + $0x30] sm:$0xff]
    %v2510 = vld [vmem:[%s15 + $0x38] sm:$0xff]
    %v2511 = vld [vmem:[#allocation15] sm:$0x1]
    %v2513 = vlaneseq
    %v2514 = vshrl.u32 %v2513, 7
    %v2515 = vsub.s32 0, %v2514
    %v2516 = vrot.slane %v2511, %v2515
    %v2519 = vsel %vm464, %v2495, 0
    %v2522 = vsel %vm464, %v2496, 0
    %v2525 = vsel %vm464, %v2497, 0
    %v2528 = vsel %vm464, %v2498, 0
    %v2531 = vsel %vm464, %v2499, 0
    %v2534 = vsel %vm464, %v2500, 0
    %v2537 = vsel %vm464, %v2501, 0
    %v2540 = vsel %vm464, %v2502, 0
    %2542 = vmatprep.subr.mxu0 0.0
    %2543 = vmatpush1.msra.mxu0 %v2503
    %2544 = vmatprep.subr.mxu0 0.0
    %2545 = vmatpush1.msra.mxu0 %v2504
    %2546 = vmatprep.subr.mxu0 0.0
    %2547 = vmatpush1.msra.mxu0 %v2505
    %2548 = vmatprep.subr.mxu0 0.0
    %2549 = vmatpush1.msra.mxu0 %v2506
    %2550 = vmatprep.subr.mxu0 0.0
    %2551 = vmatpush1.msra.mxu0 %v2507
    %2552 = vmatprep.subr.mxu0 0.0
    %2553 = vmatpush1.msra.mxu0 %v2508
    %2554 = vmatprep.subr.mxu0 0.0
    %2555 = vmatpush1.msra.mxu0 %v2509
    %2556 = vmatprep.subr.mxu0 0.0
    %2557 = vmatpush1.msra.mxu0 %v2510
    %2558 = vmatprep.subr.mxu0 0.0
    %2559 = vmatpush1.msra.mxu0 0.0
    %2560 = vmatprep.subr.mxu0 0.0
    %2561 = vmatpush1.msra.mxu0 0.0
    %2562 = vmatprep.subr.mxu0 0.0
    %2563 = vmatpush1.msra.mxu0 0.0
    %2564 = vmatprep.subr.mxu0 0.0
    %2565 = vmatpush1.msra.mxu0 0.0
    %2566 = vmatprep.subr.mxu0 0.0
    %2567 = vmatpush1.msra.mxu0 0.0
    %2568 = vmatprep.subr.mxu0 0.0
    %2569 = vmatpush1.msra.mxu0 0.0
    %2570 = vmatprep.subr.mxu0 0.0
    %2571 = vmatpush1.msra.mxu0 0.0
    %2572 = vmatprep.subr.mxu0 0.0
    %2573 = vmatpush1.msra.mxu0 0.0
    %2574 = vmatprep.subr.mxu0 0.0
    %2575 = vmatpush1.msra.mxu0 0.0
    %2576 = vmatprep.subr.mxu0 0.0
    %2577 = vmatpush1.msra.mxu0 0.0
    %2578 = vmatprep.subr.mxu0 0.0
    %2579 = vmatpush1.msra.mxu0 0.0
    %2580 = vmatprep.subr.mxu0 0.0
    %2581 = vmatpush1.msra.mxu0 0.0
    %2582 = vmatprep.subr.mxu0 0.0
    %2583 = vmatpush1.msra.mxu0 0.0
    %2584 = vmatprep.subr.mxu0 0.0
    %2585 = vmatpush1.msra.mxu0 0.0
    %2586 = vmatprep.subr.mxu0 0.0
    %2587 = vmatpush1.msra.mxu0 0.0
    %2588 = vmatprep.subr.mxu0 0.0
    %2589 = vmatpush1.msra.mxu0 0.0
    %2590 = vmatprep.subr.mxu0 0.0
    %2591 = vmatpush1.msra.mxu0 0.0
    %2592 = vmatprep.subr.mxu0 0.0
    %2593 = vmatpush1.msra.mxu0 0.0
    %2594 = vmatprep.subr.mxu0 0.0
    %2595 = vmatpush1.msra.mxu0 0.0
    %2596 = vmatprep.subr.mxu0 0.0
    %2597 = vmatpush1.msra.mxu0 0.0
    %2598 = vmatprep.subr.mxu0 0.0
    %2599 = vmatpush1.msra.mxu0 0.0
    %2600 = vmatprep.subr.mxu0 0.0
    %2601 = vmatpush1.msra.mxu0 0.0
    %2602 = vmatprep.subr.mxu0 0.0
    %2603 = vmatpush1.msra.mxu0 0.0
    %2604 = vmatprep.subr.mxu0 0.0
    %2605 = vmatpush1.msra.mxu0 0.0
    %2606 = vmatprep.mubr.f32.mxu0 0.0
    %2607 = vmatmul.mubr.f32.gmra.mrb[0].mxu0 %v2519
    %v2608 = vpop.f32.mrb[0].mxu0
    %v2609 = vadd.f32 %v2516, %v2608
    %v2610 = vpop.f32.mrb[0].mxu0
    %2611 = vmatprep.mubr.f32.mxu0 0.0
    %2612 = vmatmul.mubr.f32.gmra.mrb[0].mxu0 %v2522
    %v2613 = vpop.f32.mrb[0].mxu0
    %v2614 = vadd.f32 %v2516, %v2613
    %v2615 = vpop.f32.mrb[0].mxu0
    %2616 = vmatprep.mubr.f32.mxu0 0.0
    %2617 = vmatmul.mubr.f32.gmra.mrb[0].mxu0 %v2525
    %v2618 = vpop.f32.mrb[0].mxu0
    %v2619 = vadd.f32 %v2516, %v2618
    %v2620 = vpop.f32.mrb[0].mxu0
    %2621 = vmatprep.mubr.f32.mxu0 0.0
    %2622 = vmatmul.mubr.f32.gmra.mrb[0].mxu0 %v2528
    %v2623 = vpop.f32.mrb[0].mxu0
    %v2624 = vadd.f32 %v2516, %v2623
    %v2625 = vpop.f32.mrb[0].mxu0
    %2626 = vmatprep.mubr.f32.mxu0 0.0
    %2627 = vmatmul.mubr.f32.gmra.mrb[0].mxu0 %v2531
    %v2628 = vpop.f32.mrb[0].mxu0
    %v2629 = vadd.f32 %v2516, %v2628
    %v2630 = vpop.f32.mrb[0].mxu0
    %2631 = vmatprep.mubr.f32.mxu0 0.0
    %2632 = vmatmul.mubr.f32.gmra.mrb[0].mxu0 %v2534
    %v2633 = vpop.f32.mrb[0].mxu0
    %v2634 = vadd.f32 %v2516, %v2633
    %v2635 = vpop.f32.mrb[0].mxu0
    %2636 = vmatprep.mubr.f32.mxu0 0.0
    %2637 = vmatmul.mubr.f32.gmra.mrb[0].mxu0 %v2537
    %v2638 = vpop.f32.mrb[0].mxu0
    %v2639 = vadd.f32 %v2516, %v2638
    %v2640 = vpop.f32.mrb[0].mxu0
    %2641 = vmatprep.mubr.f32.mxu0 0.0
    %2642 = vmatmul.mubr.f32.gmra.mrb[0].mxu0 %v2540
    %v2643 = vpop.f32.mrb[0].mxu0
    %v2644 = vadd.f32 %v2516, %v2643
    %v2645 = vpop.f32.mrb[0].mxu0
    %2646 = vdwg.mxu0
    %v2647 = vmax.f32 %v2609, 0.0
    %v2648 = vmax.f32 %v2614, 0.0
    %v2649 = vmax.f32 %v2619, 0.0
    %v2650 = vmax.f32 %v2624, 0.0
    %v2651 = vmax.f32 %v2629, 0.0
    %v2652 = vmax.f32 %v2634, 0.0
    %v2653 = vmax.f32 %v2639, 0.0
    %v2654 = vmax.f32 %v2644, 0.0
    %v2655 = vld [vmem:[%s17] sm:$0xff]
    %v2656 = vld [vmem:[%s17 + $0x8] sm:$0xff]
    %v2657 = vld [vmem:[%s17 + $0x10] sm:$0xff]
    %v2658 = vld [vmem:[%s17 + $0x18] sm:$0xff]
    %v2659 = vld [vmem:[%s17 + $0x20] sm:$0xff]
    %v2660 = vld [vmem:[%s17 + $0x28] sm:$0xff]
    %v2661 = vld [vmem:[%s17 + $0x30] sm:$0xff]
    %v2662 = vld [vmem:[%s17 + $0x38] sm:$0xff]
    %v2663 = vld [vmem:[%s17 + $0x40] sm:$0xff]
    %v2664 = vld [vmem:[%s17 + $0x48] sm:$0xff]
    %v2665 = vld [vmem:[%s17 + $0x50] sm:$0xff]
    %v2666 = vld [vmem:[%s17 + $0x58] sm:$0xff]
    %v2667 = vld [vmem:[%s17 + $0x60] sm:$0xff]
    %v2668 = vld [vmem:[%s17 + $0x68] sm:$0xff]
    %v2669 = vld [vmem:[%s17 + $0x70] sm:$0xff]
    %v2670 = vld [vmem:[%s17 + $0x78] sm:$0xff]
    %v2671 = vld [vmem:[#allocation16] sm:$0x1]
    %v2673 = vlaneseq
    %v2674 = vshrl.u32 %v2673, 7
    %v2675 = vsub.s32 0, %v2674
    %v2676 = vrot.slane %v2671, %v2675
    %2678 = vmatprep.subr.mxu0 0.0
    %2679 = vmatpush1.msra.mxu0 %v2655
    %2680 = vmatprep.subr.mxu0 0.0
    %2681 = vmatpush1.msra.mxu0 %v2656
    %2682 = vmatprep.subr.mxu0 0.0
    %2683 = vmatpush1.msra.mxu0 %v2657
    %2684 = vmatprep.subr.mxu0 0.0
    %2685 = vmatpush1.msra.mxu0 %v2658
    %2686 = vmatprep.subr.mxu0 0.0
    %2687 = vmatpush1.msra.mxu0 %v2659
    %2688 = vmatprep.subr.mxu0 0.0
    %2689 = vmatpush1.msra.mxu0 %v2660
    %2690 = vmatprep.subr.mxu0 0.0
    %2691 = vmatpush1.msra.mxu0 %v2661
    %2692 = vmatprep.subr.mxu0 0.0
    %2693 = vmatpush1.msra.mxu0 %v2662
    %2694 = vmatprep.subr.mxu0 0.0
    %2695 = vmatpush1.msra.mxu0 %v2663
    %2696 = vmatprep.subr.mxu0 0.0
    %2697 = vmatpush1.msra.mxu0 %v2664
    %2698 = vmatprep.subr.mxu0 0.0
    %2699 = vmatpush1.msra.mxu0 %v2665
    %2700 = vmatprep.subr.mxu0 0.0
    %2701 = vmatpush1.msra.mxu0 %v2666
    %2702 = vmatprep.subr.mxu0 0.0
    %2703 = vmatpush1.msra.mxu0 %v2667
    %2704 = vmatprep.subr.mxu0 0.0
    %2705 = vmatpush1.msra.mxu0 %v2668
    %2706 = vmatprep.subr.mxu0 0.0
    %2707 = vmatpush1.msra.mxu0 %v2669
    %2708 = vmatprep.subr.mxu0 0.0
    %2709 = vmatpush1.msra.mxu0 %v2670
    %2710 = vmatprep.subr.mxu0 0.0
    %2711 = vmatpush1.msra.mxu0 0.0
    %2712 = vmatprep.subr.mxu0 0.0
    %2713 = vmatpush1.msra.mxu0 0.0
    %2714 = vmatprep.subr.mxu0 0.0
    %2715 = vmatpush1.msra.mxu0 0.0
    %2716 = vmatprep.subr.mxu0 0.0
    %2717 = vmatpush1.msra.mxu0 0.0
    %2718 = vmatprep.subr.mxu0 0.0
    %2719 = vmatpush1.msra.mxu0 0.0
    %2720 = vmatprep.subr.mxu0 0.0
    %2721 = vmatpush1.msra.mxu0 0.0
    %2722 = vmatprep.subr.mxu0 0.0
    %2723 = vmatpush1.msra.mxu0 0.0
    %2724 = vmatprep.subr.mxu0 0.0
    %2725 = vmatpush1.msra.mxu0 0.0
    %2726 = vmatprep.subr.mxu0 0.0
    %2727 = vmatpush1.msra.mxu0 0.0
    %2728 = vmatprep.subr.mxu0 0.0
    %2729 = vmatpush1.msra.mxu0 0.0
    %2730 = vmatprep.subr.mxu0 0.0
    %2731 = vmatpush1.msra.mxu0 0.0
    %2732 = vmatprep.subr.mxu0 0.0
    %2733 = vmatpush1.msra.mxu0 0.0
    %2734 = vmatprep.subr.mxu0 0.0
    %2735 = vmatpush1.msra.mxu0 0.0
    %2736 = vmatprep.subr.mxu0 0.0
    %2737 = vmatpush1.msra.mxu0 0.0
    %2738 = vmatprep.subr.mxu0 0.0
    %2739 = vmatpush1.msra.mxu0 0.0
    %2740 = vmatprep.subr.mxu0 0.0
    %2741 = vmatpush1.msra.mxu0 0.0
    %2742 = vmatprep.mubr.f32.mxu0 0.0
    %2743 = vmatmul.mubr.f32.gmra.mrb[0].mxu0 %v2647
    %v2744 = vpop.f32.mrb[0].mxu0
    %v2745 = vadd.f32 %v2676, %v2744
    %v2746 = vpop.f32.mrb[0].mxu0
    %2747 = vmatprep.mubr.f32.mxu0 0.0
    %2748 = vmatmul.mubr.f32.gmra.mrb[0].mxu0 %v2648
    %v2749 = vpop.f32.mrb[0].mxu0
    %v2750 = vadd.f32 %v2676, %v2749
    %v2751 = vpop.f32.mrb[0].mxu0
    %2752 = vmatprep.mubr.f32.mxu0 0.0
    %2753 = vmatmul.mubr.f32.gmra.mrb[0].mxu0 %v2649
    %v2754 = vpop.f32.mrb[0].mxu0
    %v2755 = vadd.f32 %v2676, %v2754
    %v2756 = vpop.f32.mrb[0].mxu0
    %2757 = vmatprep.mubr.f32.mxu0 0.0
    %2758 = vmatmul.mubr.f32.gmra.mrb[0].mxu0 %v2650
    %v2759 = vpop.f32.mrb[0].mxu0
    %v2760 = vadd.f32 %v2676, %v2759
    %v2761 = vpop.f32.mrb[0].mxu0
    %2762 = vmatprep.mubr.f32.mxu0 0.0
    %2763 = vmatmul.mubr.f32.gmra.mrb[0].mxu0 %v2651
    %v2764 = vpop.f32.mrb[0].mxu0
    %v2765 = vadd.f32 %v2676, %v2764
    %v2766 = vpop.f32.mrb[0].mxu0
    %2767 = vmatprep.mubr.f32.mxu0 0.0
    %2768 = vmatmul.mubr.f32.gmra.mrb[0].mxu0 %v2652
    %v2769 = vpop.f32.mrb[0].mxu0
    %v2770 = vadd.f32 %v2676, %v2769
    %v2771 = vpop.f32.mrb[0].mxu0
    %2772 = vmatprep.mubr.f32.mxu0 0.0
    %2773 = vmatmul.mubr.f32.gmra.mrb[0].mxu0 %v2653
    %v2774 = vpop.f32.mrb[0].mxu0
    %v2775 = vadd.f32 %v2676, %v2774
    %v2776 = vpop.f32.mrb[0].mxu0
    %2777 = vmatprep.mubr.f32.mxu0 0.0
    %2778 = vmatmul.mubr.f32.gmra.mrb[0].mxu0 %v2654
    %v2779 = vpop.f32.mrb[0].mxu0
    %v2780 = vadd.f32 %v2676, %v2779
    %v2781 = vpop.f32.mrb[0].mxu0
    %2782 = vdwg.mxu0
    %2783 = vst.msk [vmem:[#allocation18] sm:$0xff] %vm175, %v2745
    %2784 = vst.msk [vmem:[#allocation18 + $0x8] sm:$0xff] %vm175, %v2750
    %2785 = vst.msk [vmem:[#allocation18 + $0x10] sm:$0xff] %vm175, %v2755
    %2786 = vst.msk [vmem:[#allocation18 + $0x18] sm:$0xff] %vm175, %v2760
    %2787 = vst.msk [vmem:[#allocation18 + $0x20] sm:$0xff] %vm175, %v2765
    %2788 = vst.msk [vmem:[#allocation18 + $0x28] sm:$0xff] %vm175, %v2770
    %2789 = vst.msk [vmem:[#allocation18 + $0x30] sm:$0xff] %vm175, %v2775
    %2790 = vst.msk [vmem:[#allocation18 + $0x38] sm:$0xff] %vm175, %v2780
    // Predicated region
    $region110: #{lstm_autoencoder_forward.1} parent=1 // pred_check
      _
    $region111: #{lstm_autoencoder_forward.1} parent=1 // pred_check_branch
      %2792 = sbr.rel (0) target = $region113
    $region112: #{lstm_autoencoder_forward.1} parent=1 // pred_region
      %s2794 = ssub.s32 1024, 1024
      %2795 = vsyncadd [#allocation6], %s2794
      %s2796 = sshll.u32 [#allocation18], 4
      %s2797 = int_to_ptr.vmem [resolvable:$true] %s2796
      %2802 = dma.vmem_to_hbm [thread:$0]  %s2797, 1024, %s19, [#allocation6], 128, 128, 8
    $region113: #{lstm_autoencoder_forward.1} parent=1 // pred_fallthru
      _
    // Predicated region
    $region114: #{lstm_autoencoder_forward.1} parent=1 // pred_check
      _
    $region115: #{lstm_autoencoder_forward.1} parent=1 // pred_check_branch
      %2804 = sbr.rel (0) target = $region117
    $region116: #{lstm_autoencoder_forward.1} parent=1 // pred_region
      %2805 = dma.done [#allocation6], 1024
    $region117: #{lstm_autoencoder_forward.1} parent=1 // pred_fallthru
      _
    %2806 = vsyncpa [#allocation5], 1
    %2807 = vsyncpa [#allocation8], 1
    %2808 = vsyncpa [#allocation11], 1
    %2809 = vsyncpa [#allocation14], 1
    %2810 = vsyncpa [#allocation17], 1
    %2811 = vsyncpa [#allocation6], 1

</llo_original>
